<compile_context>
chip_gen: v5e
topology: v5e:2x2
jax: 0.10.0
libtpu: 0.0.40
codegen_flags: <defaults>
</compile_context>

<pallas_src>
import jax
import jax.numpy as jnp
from jax import lax
from jax.experimental import pallas as pl
from jax.experimental.pallas import tpu as pltpu

# Fixed channel counts from the module definition.
CIN, CMID, COUT = 576, 128, 32
EPS = 1e-5
_ZP_TAIL = 8  # extra always-zero rows at the bottom of the padded-z scratch


def _make_kernel(H, W):
    HW = H * W
    WP = W + 2                 # padded width
    P = (H + 2) * WP           # padded rows (16*16 = 256 for 14x14)
    HWP = H * WP               # output rows incl. the 2 junk padded-w columns
    inv_hw = 1.0 / HW

    def kernel(x_ref, w1_ref, gb_ref, w2c_ref, o_ref, zp_ref, t_ref):
        # ---- conv1 (1x1), channels-first: (128,576) @ (576,HW) on the MXU --
        y = jnp.dot(w1_ref[...], x_ref[...],
                    preferred_element_type=jnp.float32)          # (128, HW)

        # ---- BatchNorm2d training-mode batch stats (two-pass variance) -----
        # Stats are over the HW valid positions only (channels-first layout),
        # so there is no reliance on zero halos or a missing conv bias.
        mean = jnp.sum(y, axis=1, keepdims=True) * inv_hw         # (128, 1)
        d = y - mean
        var = jnp.sum(d * d, axis=1, keepdims=True) * inv_hw      # biased var
        scale = gb_ref[:, 0:1] * lax.rsqrt(var + EPS)
        shift = gb_ref[:, 1:2] - mean * scale
        z = jnp.maximum(y * scale + shift, 0.0)                   # BN + ReLU

        # ---- layout switch for conv2: (C, HW) -> zero-padded NHWC rows -----
        z_rows = jnp.transpose(z)                                 # (HW, 128)
        zp_ref[...] = jnp.zeros_like(zp_ref)                      # halo + tail
        for h in range(H):
            dst = (h + 1) * WP + 1
            zp_ref[dst:dst + W, :] = z_rows[h * W:(h + 1) * W, :]
        # Invariant: rows >= P-2 of zp_ref stay zero; the shifted matmul
        # operands below read up to row P+1 (< P + _ZP_TAIL).

        # ---- conv2 (3x3, pad 1), stage A: dx folded into the contraction ---
        # t[r, dy*32+o] = sum_{dx,c} zp[r+dx, c] * w2[o, c, dy, dx]
        t_ref[...] = jnp.dot(zp_ref[0:P, :], w2c_ref[0:CMID, :],
                             preferred_element_type=jnp.float32)
        t_ref[...] += jnp.dot(zp_ref[1:P + 1, :], w2c_ref[CMID:2 * CMID, :],
                              preferred_element_type=jnp.float32)
        t_ref[...] += jnp.dot(zp_ref[2:P + 2, :], w2c_ref[2 * CMID:3 * CMID, :],
                              preferred_element_type=jnp.float32)

        # ---- stage B: three dy adds at sublane-aligned row offsets ---------
        outp = (t_ref[0:HWP, 0:COUT]
                + t_ref[WP:WP + HWP, COUT:2 * COUT]
                + t_ref[2 * WP:2 * WP + HWP, 2 * COUT:3 * COUT])  # (HWP, 32)

        # Drop the 2 junk padded-width columns and emit NCHW-flat (32, H*W).
        rows = [outp[h * WP:h * WP + W, :] for h in range(H)]
        o_ref[...] = jnp.transpose(jnp.concatenate(rows, axis=0))

    return kernel, P


def fused_forward(x_nchw, w1_oihw, gamma, beta, w2_oihw):
    """x_nchw: (1, 576, H, W) float32.  Returns (1, 32, H, W) float32."""
    N, Cin, H, W = x_nchw.shape
    assert Cin == CIN
    assert N == 1, "TODO(synk): batch > 1 needs a grid/loop over N"
    HW = H * W

    kernel, P = _make_kernel(H, W)

    # ---- host side: bitcast reshapes + tiny weight repacks only ------------
    x2d = x_nchw.reshape(CIN, HW)                       # contiguous -> no copy
    w1m = w1_oihw.reshape(CMID, CIN)                    # (O,I,1,1) -> (O,I)
    # (O, C, ky, kx) -> (kx, C, ky, O) -> (3*C, 3*O); row = kx*128+c, col = ky*32+o
    w2c = jnp.transpose(w2_oihw, (3, 1, 2, 0)).reshape(3 * CMID, 3 * COUT)
    gb = jnp.stack([gamma, beta], axis=1)               # (128, 2)

    flops = 2 * CMID * CIN * HW + 3 * (2 * P * CMID * 3 * COUT)
    bytes_accessed = 4 * (CIN * HW + CMID * CIN + 3 * CMID * 3 * COUT
                          + CMID * 2 + COUT * HW)

    out_flat = pl.pallas_call(
        kernel,
        grid_spec=pl.GridSpec(
            grid=(1,),
            in_specs=[
                pl.BlockSpec((CIN, HW), lambda i: (0, 0)),
                pl.BlockSpec((CMID, CIN), lambda i: (0, 0)),
                pl.BlockSpec((CMID, 2), lambda i: (0, 0)),
                pl.BlockSpec((3 * CMID, 3 * COUT), lambda i: (0, 0)),
            ],
            out_specs=pl.BlockSpec((COUT, HW), lambda i: (0, 0)),
            scratch_shapes=[
                pltpu.VMEM((P + _ZP_TAIL, CMID), jnp.float32),   # padded z rows
                pltpu.VMEM((P, 3 * COUT), jnp.float32),          # dy-grouped taps
            ],
        ),
        out_shape=jax.ShapeDtypeStruct((COUT, HW), jnp.float32),
        compiler_params=pltpu.CompilerParams(
            # ~3 MB total footprint: default scoped-VMEM limit is ample on
            # v5e/v6e/v7x; no explicit vmem_limit_bytes needed.
            dimension_semantics=("arbitrary",),
        ),
        cost_estimate=pl.CostEstimate(flops=flops, transcendentals=CMID,
                                      bytes_accessed=bytes_accessed),
    )(x2d, w1m, gb, w2c)

    return out_flat.reshape(N, COUT, H, W)              # bitcast, no copy


def reference_forward(x, w1, gamma, beta, w2):
    """Pure-JAX reference (matches PyTorch training-mode forward)."""
    y1 = lax.conv_general_dilated(
        x, w1, window_strides=(1, 1), padding="VALID",
        dimension_numbers=("NCHW", "OIHW", "NCHW"),
        precision=lax.Precision.HIGHEST)
    mean = jnp.mean(y1, axis=(0, 2, 3), keepdims=True)
    var = jnp.mean(jnp.square(y1 - mean), axis=(0, 2, 3), keepdims=True)
    z = (y1 - mean) * lax.rsqrt(var + EPS)
    z = z * gamma[None, :, None, None] + beta[None, :, None, None]
    z = jnp.maximum(z, 0.0)
    return lax.conv_general_dilated(
        z, w2, window_strides=(1, 1), padding=((1, 1), (1, 1)),
        dimension_numbers=("NCHW", "OIHW", "NCHW"),
        precision=lax.Precision.HIGHEST)


if __name__ == "__main__":
    key = jax.random.PRNGKey(0)
    kx, k1, k2, kg, kb = jax.random.split(key, 5)

    # Shapes from the module definition (input is [1, 576, 14, 14]).
    N, H, W = 1, 14, 14
    x = jax.random.normal(kx, (N, CIN, H, W), jnp.float32)

    # Deterministic synthetic parameters (PyTorch weight layouts: OIHW).
    w1 = jax.random.normal(k1, (CMID, CIN, 1, 1), jnp.float32) * 0.05
    w2 = jax.random.normal(k2, (COUT, CMID, 3, 3), jnp.float32) * 0.05
    gamma = 1.0 + 0.1 * jax.random.normal(kg, (CMID,), jnp.float32)
    beta = 0.1 * jax.random.normal(kb, (CMID,), jnp.float32)

    fused = jax.jit(fused_forward)
    out = jax.block_until_ready(fused(x, w1, gamma, beta, w2))

    ref = jax.block_until_ready(reference_forward(x, w1, gamma, beta, w2))
    assert out.shape == (N, COUT, H, W), out.shape
    max_err = float(jnp.max(jnp.abs(out - ref)))
    assert jnp.allclose(out, ref, atol=1e-3, rtol=1e-3), max_err

    print("KERNEL_OK")
</pallas_src>

<mosaic_0001>
module attributes {stable_mosaic.version = 11 : i64} {
  func.func @kernel(%arg0: i32, %arg1: memref<576x196xf32, #tpu.memory_space<vmem>>, %arg2: memref<128x576xf32, #tpu.memory_space<vmem>>, %arg3: memref<128x2xf32, #tpu.memory_space<vmem>>, %arg4: memref<384x96xf32, #tpu.memory_space<vmem>>, %arg5: memref<32x196xf32, #tpu.memory_space<vmem>>, %arg6: memref<264x128xf32, #tpu.memory_space<vmem>>, %arg7: memref<256x96xf32, #tpu.memory_space<vmem>>) attributes {dimension_semantics = [#tpu.dimension_semantics<arbitrary>], iteration_bounds = array<i64: 1>, scalar_prefetch = 0 : i64, scratch_operands = 2 : i64, tpu.core_type = #tpu.core_type<tc>, window_params = [{pipeline_mode = #tpu.pipeline_mode<synchronous>, transform_indices = @transform_0, window_bounds = array<i64: 576, 196>}, {pipeline_mode = #tpu.pipeline_mode<synchronous>, transform_indices = @transform_1, window_bounds = array<i64: 128, 576>}, {pipeline_mode = #tpu.pipeline_mode<synchronous>, transform_indices = @transform_2, window_bounds = array<i64: 128, 2>}, {pipeline_mode = #tpu.pipeline_mode<synchronous>, transform_indices = @transform_3, window_bounds = array<i64: 384, 96>}, {pipeline_mode = #tpu.pipeline_mode<synchronous>, transform_indices = @transform_4, window_bounds = array<i64: 32, 196>}]} {
    %c0 = arith.constant 0 : index
    %c0_0 = arith.constant 0 : index
    %0 = vector.load %arg2[%c0, %c0_0] : memref<128x576xf32, #tpu.memory_space<vmem>>, vector<128x576xf32>
    %c0_1 = arith.constant 0 : index
    %c0_2 = arith.constant 0 : index
    %1 = vector.load %arg1[%c0_1, %c0_2] : memref<576x196xf32, #tpu.memory_space<vmem>>, vector<576x196xf32>
    %cst = arith.constant dense<0.000000e+00> : vector<128x196xf32>
    %2 = tpu.matmul %0, %1, %cst {dimension_numbers = #tpu.dot_dimension_numbers<[1], [0], [0], [1], [0, 0, 1, 1], [], []>} : vector<128x576xf32>, vector<576x196xf32>, vector<128x196xf32> -> vector<128x196xf32>
    %cst_3 = arith.constant dense<0.000000e+00> : vector<128xf32>
    %3 = vector.multi_reduction <add>, %2, %cst_3 [1] : vector<128x196xf32> to vector<128xf32>
    %4 = vector.shape_cast %3 : vector<128xf32> to vector<128x1xf32>
    %cst_4 = arith.constant 0.00510204071 : f32
    %5 = vector.broadcast %cst_4 : f32 to vector<128x1xf32>
    %6 = arith.mulf %4, %5 : vector<128x1xf32>
    %7 = vector.broadcast %6 : vector<128x1xf32> to vector<128x196xf32>
    %8 = arith.subf %2, %7 : vector<128x196xf32>
    %9 = arith.mulf %8, %8 : vector<128x196xf32>
    %cst_5 = arith.constant dense<0.000000e+00> : vector<128xf32>
    %10 = vector.multi_reduction <add>, %9, %cst_5 [1] : vector<128x196xf32> to vector<128xf32>
    %11 = vector.shape_cast %10 : vector<128xf32> to vector<128x1xf32>
    %cst_6 = arith.constant 0.00510204071 : f32
    %12 = vector.broadcast %cst_6 : f32 to vector<128x1xf32>
    %13 = arith.mulf %11, %12 : vector<128x1xf32>
    %c0_7 = arith.constant 0 : index
    %c0_8 = arith.constant 0 : index
    %14 = vector.load %arg3[%c0_7, %c0_8] : memref<128x2xf32, #tpu.memory_space<vmem>>, vector<128x1xf32>
    %cst_9 = arith.constant 9.99999974E-6 : f32
    %15 = vector.broadcast %cst_9 : f32 to vector<128x1xf32>
    %16 = arith.addf %13, %15 : vector<128x1xf32>
    %17 = math.rsqrt %16 : vector<128x1xf32>
    %18 = arith.mulf %14, %17 : vector<128x1xf32>
    %c0_10 = arith.constant 0 : index
    %c1 = arith.constant 1 : index
    %19 = vector.load %arg3[%c0_10, %c1] : memref<128x2xf32, #tpu.memory_space<vmem>>, vector<128x1xf32>
    %20 = arith.mulf %6, %18 : vector<128x1xf32>
    %21 = arith.subf %19, %20 : vector<128x1xf32>
    %22 = vector.broadcast %18 : vector<128x1xf32> to vector<128x196xf32>
    %23 = arith.mulf %2, %22 : vector<128x196xf32>
    %24 = vector.broadcast %21 : vector<128x1xf32> to vector<128x196xf32>
    %25 = arith.addf %23, %24 : vector<128x196xf32>
    %cst_11 = arith.constant 0.000000e+00 : f32
    %26 = vector.broadcast %cst_11 : f32 to vector<128x196xf32>
    %27 = arith.maximumf %25, %26 : vector<128x196xf32>
    %28 = tpu.transpose %27, [1, 0] : vector<128x196xf32> -> vector<196x128xf32>
    %cst_12 = arith.constant 0.000000e+00 : f32
    %29 = vector.broadcast %cst_12 : f32 to vector<264x128xf32>
    %c0_13 = arith.constant 0 : index
    %c0_14 = arith.constant 0 : index
    %30 = vector.load %arg6[%c0_13, %c0_14] : memref<264x128xf32, #tpu.memory_space<vmem>>, vector<264x128xf32>
    tpu.vector_store %arg6[%c0_13, %c0_14], %29 {strides = array<i32>} : memref<264x128xf32, #tpu.memory_space<vmem>>, vector<264x128xf32>,
    %31 = vector.extract_strided_slice %28 {offsets = [0, 0], sizes = [14, 128], strides = [1, 1]} : vector<196x128xf32> to vector<14x128xf32>
    %c17 = arith.constant 17 : index
    %c0_15 = arith.constant 0 : index
    %32 = vector.load %arg6[%c17, %c0_15] : memref<264x128xf32, #tpu.memory_space<vmem>>, vector<14x128xf32>
    tpu.vector_store %arg6[%c17, %c0_15], %31 {strides = array<i32>} : memref<264x128xf32, #tpu.memory_space<vmem>>, vector<14x128xf32>,
    %33 = vector.extract_strided_slice %28 {offsets = [14, 0], sizes = [14, 128], strides = [1, 1]} : vector<196x128xf32> to vector<14x128xf32>
    %c33 = arith.constant 33 : index
    %c0_16 = arith.constant 0 : index
    %34 = vector.load %arg6[%c33, %c0_16] : memref<264x128xf32, #tpu.memory_space<vmem>>, vector<14x128xf32>
    tpu.vector_store %arg6[%c33, %c0_16], %33 {strides = array<i32>} : memref<264x128xf32, #tpu.memory_space<vmem>>, vector<14x128xf32>,
    %35 = vector.extract_strided_slice %28 {offsets = [28, 0], sizes = [14, 128], strides = [1, 1]} : vector<196x128xf32> to vector<14x128xf32>
    %c49 = arith.constant 49 : index
    %c0_17 = arith.constant 0 : index
    %36 = vector.load %arg6[%c49, %c0_17] : memref<264x128xf32, #tpu.memory_space<vmem>>, vector<14x128xf32>
    tpu.vector_store %arg6[%c49, %c0_17], %35 {strides = array<i32>} : memref<264x128xf32, #tpu.memory_space<vmem>>, vector<14x128xf32>,
    %37 = vector.extract_strided_slice %28 {offsets = [42, 0], sizes = [14, 128], strides = [1, 1]} : vector<196x128xf32> to vector<14x128xf32>
    %c65 = arith.constant 65 : index
    %c0_18 = arith.constant 0 : index
    %38 = vector.load %arg6[%c65, %c0_18] : memref<264x128xf32, #tpu.memory_space<vmem>>, vector<14x128xf32>
    tpu.vector_store %arg6[%c65, %c0_18], %37 {strides = array<i32>} : memref<264x128xf32, #tpu.memory_space<vmem>>, vector<14x128xf32>,
    %39 = vector.extract_strided_slice %28 {offsets = [56, 0], sizes = [14, 128], strides = [1, 1]} : vector<196x128xf32> to vector<14x128xf32>
    %c81 = arith.constant 81 : index
    %c0_19 = arith.constant 0 : index
    %40 = vector.load %arg6[%c81, %c0_19] : memref<264x128xf32, #tpu.memory_space<vmem>>, vector<14x128xf32>
    tpu.vector_store %arg6[%c81, %c0_19], %39 {strides = array<i32>} : memref<264x128xf32, #tpu.memory_space<vmem>>, vector<14x128xf32>,
    %41 = vector.extract_strided_slice %28 {offsets = [70, 0], sizes = [14, 128], strides = [1, 1]} : vector<196x128xf32> to vector<14x128xf32>
    %c97 = arith.constant 97 : index
    %c0_20 = arith.constant 0 : index
    %42 = vector.load %arg6[%c97, %c0_20] : memref<264x128xf32, #tpu.memory_space<vmem>>, vector<14x128xf32>
    tpu.vector_store %arg6[%c97, %c0_20], %41 {strides = array<i32>} : memref<264x128xf32, #tpu.memory_space<vmem>>, vector<14x128xf32>,
    %43 = vector.extract_strided_slice %28 {offsets = [84, 0], sizes = [14, 128], strides = [1, 1]} : vector<196x128xf32> to vector<14x128xf32>
    %c113 = arith.constant 113 : index
    %c0_21 = arith.constant 0 : index
    %44 = vector.load %arg6[%c113, %c0_21] : memref<264x128xf32, #tpu.memory_space<vmem>>, vector<14x128xf32>
    tpu.vector_store %arg6[%c113, %c0_21], %43 {strides = array<i32>} : memref<264x128xf32, #tpu.memory_space<vmem>>, vector<14x128xf32>,
    %45 = vector.extract_strided_slice %28 {offsets = [98, 0], sizes = [14, 128], strides = [1, 1]} : vector<196x128xf32> to vector<14x128xf32>
    %c129 = arith.constant 129 : index
    %c0_22 = arith.constant 0 : index
    %46 = vector.load %arg6[%c129, %c0_22] : memref<264x128xf32, #tpu.memory_space<vmem>>, vector<14x128xf32>
    tpu.vector_store %arg6[%c129, %c0_22], %45 {strides = array<i32>} : memref<264x128xf32, #tpu.memory_space<vmem>>, vector<14x128xf32>,
    %47 = vector.extract_strided_slice %28 {offsets = [112, 0], sizes = [14, 128], strides = [1, 1]} : vector<196x128xf32> to vector<14x128xf32>
    %c145 = arith.constant 145 : index
    %c0_23 = arith.constant 0 : index
    %48 = vector.load %arg6[%c145, %c0_23] : memref<264x128xf32, #tpu.memory_space<vmem>>, vector<14x128xf32>
    tpu.vector_store %arg6[%c145, %c0_23], %47 {strides = array<i32>} : memref<264x128xf32, #tpu.memory_space<vmem>>, vector<14x128xf32>,
    %49 = vector.extract_strided_slice %28 {offsets = [126, 0], sizes = [14, 128], strides = [1, 1]} : vector<196x128xf32> to vector<14x128xf32>
    %c161 = arith.constant 161 : index
    %c0_24 = arith.constant 0 : index
    %50 = vector.load %arg6[%c161, %c0_24] : memref<264x128xf32, #tpu.memory_space<vmem>>, vector<14x128xf32>
    tpu.vector_store %arg6[%c161, %c0_24], %49 {strides = array<i32>} : memref<264x128xf32, #tpu.memory_space<vmem>>, vector<14x128xf32>,
    %51 = vector.extract_strided_slice %28 {offsets = [140, 0], sizes = [14, 128], strides = [1, 1]} : vector<196x128xf32> to vector<14x128xf32>
    %c177 = arith.constant 177 : index
    %c0_25 = arith.constant 0 : index
    %52 = vector.load %arg6[%c177, %c0_25] : memref<264x128xf32, #tpu.memory_space<vmem>>, vector<14x128xf32>
    tpu.vector_store %arg6[%c177, %c0_25], %51 {strides = array<i32>} : memref<264x128xf32, #tpu.memory_space<vmem>>, vector<14x128xf32>,
    %53 = vector.extract_strided_slice %28 {offsets = [154, 0], sizes = [14, 128], strides = [1, 1]} : vector<196x128xf32> to vector<14x128xf32>
    %c193 = arith.constant 193 : index
    %c0_26 = arith.constant 0 : index
    %54 = vector.load %arg6[%c193, %c0_26] : memref<264x128xf32, #tpu.memory_space<vmem>>, vector<14x128xf32>
    tpu.vector_store %arg6[%c193, %c0_26], %53 {strides = array<i32>} : memref<264x128xf32, #tpu.memory_space<vmem>>, vector<14x128xf32>,
    %55 = vector.extract_strided_slice %28 {offsets = [168, 0], sizes = [14, 128], strides = [1, 1]} : vector<196x128xf32> to vector<14x128xf32>
    %c209 = arith.constant 209 : index
    %c0_27 = arith.constant 0 : index
    %56 = vector.load %arg6[%c209, %c0_27] : memref<264x128xf32, #tpu.memory_space<vmem>>, vector<14x128xf32>
    tpu.vector_store %arg6[%c209, %c0_27], %55 {strides = array<i32>} : memref<264x128xf32, #tpu.memory_space<vmem>>, vector<14x128xf32>,
    %57 = vector.extract_strided_slice %28 {offsets = [182, 0], sizes = [14, 128], strides = [1, 1]} : vector<196x128xf32> to vector<14x128xf32>
    %c225 = arith.constant 225 : index
    %c0_28 = arith.constant 0 : index
    %58 = vector.load %arg6[%c225, %c0_28] : memref<264x128xf32, #tpu.memory_space<vmem>>, vector<14x128xf32>
    tpu.vector_store %arg6[%c225, %c0_28], %57 {strides = array<i32>} : memref<264x128xf32, #tpu.memory_space<vmem>>, vector<14x128xf32>,
    %c0_29 = arith.constant 0 : index
    %c0_30 = arith.constant 0 : index
    %59 = vector.load %arg6[%c0_29, %c0_30] : memref<264x128xf32, #tpu.memory_space<vmem>>, vector<256x128xf32>
    %c0_31 = arith.constant 0 : index
    %c0_32 = arith.constant 0 : index
    %60 = vector.load %arg4[%c0_31, %c0_32] : memref<384x96xf32, #tpu.memory_space<vmem>>, vector<128x96xf32>
    %cst_33 = arith.constant dense<0.000000e+00> : vector<256x96xf32>
    %61 = tpu.matmul %59, %60, %cst_33 {dimension_numbers = #tpu.dot_dimension_numbers<[1], [0], [0], [1], [0, 0, 1, 1], [], []>} : vector<256x128xf32>, vector<128x96xf32>, vector<256x96xf32> -> vector<256x96xf32>
    %c0_34 = arith.constant 0 : index
    %c0_35 = arith.constant 0 : index
    %62 = vector.load %arg7[%c0_34, %c0_35] : memref<256x96xf32, #tpu.memory_space<vmem>>, vector<256x96xf32>
    tpu.vector_store %arg7[%c0_34, %c0_35], %61 {strides = array<i32>} : memref<256x96xf32, #tpu.memory_space<vmem>>, vector<256x96xf32>,
    %c0_36 = arith.constant 0 : index
    %c0_37 = arith.constant 0 : index
    %63 = vector.load %arg7[%c0_36, %c0_37] : memref<256x96xf32, #tpu.memory_space<vmem>>, vector<256x96xf32>
    %c1_38 = arith.constant 1 : index
    %c0_39 = arith.constant 0 : index
    %64 = vector.load %arg6[%c1_38, %c0_39] : memref<264x128xf32, #tpu.memory_space<vmem>>, vector<256x128xf32>
    %c128 = arith.constant 128 : index
    %c0_40 = arith.constant 0 : index
    %65 = vector.load %arg4[%c128, %c0_40] : memref<384x96xf32, #tpu.memory_space<vmem>>, vector<128x96xf32>
    %cst_41 = arith.constant dense<0.000000e+00> : vector<256x96xf32>
    %66 = tpu.matmul %64, %65, %cst_41 {dimension_numbers = #tpu.dot_dimension_numbers<[1], [0], [0], [1], [0, 0, 1, 1], [], []>} : vector<256x128xf32>, vector<128x96xf32>, vector<256x96xf32> -> vector<256x96xf32>
    %67 = arith.addf %63, %66 : vector<256x96xf32>
    %c0_42 = arith.constant 0 : index
    %c0_43 = arith.constant 0 : index
    %68 = vector.load %arg7[%c0_42, %c0_43] : memref<256x96xf32, #tpu.memory_space<vmem>>, vector<256x96xf32>
    tpu.vector_store %arg7[%c0_42, %c0_43], %67 {strides = array<i32>} : memref<256x96xf32, #tpu.memory_space<vmem>>, vector<256x96xf32>,
    %c0_44 = arith.constant 0 : index
    %c0_45 = arith.constant 0 : index
    %69 = vector.load %arg7[%c0_44, %c0_45] : memref<256x96xf32, #tpu.memory_space<vmem>>, vector<256x96xf32>
    %c2 = arith.constant 2 : index
    %c0_46 = arith.constant 0 : index
    %70 = vector.load %arg6[%c2, %c0_46] : memref<264x128xf32, #tpu.memory_space<vmem>>, vector<256x128xf32>
    %c256 = arith.constant 256 : index
    %c0_47 = arith.constant 0 : index
    %71 = vector.load %arg4[%c256, %c0_47] : memref<384x96xf32, #tpu.memory_space<vmem>>, vector<128x96xf32>
    %cst_48 = arith.constant dense<0.000000e+00> : vector<256x96xf32>
    %72 = tpu.matmul %70, %71, %cst_48 {dimension_numbers = #tpu.dot_dimension_numbers<[1], [0], [0], [1], [0, 0, 1, 1], [], []>} : vector<256x128xf32>, vector<128x96xf32>, vector<256x96xf32> -> vector<256x96xf32>
    %73 = arith.addf %69, %72 : vector<256x96xf32>
    %c0_49 = arith.constant 0 : index
    %c0_50 = arith.constant 0 : index
    %74 = vector.load %arg7[%c0_49, %c0_50] : memref<256x96xf32, #tpu.memory_space<vmem>>, vector<256x96xf32>
    tpu.vector_store %arg7[%c0_49, %c0_50], %73 {strides = array<i32>} : memref<256x96xf32, #tpu.memory_space<vmem>>, vector<256x96xf32>,
    %c0_51 = arith.constant 0 : index
    %c0_52 = arith.constant 0 : index
    %75 = vector.load %arg7[%c0_51, %c0_52] : memref<256x96xf32, #tpu.memory_space<vmem>>, vector<224x32xf32>
    %c16 = arith.constant 16 : index
    %c32 = arith.constant 32 : index
    %76 = vector.load %arg7[%c16, %c32] : memref<256x96xf32, #tpu.memory_space<vmem>>, vector<224x32xf32>
    %77 = arith.addf %75, %76 : vector<224x32xf32>
    %c32_53 = arith.constant 32 : index
    %c64 = arith.constant 64 : index
    %78 = vector.load %arg7[%c32_53, %c64] : memref<256x96xf32, #tpu.memory_space<vmem>>, vector<224x32xf32>
    %79 = arith.addf %77, %78 : vector<224x32xf32>
    %80 = vector.extract_strided_slice %79 {offsets = [0, 0], sizes = [14, 32], strides = [1, 1]} : vector<224x32xf32> to vector<14x32xf32>
    %81 = vector.extract_strided_slice %79 {offsets = [16, 0], sizes = [14, 32], strides = [1, 1]} : vector<224x32xf32> to vector<14x32xf32>
    %82 = vector.extract_strided_slice %79 {offsets = [32, 0], sizes = [14, 32], strides = [1, 1]} : vector<224x32xf32> to vector<14x32xf32>
    %83 = vector.extract_strided_slice %79 {offsets = [48, 0], sizes = [14, 32], strides = [1, 1]} : vector<224x32xf32> to vector<14x32xf32>
    %84 = vector.extract_strided_slice %79 {offsets = [64, 0], sizes = [14, 32], strides = [1, 1]} : vector<224x32xf32> to vector<14x32xf32>
    %85 = vector.extract_strided_slice %79 {offsets = [80, 0], sizes = [14, 32], strides = [1, 1]} : vector<224x32xf32> to vector<14x32xf32>
    %86 = vector.extract_strided_slice %79 {offsets = [96, 0], sizes = [14, 32], strides = [1, 1]} : vector<224x32xf32> to vector<14x32xf32>
    %87 = vector.extract_strided_slice %79 {offsets = [112, 0], sizes = [14, 32], strides = [1, 1]} : vector<224x32xf32> to vector<14x32xf32>
    %88 = vector.extract_strided_slice %79 {offsets = [128, 0], sizes = [14, 32], strides = [1, 1]} : vector<224x32xf32> to vector<14x32xf32>
    %89 = vector.extract_strided_slice %79 {offsets = [144, 0], sizes = [14, 32], strides = [1, 1]} : vector<224x32xf32> to vector<14x32xf32>
    %90 = vector.extract_strided_slice %79 {offsets = [160, 0], sizes = [14, 32], strides = [1, 1]} : vector<224x32xf32> to vector<14x32xf32>
    %91 = vector.extract_strided_slice %79 {offsets = [176, 0], sizes = [14, 32], strides = [1, 1]} : vector<224x32xf32> to vector<14x32xf32>
    %92 = vector.extract_strided_slice %79 {offsets = [192, 0], sizes = [14, 32], strides = [1, 1]} : vector<224x32xf32> to vector<14x32xf32>
    %93 = vector.extract_strided_slice %79 {offsets = [208, 0], sizes = [14, 32], strides = [1, 1]} : vector<224x32xf32> to vector<14x32xf32>
    %94 = tpu.concatenate %80, %81, %82, %83, %84, %85, %86, %87, %88, %89, %90, %91, %92, %93 in 0 : vector<14x32xf32>, vector<14x32xf32>, vector<14x32xf32>, vector<14x32xf32>, vector<14x32xf32>, vector<14x32xf32>, vector<14x32xf32>, vector<14x32xf32>, vector<14x32xf32>, vector<14x32xf32>, vector<14x32xf32>, vector<14x32xf32>, vector<14x32xf32>, vector<14x32xf32> -> vector<196x32xf32>
    %95 = tpu.transpose %94, [1, 0] : vector<196x32xf32> -> vector<32x196xf32>
    %c0_54 = arith.constant 0 : index
    %c0_55 = arith.constant 0 : index
    %96 = vector.load %arg5[%c0_54, %c0_55] : memref<32x196xf32, #tpu.memory_space<vmem>>, vector<32x196xf32>
    tpu.vector_store %arg5[%c0_54, %c0_55], %95 {strides = array<i32>} : memref<32x196xf32, #tpu.memory_space<vmem>>, vector<32x196xf32>,
    return
  }
  func.func @transform_0(%arg0: i32) -> (i32, i32) {
    %c0_i32 = arith.constant 0 : i32
    %c0_i32_0 = arith.constant 0 : i32
    %c0_i32_1 = arith.constant 0 : i32
    return %c0_i32, %c0_i32_0 : i32, i32
  }
  func.func @transform_1(%arg0: i32) -> (i32, i32) {
    %c0_i32 = arith.constant 0 : i32
    %c0_i32_0 = arith.constant 0 : i32
    %c0_i32_1 = arith.constant 0 : i32
    return %c0_i32, %c0_i32_0 : i32, i32
  }
  func.func @transform_2(%arg0: i32) -> (i32, i32) {
    %c0_i32 = arith.constant 0 : i32
    %c0_i32_0 = arith.constant 0 : i32
    %c0_i32_1 = arith.constant 0 : i32
    return %c0_i32, %c0_i32_0 : i32, i32
  }
  func.func @transform_3(%arg0: i32) -> (i32, i32) {
    %c0_i32 = arith.constant 0 : i32
    %c0_i32_0 = arith.constant 0 : i32
    %c0_i32_1 = arith.constant 0 : i32
    return %c0_i32, %c0_i32_0 : i32, i32
  }
  func.func @transform_4(%arg0: i32) -> (i32, i32) {
    %c0_i32 = arith.constant 0 : i32
    %c0_i32_0 = arith.constant 0 : i32
    %c0_i32_1 = arith.constant 0 : i32
    return %c0_i32, %c0_i32_0 : i32, i32
  }
}

</mosaic_0001>

<llo_original>
// kernel: fused_forward.1
$region0: #{fused_forward.1}
  #allocation0 [shape = 'u32[]', space=smem, size = 0x4, offset = 0x4, fixed_abs, tag = 'smem constant byte address 0x4 - core index']
  #allocation1 [shape = 'u32[72,128]{1,0:T(1,128)}', space=vmem, size = 0x9000, scoped, tag = 'internal scratch']
  #allocation2 [shape = 'f32[264,128]{1,0:T(8,128)}', space=vmem, size = 0x21000, scoped, tag = 'scratch operand']
  #allocation3 [shape = 'f32[256,96]{1,0:T(8,128)}', space=vmem, size = 0x20000, scoped, tag = 'scratch operand']
  %s0 = inlined_call_operand.vmem [shape: f32[576,196], index: 0, kind: input, shape index: {}]
  %s1 = inlined_call_operand.vmem [shape: f32[128,576], index: 1, kind: input, shape index: {}]
  %s2 = inlined_call_operand.vmem [shape: f32[128,2], index: 2, kind: input, shape index: {}]
  %s3 = inlined_call_operand.vmem [shape: f32[384,96], index: 3, kind: input, shape index: {}]
  %s4 = inlined_call_operand.vmem [shape: f32[32,196], index: 4, kind: output, shape index: {}]
  %s5 = sld [smem:[#allocation0]]
  $region26: #{fused_forward.1} parent=0
    _
  %s7 = ssub.s32 1, %s5
  %s8 = scalar_select 0, %s7, %s5
  // Predicated region
  $region2: #{fused_forward.1} parent=0 // pred_check
    _
  $region3: #{fused_forward.1} parent=0 // pred_check_branch
    %10 = sbr.rel (0) target = $region5
  $region4: #{fused_forward.1} parent=0 // pred_region
    _
  $region5: #{fused_forward.1} parent=0 // pred_fallthru
    _
  // Predicated region
  $region6: #{fused_forward.1} parent=0 // pred_check
    _
  $region7: #{fused_forward.1} parent=0 // pred_check_branch
    %12 = sbr.rel (0) target = $region9
  $region8: #{fused_forward.1} parent=0 // pred_region
    _
  $region9: #{fused_forward.1} parent=0 // pred_fallthru
    _
  // Predicated region
  $region10: #{fused_forward.1} parent=0 // pred_check
    _
  $region11: #{fused_forward.1} parent=0 // pred_check_branch
    %14 = sbr.rel (0) target = $region13
  $region12: #{fused_forward.1} parent=0 // pred_region
    _
  $region13: #{fused_forward.1} parent=0 // pred_fallthru
    _
  // Predicated region
  $region14: #{fused_forward.1} parent=0 // pred_check
    _
  $region15: #{fused_forward.1} parent=0 // pred_check_branch
    %16 = sbr.rel (0) target = $region17
  $region16: #{fused_forward.1} parent=0 // pred_region
    _
  $region17: #{fused_forward.1} parent=0 // pred_fallthru
    _
  %v17 = vld [vmem:[%s1] sm:$0xff]
  %v18 = vld [vmem:[%s1 + $0x8] sm:$0xff]
  %v19 = vld [vmem:[%s1 + $0x10] sm:$0xff]
  %v20 = vld [vmem:[%s1 + $0x18] sm:$0xff]
  %v21 = vld [vmem:[%s1 + $0x20] sm:$0xff]
  %v22 = vld [vmem:[%s1 + $0x28] sm:$0xff]
  %v23 = vld [vmem:[%s1 + $0x30] sm:$0xff]
  %v24 = vld [vmem:[%s1 + $0x38] sm:$0xff]
  %v25 = vld [vmem:[%s1 + $0x40] sm:$0xff]
  %v26 = vld [vmem:[%s1 + $0x48] sm:$0xff]
  %v27 = vld [vmem:[%s1 + $0x50] sm:$0xff]
  %v28 = vld [vmem:[%s1 + $0x58] sm:$0xff]
  %v29 = vld [vmem:[%s1 + $0x60] sm:$0xff]
  %v30 = vld [vmem:[%s1 + $0x68] sm:$0xff]
  %v31 = vld [vmem:[%s1 + $0x70] sm:$0xff]
  %v32 = vld [vmem:[%s1 + $0x78] sm:$0xff]
  %v33 = vld [vmem:[%s1 + $0x80] sm:$0xff]
  %v34 = vld [vmem:[%s1 + $0x88] sm:$0xff]
  %v35 = vld [vmem:[%s1 + $0x90] sm:$0xff]
  %v36 = vld [vmem:[%s1 + $0x98] sm:$0xff]
  %v37 = vld [vmem:[%s1 + $0xa0] sm:$0xff]
  %v38 = vld [vmem:[%s1 + $0xa8] sm:$0xff]
  %v39 = vld [vmem:[%s1 + $0xb0] sm:$0xff]
  %v40 = vld [vmem:[%s1 + $0xb8] sm:$0xff]
  %v41 = vld [vmem:[%s1 + $0xc0] sm:$0xff]
  %v42 = vld [vmem:[%s1 + $0xc8] sm:$0xff]
  %v43 = vld [vmem:[%s1 + $0xd0] sm:$0xff]
  %v44 = vld [vmem:[%s1 + $0xd8] sm:$0xff]
  %v45 = vld [vmem:[%s1 + $0xe0] sm:$0xff]
  %v46 = vld [vmem:[%s1 + $0xe8] sm:$0xff]
  %v47 = vld [vmem:[%s1 + $0xf0] sm:$0xff]
  %v48 = vld [vmem:[%s1 + $0xf8] sm:$0xff]
  %v49 = vld [vmem:[%s1 + $0x100] sm:$0xff]
  %v50 = vld [vmem:[%s1 + $0x108] sm:$0xff]
  %v51 = vld [vmem:[%s1 + $0x110] sm:$0xff]
  %v52 = vld [vmem:[%s1 + $0x118] sm:$0xff]
  %v53 = vld [vmem:[%s1 + $0x120] sm:$0xff]
  %v54 = vld [vmem:[%s1 + $0x128] sm:$0xff]
  %v55 = vld [vmem:[%s1 + $0x130] sm:$0xff]
  %v56 = vld [vmem:[%s1 + $0x138] sm:$0xff]
  %v57 = vld [vmem:[%s1 + $0x140] sm:$0xff]
  %v58 = vld [vmem:[%s1 + $0x148] sm:$0xff]
  %v59 = vld [vmem:[%s1 + $0x150] sm:$0xff]
  %v60 = vld [vmem:[%s1 + $0x158] sm:$0xff]
  %v61 = vld [vmem:[%s1 + $0x160] sm:$0xff]
  %v62 = vld [vmem:[%s1 + $0x168] sm:$0xff]
  %v63 = vld [vmem:[%s1 + $0x170] sm:$0xff]
  %v64 = vld [vmem:[%s1 + $0x178] sm:$0xff]
  %v65 = vld [vmem:[%s1 + $0x180] sm:$0xff]
  %v66 = vld [vmem:[%s1 + $0x188] sm:$0xff]
  %v67 = vld [vmem:[%s1 + $0x190] sm:$0xff]
  %v68 = vld [vmem:[%s1 + $0x198] sm:$0xff]
  %v69 = vld [vmem:[%s1 + $0x1a0] sm:$0xff]
  %v70 = vld [vmem:[%s1 + $0x1a8] sm:$0xff]
  %v71 = vld [vmem:[%s1 + $0x1b0] sm:$0xff]
  %v72 = vld [vmem:[%s1 + $0x1b8] sm:$0xff]
  %v73 = vld [vmem:[%s1 + $0x1c0] sm:$0xff]
  %v74 = vld [vmem:[%s1 + $0x1c8] sm:$0xff]
  %v75 = vld [vmem:[%s1 + $0x1d0] sm:$0xff]
  %v76 = vld [vmem:[%s1 + $0x1d8] sm:$0xff]
  %v77 = vld [vmem:[%s1 + $0x1e0] sm:$0xff]
  %v78 = vld [vmem:[%s1 + $0x1e8] sm:$0xff]
  %v79 = vld [vmem:[%s1 + $0x1f0] sm:$0xff]
  %v80 = vld [vmem:[%s1 + $0x1f8] sm:$0xff]
  %v81 = vld [vmem:[%s1 + $0x200] sm:$0xff]
  %v82 = vld [vmem:[%s1 + $0x208] sm:$0xff]
  %v83 = vld [vmem:[%s1 + $0x210] sm:$0xff]
  %v84 = vld [vmem:[%s1 + $0x218] sm:$0xff]
  %v85 = vld [vmem:[%s1 + $0x220] sm:$0xff]
  %v86 = vld [vmem:[%s1 + $0x228] sm:$0xff]
  %v87 = vld [vmem:[%s1 + $0x230] sm:$0xff]
  %v88 = vld [vmem:[%s1 + $0x238] sm:$0xff]
  %v89 = vld [vmem:[%s1 + $0x240] sm:$0xff]
  %v90 = vld [vmem:[%s1 + $0x248] sm:$0xff]
  %v91 = vld [vmem:[%s1 + $0x250] sm:$0xff]
  %v92 = vld [vmem:[%s1 + $0x258] sm:$0xff]
  %v93 = vld [vmem:[%s1 + $0x260] sm:$0xff]
  %v94 = vld [vmem:[%s1 + $0x268] sm:$0xff]
  %v95 = vld [vmem:[%s1 + $0x270] sm:$0xff]
  %v96 = vld [vmem:[%s1 + $0x278] sm:$0xff]
  %v97 = vld [vmem:[%s0] sm:$0xff]
  %v98 = vld [vmem:[%s0 + $0x8] sm:$0xff]
  %v99 = vld [vmem:[%s0 + $0x10] sm:$0xff]
  %v100 = vld [vmem:[%s0 + $0x18] sm:$0xff]
  %v101 = vld [vmem:[%s0 + $0x20] sm:$0xff]
  %v102 = vld [vmem:[%s0 + $0x28] sm:$0xff]
  %v103 = vld [vmem:[%s0 + $0x30] sm:$0xff]
  %v104 = vld [vmem:[%s0 + $0x38] sm:$0xff]
  %v105 = vld [vmem:[%s0 + $0x40] sm:$0xff]
  %v106 = vld [vmem:[%s0 + $0x48] sm:$0xff]
  %v107 = vld [vmem:[%s0 + $0x50] sm:$0xff]
  %v108 = vld [vmem:[%s0 + $0x58] sm:$0xff]
  %v109 = vld [vmem:[%s0 + $0x60] sm:$0xff]
  %v110 = vld [vmem:[%s0 + $0x68] sm:$0xff]
  %v111 = vld [vmem:[%s0 + $0x70] sm:$0xff]
  %v112 = vld [vmem:[%s0 + $0x78] sm:$0xff]
  %v113 = vld [vmem:[%s0 + $0x80] sm:$0xff]
  %v114 = vld [vmem:[%s0 + $0x88] sm:$0xff]
  %v115 = vld [vmem:[%s0 + $0x90] sm:$0xff]
  %v116 = vld [vmem:[%s0 + $0x98] sm:$0xff]
  %v117 = vld [vmem:[%s0 + $0xa0] sm:$0xff]
  %v118 = vld [vmem:[%s0 + $0xa8] sm:$0xff]
  %v119 = vld [vmem:[%s0 + $0xb0] sm:$0xff]
  %v120 = vld [vmem:[%s0 + $0xb8] sm:$0xff]
  %v121 = vld [vmem:[%s0 + $0xc0] sm:$0xff]
  %v122 = vld [vmem:[%s0 + $0xc8] sm:$0xff]
  %v123 = vld [vmem:[%s0 + $0xd0] sm:$0xff]
  %v124 = vld [vmem:[%s0 + $0xd8] sm:$0xff]
  %v125 = vld [vmem:[%s0 + $0xe0] sm:$0xff]
  %v126 = vld [vmem:[%s0 + $0xe8] sm:$0xff]
  %v127 = vld [vmem:[%s0 + $0xf0] sm:$0xff]
  %v128 = vld [vmem:[%s0 + $0xf8] sm:$0xff]
  %v129 = vld [vmem:[%s0 + $0x100] sm:$0xff]
  %v130 = vld [vmem:[%s0 + $0x108] sm:$0xff]
  %v131 = vld [vmem:[%s0 + $0x110] sm:$0xff]
  %v132 = vld [vmem:[%s0 + $0x118] sm:$0xff]
  %v133 = vld [vmem:[%s0 + $0x120] sm:$0xff]
  %v134 = vld [vmem:[%s0 + $0x128] sm:$0xff]
  %v135 = vld [vmem:[%s0 + $0x130] sm:$0xff]
  %v136 = vld [vmem:[%s0 + $0x138] sm:$0xff]
  %v137 = vld [vmem:[%s0 + $0x140] sm:$0xff]
  %v138 = vld [vmem:[%s0 + $0x148] sm:$0xff]
  %v139 = vld [vmem:[%s0 + $0x150] sm:$0xff]
  %v140 = vld [vmem:[%s0 + $0x158] sm:$0xff]
  %v141 = vld [vmem:[%s0 + $0x160] sm:$0xff]
  %v142 = vld [vmem:[%s0 + $0x168] sm:$0xff]
  %v143 = vld [vmem:[%s0 + $0x170] sm:$0xff]
  %v144 = vld [vmem:[%s0 + $0x178] sm:$0xff]
  %v145 = vld [vmem:[%s0 + $0x180] sm:$0xff]
  %v146 = vld [vmem:[%s0 + $0x188] sm:$0xff]
  %v147 = vld [vmem:[%s0 + $0x190] sm:$0xff]
  %v148 = vld [vmem:[%s0 + $0x198] sm:$0xff]
  %v149 = vld [vmem:[%s0 + $0x1a0] sm:$0xff]
  %v150 = vld [vmem:[%s0 + $0x1a8] sm:$0xff]
  %v151 = vld [vmem:[%s0 + $0x1b0] sm:$0xff]
  %v152 = vld [vmem:[%s0 + $0x1b8] sm:$0xff]
  %v153 = vld [vmem:[%s0 + $0x1c0] sm:$0xff]
  %v154 = vld [vmem:[%s0 + $0x1c8] sm:$0xff]
  %v155 = vld [vmem:[%s0 + $0x1d0] sm:$0xff]
  %v156 = vld [vmem:[%s0 + $0x1d8] sm:$0xff]
  %v157 = vld [vmem:[%s0 + $0x1e0] sm:$0xff]
  %v158 = vld [vmem:[%s0 + $0x1e8] sm:$0xff]
  %v159 = vld [vmem:[%s0 + $0x1f0] sm:$0xff]
  %v160 = vld [vmem:[%s0 + $0x1f8] sm:$0xff]
  %v161 = vld [vmem:[%s0 + $0x200] sm:$0xff]
  %v162 = vld [vmem:[%s0 + $0x208] sm:$0xff]
  %v163 = vld [vmem:[%s0 + $0x210] sm:$0xff]
  %v164 = vld [vmem:[%s0 + $0x218] sm:$0xff]
  %v165 = vld [vmem:[%s0 + $0x220] sm:$0xff]
  %v166 = vld [vmem:[%s0 + $0x228] sm:$0xff]
  %v167 = vld [vmem:[%s0 + $0x230] sm:$0xff]
  %v168 = vld [vmem:[%s0 + $0x238] sm:$0xff]
  %v169 = vld [vmem:[%s0 + $0x240] sm:$0xff]
  %v170 = vld [vmem:[%s0 + $0x248] sm:$0xff]
  %v171 = vld [vmem:[%s0 + $0x250] sm:$0xff]
  %v172 = vld [vmem:[%s0 + $0x258] sm:$0xff]
  %v173 = vld [vmem:[%s0 + $0x260] sm:$0xff]
  %v174 = vld [vmem:[%s0 + $0x268] sm:$0xff]
  %v175 = vld [vmem:[%s0 + $0x270] sm:$0xff]
  %v176 = vld [vmem:[%s0 + $0x278] sm:$0xff]
  %v177 = vld [vmem:[%s0 + $0x280] sm:$0xff]
  %v178 = vld [vmem:[%s0 + $0x288] sm:$0xff]
  %v179 = vld [vmem:[%s0 + $0x290] sm:$0xff]
  %v180 = vld [vmem:[%s0 + $0x298] sm:$0xff]
  %v181 = vld [vmem:[%s0 + $0x2a0] sm:$0xff]
  %v182 = vld [vmem:[%s0 + $0x2a8] sm:$0xff]
  %v183 = vld [vmem:[%s0 + $0x2b0] sm:$0xff]
  %v184 = vld [vmem:[%s0 + $0x2b8] sm:$0xff]
  %v185 = vld [vmem:[%s0 + $0x2c0] sm:$0xff]
  %v186 = vld [vmem:[%s0 + $0x2c8] sm:$0xff]
  %v187 = vld [vmem:[%s0 + $0x2d0] sm:$0xff]
  %v188 = vld [vmem:[%s0 + $0x2d8] sm:$0xff]
  %v189 = vld [vmem:[%s0 + $0x2e0] sm:$0xff]
  %v190 = vld [vmem:[%s0 + $0x2e8] sm:$0xff]
  %v191 = vld [vmem:[%s0 + $0x2f0] sm:$0xff]
  %v192 = vld [vmem:[%s0 + $0x2f8] sm:$0xff]
  %v193 = vld [vmem:[%s0 + $0x300] sm:$0xff]
  %v194 = vld [vmem:[%s0 + $0x308] sm:$0xff]
  %v195 = vld [vmem:[%s0 + $0x310] sm:$0xff]
  %v196 = vld [vmem:[%s0 + $0x318] sm:$0xff]
  %v197 = vld [vmem:[%s0 + $0x320] sm:$0xff]
  %v198 = vld [vmem:[%s0 + $0x328] sm:$0xff]
  %v199 = vld [vmem:[%s0 + $0x330] sm:$0xff]
  %v200 = vld [vmem:[%s0 + $0x338] sm:$0xff]
  %v201 = vld [vmem:[%s0 + $0x340] sm:$0xff]
  %v202 = vld [vmem:[%s0 + $0x348] sm:$0xff]
  %v203 = vld [vmem:[%s0 + $0x350] sm:$0xff]
  %v204 = vld [vmem:[%s0 + $0x358] sm:$0xff]
  %v205 = vld [vmem:[%s0 + $0x360] sm:$0xff]
  %v206 = vld [vmem:[%s0 + $0x368] sm:$0xff]
  %v207 = vld [vmem:[%s0 + $0x370] sm:$0xff]
  %v208 = vld [vmem:[%s0 + $0x378] sm:$0xff]
  %v209 = vld [vmem:[%s0 + $0x380] sm:$0xff]
  %v210 = vld [vmem:[%s0 + $0x388] sm:$0xff]
  %v211 = vld [vmem:[%s0 + $0x390] sm:$0xff]
  %v212 = vld [vmem:[%s0 + $0x398] sm:$0xff]
  %v213 = vld [vmem:[%s0 + $0x3a0] sm:$0xff]
  %v214 = vld [vmem:[%s0 + $0x3a8] sm:$0xff]
  %v215 = vld [vmem:[%s0 + $0x3b0] sm:$0xff]
  %v216 = vld [vmem:[%s0 + $0x3b8] sm:$0xff]
  %v217 = vld [vmem:[%s0 + $0x3c0] sm:$0xff]
  %v218 = vld [vmem:[%s0 + $0x3c8] sm:$0xff]
  %v219 = vld [vmem:[%s0 + $0x3d0] sm:$0xff]
  %v220 = vld [vmem:[%s0 + $0x3d8] sm:$0xff]
  %v221 = vld [vmem:[%s0 + $0x3e0] sm:$0xff]
  %v222 = vld [vmem:[%s0 + $0x3e8] sm:$0xff]
  %v223 = vld [vmem:[%s0 + $0x3f0] sm:$0xff]
  %v224 = vld [vmem:[%s0 + $0x3f8] sm:$0xff]
  %v225 = vld [vmem:[%s0 + $0x400] sm:$0xff]
  %v226 = vld [vmem:[%s0 + $0x408] sm:$0xff]
  %v227 = vld [vmem:[%s0 + $0x410] sm:$0xff]
  %v228 = vld [vmem:[%s0 + $0x418] sm:$0xff]
  %v229 = vld [vmem:[%s0 + $0x420] sm:$0xff]
  %v230 = vld [vmem:[%s0 + $0x428] sm:$0xff]
  %v231 = vld [vmem:[%s0 + $0x430] sm:$0xff]
  %v232 = vld [vmem:[%s0 + $0x438] sm:$0xff]
  %v233 = vld [vmem:[%s0 + $0x440] sm:$0xff]
  %v234 = vld [vmem:[%s0 + $0x448] sm:$0xff]
  %v235 = vld [vmem:[%s0 + $0x450] sm:$0xff]
  %v236 = vld [vmem:[%s0 + $0x458] sm:$0xff]
  %v237 = vld [vmem:[%s0 + $0x460] sm:$0xff]
  %v238 = vld [vmem:[%s0 + $0x468] sm:$0xff]
  %v239 = vld [vmem:[%s0 + $0x470] sm:$0xff]
  %v240 = vld [vmem:[%s0 + $0x478] sm:$0xff]
  %vm241 = vcmask 523264
  %v243 = vsel %vm241, %v21, 0
  %v246 = vsel %vm241, %v26, 0
  %v249 = vsel %vm241, %v31, 0
  %v252 = vsel %vm241, %v36, 0
  %v255 = vsel %vm241, %v41, 0
  %v258 = vsel %vm241, %v46, 0
  %v261 = vsel %vm241, %v51, 0
  %v264 = vsel %vm241, %v56, 0
  %v267 = vsel %vm241, %v61, 0
  %v270 = vsel %vm241, %v66, 0
  %v273 = vsel %vm241, %v71, 0
  %v276 = vsel %vm241, %v76, 0
  %v279 = vsel %vm241, %v81, 0
  %v282 = vsel %vm241, %v86, 0
  %v285 = vsel %vm241, %v91, 0
  %v288 = vsel %vm241, %v96, 0
  %290 = vmatpush.msra.mxu0 %v127
  %291 = vmatpush.msra.mxu0 %v125
  %292 = vmatpush.msra.mxu0 %v123
  %293 = vmatpush.msra.mxu0 %v121
  %294 = vmatpush.msra.mxu0 %v119
  %295 = vmatpush.msra.mxu0 %v117
  %296 = vmatpush.msra.mxu0 %v115
  %297 = vmatpush.msra.mxu0 %v113
  %298 = vmatpush.msra.mxu0 %v111
  %299 = vmatpush.msra.mxu0 %v109
  %300 = vmatpush.msra.mxu0 %v107
  %301 = vmatpush.msra.mxu0 %v105
  %302 = vmatpush.msra.mxu0 %v103
  %303 = vmatpush.msra.mxu0 %v101
  %304 = vmatpush.msra.mxu0 %v99
  %305 = vmatpush.msra.mxu0 %v97
  %306 = vmatmul.f32.gmra.mxu0 %v17
  %v307 = vpop.f32.mrf.mxu0
  %v308 = vadd.f32 0.0, %v307
  %309 = vmatmul.f32.gmra.mxu0 %v22
  %v310 = vpop.f32.mrf.mxu0
  %v311 = vadd.f32 0.0, %v310
  %312 = vmatmul.f32.gmra.mxu0 %v27
  %v313 = vpop.f32.mrf.mxu0
  %v314 = vadd.f32 0.0, %v313
  %315 = vmatmul.f32.gmra.mxu0 %v32
  %v316 = vpop.f32.mrf.mxu0
  %v317 = vadd.f32 0.0, %v316
  %318 = vmatmul.f32.gmra.mxu0 %v37
  %v319 = vpop.f32.mrf.mxu0
  %v320 = vadd.f32 0.0, %v319
  %321 = vmatmul.f32.gmra.mxu0 %v42
  %v322 = vpop.f32.mrf.mxu0
  %v323 = vadd.f32 0.0, %v322
  %324 = vmatmul.f32.gmra.mxu0 %v47
  %v325 = vpop.f32.mrf.mxu0
  %v326 = vadd.f32 0.0, %v325
  %327 = vmatmul.f32.gmra.mxu0 %v52
  %v328 = vpop.f32.mrf.mxu0
  %v329 = vadd.f32 0.0, %v328
  %330 = vmatmul.f32.gmra.mxu0 %v57
  %v331 = vpop.f32.mrf.mxu0
  %v332 = vadd.f32 0.0, %v331
  %333 = vmatmul.f32.gmra.mxu0 %v62
  %v334 = vpop.f32.mrf.mxu0
  %v335 = vadd.f32 0.0, %v334
  %336 = vmatmul.f32.gmra.mxu0 %v67
  %v337 = vpop.f32.mrf.mxu0
  %v338 = vadd.f32 0.0, %v337
  %339 = vmatmul.f32.gmra.mxu0 %v72
  %v340 = vpop.f32.mrf.mxu0
  %v341 = vadd.f32 0.0, %v340
  %342 = vmatmul.f32.gmra.mxu0 %v77
  %v343 = vpop.f32.mrf.mxu0
  %v344 = vadd.f32 0.0, %v343
  %345 = vmatmul.f32.gmra.mxu0 %v82
  %v346 = vpop.f32.mrf.mxu0
  %v347 = vadd.f32 0.0, %v346
  %348 = vmatmul.f32.gmra.mxu0 %v87
  %v349 = vpop.f32.mrf.mxu0
  %v350 = vadd.f32 0.0, %v349
  %351 = vmatmul.f32.gmra.mxu0 %v92
  %v352 = vpop.f32.mrf.mxu0
  %v353 = vadd.f32 0.0, %v352
  %354 = vdwg.mxu0
  %355 = vmatpush.msra.mxu0 %v159
  %356 = vmatpush.msra.mxu0 %v157
  %357 = vmatpush.msra.mxu0 %v155
  %358 = vmatpush.msra.mxu0 %v153
  %359 = vmatpush.msra.mxu0 %v151
  %360 = vmatpush.msra.mxu0 %v149
  %361 = vmatpush.msra.mxu0 %v147
  %362 = vmatpush.msra.mxu0 %v145
  %363 = vmatpush.msra.mxu0 %v143
  %364 = vmatpush.msra.mxu0 %v141
  %365 = vmatpush.msra.mxu0 %v139
  %366 = vmatpush.msra.mxu0 %v137
  %367 = vmatpush.msra.mxu0 %v135
  %368 = vmatpush.msra.mxu0 %v133
  %369 = vmatpush.msra.mxu0 %v131
  %370 = vmatpush.msra.mxu0 %v129
  %371 = vmatmul.f32.gmra.mxu0 %v18
  %v372 = vpop.f32.mrf.mxu0
  %v373 = vadd.f32 %v308, %v372
  %374 = vmatmul.f32.gmra.mxu0 %v23
  %v375 = vpop.f32.mrf.mxu0
  %v376 = vadd.f32 %v311, %v375
  %377 = vmatmul.f32.gmra.mxu0 %v28
  %v378 = vpop.f32.mrf.mxu0
  %v379 = vadd.f32 %v314, %v378
  %380 = vmatmul.f32.gmra.mxu0 %v33
  %v381 = vpop.f32.mrf.mxu0
  %v382 = vadd.f32 %v317, %v381
  %383 = vmatmul.f32.gmra.mxu0 %v38
  %v384 = vpop.f32.mrf.mxu0
  %v385 = vadd.f32 %v320, %v384
  %386 = vmatmul.f32.gmra.mxu0 %v43
  %v387 = vpop.f32.mrf.mxu0
  %v388 = vadd.f32 %v323, %v387
  %389 = vmatmul.f32.gmra.mxu0 %v48
  %v390 = vpop.f32.mrf.mxu0
  %v391 = vadd.f32 %v326, %v390
  %392 = vmatmul.f32.gmra.mxu0 %v53
  %v393 = vpop.f32.mrf.mxu0
  %v394 = vadd.f32 %v329, %v393
  %395 = vmatmul.f32.gmra.mxu0 %v58
  %v396 = vpop.f32.mrf.mxu0
  %v397 = vadd.f32 %v332, %v396
  %398 = vmatmul.f32.gmra.mxu0 %v63
  %v399 = vpop.f32.mrf.mxu0
  %v400 = vadd.f32 %v335, %v399
  %401 = vmatmul.f32.gmra.mxu0 %v68
  %v402 = vpop.f32.mrf.mxu0
  %v403 = vadd.f32 %v338, %v402
  %404 = vmatmul.f32.gmra.mxu0 %v73
  %v405 = vpop.f32.mrf.mxu0
  %v406 = vadd.f32 %v341, %v405
  %407 = vmatmul.f32.gmra.mxu0 %v78
  %v408 = vpop.f32.mrf.mxu0
  %v409 = vadd.f32 %v344, %v408
  %410 = vmatmul.f32.gmra.mxu0 %v83
  %v411 = vpop.f32.mrf.mxu0
  %v412 = vadd.f32 %v347, %v411
  %413 = vmatmul.f32.gmra.mxu0 %v88
  %v414 = vpop.f32.mrf.mxu0
  %v415 = vadd.f32 %v350, %v414
  %416 = vmatmul.f32.gmra.mxu0 %v93
  %v417 = vpop.f32.mrf.mxu0
  %v418 = vadd.f32 %v353, %v417
  %419 = vdwg.mxu0
  %420 = vmatpush.msra.mxu0 %v191
  %421 = vmatpush.msra.mxu0 %v189
  %422 = vmatpush.msra.mxu0 %v187
  %423 = vmatpush.msra.mxu0 %v185
  %424 = vmatpush.msra.mxu0 %v183
  %425 = vmatpush.msra.mxu0 %v181
  %426 = vmatpush.msra.mxu0 %v179
  %427 = vmatpush.msra.mxu0 %v177
  %428 = vmatpush.msra.mxu0 %v175
  %429 = vmatpush.msra.mxu0 %v173
  %430 = vmatpush.msra.mxu0 %v171
  %431 = vmatpush.msra.mxu0 %v169
  %432 = vmatpush.msra.mxu0 %v167
  %433 = vmatpush.msra.mxu0 %v165
  %434 = vmatpush.msra.mxu0 %v163
  %435 = vmatpush.msra.mxu0 %v161
  %436 = vmatmul.f32.gmra.mxu0 %v19
  %v437 = vpop.f32.mrf.mxu0
  %v438 = vadd.f32 %v373, %v437
  %439 = vmatmul.f32.gmra.mxu0 %v24
  %v440 = vpop.f32.mrf.mxu0
  %v441 = vadd.f32 %v376, %v440
  %442 = vmatmul.f32.gmra.mxu0 %v29
  %v443 = vpop.f32.mrf.mxu0
  %v444 = vadd.f32 %v379, %v443
  %445 = vmatmul.f32.gmra.mxu0 %v34
  %v446 = vpop.f32.mrf.mxu0
  %v447 = vadd.f32 %v382, %v446
  %448 = vmatmul.f32.gmra.mxu0 %v39
  %v449 = vpop.f32.mrf.mxu0
  %v450 = vadd.f32 %v385, %v449
  %451 = vmatmul.f32.gmra.mxu0 %v44
  %v452 = vpop.f32.mrf.mxu0
  %v453 = vadd.f32 %v388, %v452
  %454 = vmatmul.f32.gmra.mxu0 %v49
  %v455 = vpop.f32.mrf.mxu0
  %v456 = vadd.f32 %v391, %v455
  %457 = vmatmul.f32.gmra.mxu0 %v54
  %v458 = vpop.f32.mrf.mxu0
  %v459 = vadd.f32 %v394, %v458
  %460 = vmatmul.f32.gmra.mxu0 %v59
  %v461 = vpop.f32.mrf.mxu0
  %v462 = vadd.f32 %v397, %v461
  %463 = vmatmul.f32.gmra.mxu0 %v64
  %v464 = vpop.f32.mrf.mxu0
  %v465 = vadd.f32 %v400, %v464
  %466 = vmatmul.f32.gmra.mxu0 %v69
  %v467 = vpop.f32.mrf.mxu0
  %v468 = vadd.f32 %v403, %v467
  %469 = vmatmul.f32.gmra.mxu0 %v74
  %v470 = vpop.f32.mrf.mxu0
  %v471 = vadd.f32 %v406, %v470
  %472 = vmatmul.f32.gmra.mxu0 %v79
  %v473 = vpop.f32.mrf.mxu0
  %v474 = vadd.f32 %v409, %v473
  %475 = vmatmul.f32.gmra.mxu0 %v84
  %v476 = vpop.f32.mrf.mxu0
  %v477 = vadd.f32 %v412, %v476
  %478 = vmatmul.f32.gmra.mxu0 %v89
  %v479 = vpop.f32.mrf.mxu0
  %v480 = vadd.f32 %v415, %v479
  %481 = vmatmul.f32.gmra.mxu0 %v94
  %v482 = vpop.f32.mrf.mxu0
  %v483 = vadd.f32 %v418, %v482
  %484 = vdwg.mxu0
  %485 = vmatpush.msra.mxu0 %v223
  %486 = vmatpush.msra.mxu0 %v221
  %487 = vmatpush.msra.mxu0 %v219
  %488 = vmatpush.msra.mxu0 %v217
  %489 = vmatpush.msra.mxu0 %v215
  %490 = vmatpush.msra.mxu0 %v213
  %491 = vmatpush.msra.mxu0 %v211
  %492 = vmatpush.msra.mxu0 %v209
  %493 = vmatpush.msra.mxu0 %v207
  %494 = vmatpush.msra.mxu0 %v205
  %495 = vmatpush.msra.mxu0 %v203
  %496 = vmatpush.msra.mxu0 %v201
  %497 = vmatpush.msra.mxu0 %v199
  %498 = vmatpush.msra.mxu0 %v197
  %499 = vmatpush.msra.mxu0 %v195
  %500 = vmatpush.msra.mxu0 %v193
  %501 = vmatmul.f32.gmra.mxu0 %v20
  %v502 = vpop.f32.mrf.mxu0
  %v503 = vadd.f32 %v438, %v502
  %504 = vmatmul.f32.gmra.mxu0 %v25
  %v505 = vpop.f32.mrf.mxu0
  %v506 = vadd.f32 %v441, %v505
  %507 = vmatmul.f32.gmra.mxu0 %v30
  %v508 = vpop.f32.mrf.mxu0
  %v509 = vadd.f32 %v444, %v508
  %510 = vmatmul.f32.gmra.mxu0 %v35
  %v511 = vpop.f32.mrf.mxu0
  %v512 = vadd.f32 %v447, %v511
  %513 = vmatmul.f32.gmra.mxu0 %v40
  %v514 = vpop.f32.mrf.mxu0
  %v515 = vadd.f32 %v450, %v514
  %516 = vmatmul.f32.gmra.mxu0 %v45
  %v517 = vpop.f32.mrf.mxu0
  %v518 = vadd.f32 %v453, %v517
  %519 = vmatmul.f32.gmra.mxu0 %v50
  %v520 = vpop.f32.mrf.mxu0
  %v521 = vadd.f32 %v456, %v520
  %522 = vmatmul.f32.gmra.mxu0 %v55
  %v523 = vpop.f32.mrf.mxu0
  %v524 = vadd.f32 %v459, %v523
  %525 = vmatmul.f32.gmra.mxu0 %v60
  %v526 = vpop.f32.mrf.mxu0
  %v527 = vadd.f32 %v462, %v526
  %528 = vmatmul.f32.gmra.mxu0 %v65
  %v529 = vpop.f32.mrf.mxu0
  %v530 = vadd.f32 %v465, %v529
  %531 = vmatmul.f32.gmra.mxu0 %v70
  %v532 = vpop.f32.mrf.mxu0
  %v533 = vadd.f32 %v468, %v532
  %534 = vmatmul.f32.gmra.mxu0 %v75
  %v535 = vpop.f32.mrf.mxu0
  %v536 = vadd.f32 %v471, %v535
  %537 = vmatmul.f32.gmra.mxu0 %v80
  %v538 = vpop.f32.mrf.mxu0
  %v539 = vadd.f32 %v474, %v538
  %540 = vmatmul.f32.gmra.mxu0 %v85
  %v541 = vpop.f32.mrf.mxu0
  %v542 = vadd.f32 %v477, %v541
  %543 = vmatmul.f32.gmra.mxu0 %v90
  %v544 = vpop.f32.mrf.mxu0
  %v545 = vadd.f32 %v480, %v544
  %546 = vmatmul.f32.gmra.mxu0 %v95
  %v547 = vpop.f32.mrf.mxu0
  %v548 = vadd.f32 %v483, %v547
  %549 = vdwg.mxu0
  %550 = vmatpush.msra.mxu0 0.0
  %551 = vmatpush.msra.mxu0 0.0
  %552 = vmatpush.msra.mxu0 0.0
  %553 = vmatpush.msra.mxu0 0.0
  %554 = vmatpush.msra.mxu0 0.0
  %555 = vmatpush.msra.mxu0 0.0
  %556 = vmatpush.msra.mxu0 0.0
  %557 = vmatpush.msra.mxu0 0.0
  %558 = vmatpush.msra.mxu0 %v239
  %559 = vmatpush.msra.mxu0 %v237
  %560 = vmatpush.msra.mxu0 %v235
  %561 = vmatpush.msra.mxu0 %v233
  %562 = vmatpush.msra.mxu0 %v231
  %563 = vmatpush.msra.mxu0 %v229
  %564 = vmatpush.msra.mxu0 %v227
  %565 = vmatpush.msra.mxu0 %v225
  %566 = vmatmul.f32.gmra.mxu0 %v243
  %v567 = vpop.f32.mrf.mxu0
  %v568 = vadd.f32 %v503, %v567
  %569 = vmatmul.f32.gmra.mxu0 %v246
  %v570 = vpop.f32.mrf.mxu0
  %v571 = vadd.f32 %v506, %v570
  %572 = vmatmul.f32.gmra.mxu0 %v249
  %v573 = vpop.f32.mrf.mxu0
  %v574 = vadd.f32 %v509, %v573
  %575 = vmatmul.f32.gmra.mxu0 %v252
  %v576 = vpop.f32.mrf.mxu0
  %v577 = vadd.f32 %v512, %v576
  %578 = vmatmul.f32.gmra.mxu0 %v255
  %v579 = vpop.f32.mrf.mxu0
  %v580 = vadd.f32 %v515, %v579
  %581 = vmatmul.f32.gmra.mxu0 %v258
  %v582 = vpop.f32.mrf.mxu0
  %v583 = vadd.f32 %v518, %v582
  %584 = vmatmul.f32.gmra.mxu0 %v261
  %v585 = vpop.f32.mrf.mxu0
  %v586 = vadd.f32 %v521, %v585
  %587 = vmatmul.f32.gmra.mxu0 %v264
  %v588 = vpop.f32.mrf.mxu0
  %v589 = vadd.f32 %v524, %v588
  %590 = vmatmul.f32.gmra.mxu0 %v267
  %v591 = vpop.f32.mrf.mxu0
  %v592 = vadd.f32 %v527, %v591
  %593 = vmatmul.f32.gmra.mxu0 %v270
  %v594 = vpop.f32.mrf.mxu0
  %v595 = vadd.f32 %v530, %v594
  %596 = vmatmul.f32.gmra.mxu0 %v273
  %v597 = vpop.f32.mrf.mxu0
  %v598 = vadd.f32 %v533, %v597
  %599 = vmatmul.f32.gmra.mxu0 %v276
  %v600 = vpop.f32.mrf.mxu0
  %v601 = vadd.f32 %v536, %v600
  %602 = vmatmul.f32.gmra.mxu0 %v279
  %v603 = vpop.f32.mrf.mxu0
  %v604 = vadd.f32 %v539, %v603
  %605 = vmatmul.f32.gmra.mxu0 %v282
  %v606 = vpop.f32.mrf.mxu0
  %v607 = vadd.f32 %v542, %v606
  %608 = vmatmul.f32.gmra.mxu0 %v285
  %v609 = vpop.f32.mrf.mxu0
  %v610 = vadd.f32 %v545, %v609
  %611 = vmatmul.f32.gmra.mxu0 %v288
  %v612 = vpop.f32.mrf.mxu0
  %v613 = vadd.f32 %v548, %v612
  %614 = vdwg.mxu0
  %615 = vmatpush.msra.mxu0 %v128
  %616 = vmatpush.msra.mxu0 %v126
  %617 = vmatpush.msra.mxu0 %v124
  %618 = vmatpush.msra.mxu0 %v122
  %619 = vmatpush.msra.mxu0 %v120
  %620 = vmatpush.msra.mxu0 %v118
  %621 = vmatpush.msra.mxu0 %v116
  %622 = vmatpush.msra.mxu0 %v114
  %623 = vmatpush.msra.mxu0 %v112
  %624 = vmatpush.msra.mxu0 %v110
  %625 = vmatpush.msra.mxu0 %v108
  %626 = vmatpush.msra.mxu0 %v106
  %627 = vmatpush.msra.mxu0 %v104
  %628 = vmatpush.msra.mxu0 %v102
  %629 = vmatpush.msra.mxu0 %v100
  %630 = vmatpush.msra.mxu0 %v98
  %631 = vmatmul.f32.gmra.mxu0 %v17
  %v632 = vpop.f32.mrf.mxu0
  %v633 = vadd.f32 0.0, %v632
  %634 = vmatmul.f32.gmra.mxu0 %v22
  %v635 = vpop.f32.mrf.mxu0
  %v636 = vadd.f32 0.0, %v635
  %637 = vmatmul.f32.gmra.mxu0 %v27
  %v638 = vpop.f32.mrf.mxu0
  %v639 = vadd.f32 0.0, %v638
  %640 = vmatmul.f32.gmra.mxu0 %v32
  %v641 = vpop.f32.mrf.mxu0
  %v642 = vadd.f32 0.0, %v641
  %643 = vmatmul.f32.gmra.mxu0 %v37
  %v644 = vpop.f32.mrf.mxu0
  %v645 = vadd.f32 0.0, %v644
  %646 = vmatmul.f32.gmra.mxu0 %v42
  %v647 = vpop.f32.mrf.mxu0
  %v648 = vadd.f32 0.0, %v647
  %649 = vmatmul.f32.gmra.mxu0 %v47
  %v650 = vpop.f32.mrf.mxu0
  %v651 = vadd.f32 0.0, %v650
  %652 = vmatmul.f32.gmra.mxu0 %v52
  %v653 = vpop.f32.mrf.mxu0
  %v654 = vadd.f32 0.0, %v653
  %655 = vmatmul.f32.gmra.mxu0 %v57
  %v656 = vpop.f32.mrf.mxu0
  %v657 = vadd.f32 0.0, %v656
  %658 = vmatmul.f32.gmra.mxu0 %v62
  %v659 = vpop.f32.mrf.mxu0
  %v660 = vadd.f32 0.0, %v659
  %661 = vmatmul.f32.gmra.mxu0 %v67
  %v662 = vpop.f32.mrf.mxu0
  %v663 = vadd.f32 0.0, %v662
  %664 = vmatmul.f32.gmra.mxu0 %v72
  %v665 = vpop.f32.mrf.mxu0
  %v666 = vadd.f32 0.0, %v665
  %667 = vmatmul.f32.gmra.mxu0 %v77
  %v668 = vpop.f32.mrf.mxu0
  %v669 = vadd.f32 0.0, %v668
  %670 = vmatmul.f32.gmra.mxu0 %v82
  %v671 = vpop.f32.mrf.mxu0
  %v672 = vadd.f32 0.0, %v671
  %673 = vmatmul.f32.gmra.mxu0 %v87
  %v674 = vpop.f32.mrf.mxu0
  %v675 = vadd.f32 0.0, %v674
  %676 = vmatmul.f32.gmra.mxu0 %v92
  %v677 = vpop.f32.mrf.mxu0
  %v678 = vadd.f32 0.0, %v677
  %679 = vdwg.mxu0
  %680 = vmatpush.msra.mxu0 %v160
  %681 = vmatpush.msra.mxu0 %v158
  %682 = vmatpush.msra.mxu0 %v156
  %683 = vmatpush.msra.mxu0 %v154
  %684 = vmatpush.msra.mxu0 %v152
  %685 = vmatpush.msra.mxu0 %v150
  %686 = vmatpush.msra.mxu0 %v148
  %687 = vmatpush.msra.mxu0 %v146
  %688 = vmatpush.msra.mxu0 %v144
  %689 = vmatpush.msra.mxu0 %v142
  %690 = vmatpush.msra.mxu0 %v140
  %691 = vmatpush.msra.mxu0 %v138
  %692 = vmatpush.msra.mxu0 %v136
  %693 = vmatpush.msra.mxu0 %v134
  %694 = vmatpush.msra.mxu0 %v132
  %695 = vmatpush.msra.mxu0 %v130
  %696 = vmatmul.f32.gmra.mxu0 %v18
  %v697 = vpop.f32.mrf.mxu0
  %v698 = vadd.f32 %v633, %v697
  %699 = vmatmul.f32.gmra.mxu0 %v23
  %v700 = vpop.f32.mrf.mxu0
  %v701 = vadd.f32 %v636, %v700
  %702 = vmatmul.f32.gmra.mxu0 %v28
  %v703 = vpop.f32.mrf.mxu0
  %v704 = vadd.f32 %v639, %v703
  %705 = vmatmul.f32.gmra.mxu0 %v33
  %v706 = vpop.f32.mrf.mxu0
  %v707 = vadd.f32 %v642, %v706
  %708 = vmatmul.f32.gmra.mxu0 %v38
  %v709 = vpop.f32.mrf.mxu0
  %v710 = vadd.f32 %v645, %v709
  %711 = vmatmul.f32.gmra.mxu0 %v43
  %v712 = vpop.f32.mrf.mxu0
  %v713 = vadd.f32 %v648, %v712
  %714 = vmatmul.f32.gmra.mxu0 %v48
  %v715 = vpop.f32.mrf.mxu0
  %v716 = vadd.f32 %v651, %v715
  %717 = vmatmul.f32.gmra.mxu0 %v53
  %v718 = vpop.f32.mrf.mxu0
  %v719 = vadd.f32 %v654, %v718
  %720 = vmatmul.f32.gmra.mxu0 %v58
  %v721 = vpop.f32.mrf.mxu0
  %v722 = vadd.f32 %v657, %v721
  %723 = vmatmul.f32.gmra.mxu0 %v63
  %v724 = vpop.f32.mrf.mxu0
  %v725 = vadd.f32 %v660, %v724
  %726 = vmatmul.f32.gmra.mxu0 %v68
  %v727 = vpop.f32.mrf.mxu0
  %v728 = vadd.f32 %v663, %v727
  %729 = vmatmul.f32.gmra.mxu0 %v73
  %v730 = vpop.f32.mrf.mxu0
  %v731 = vadd.f32 %v666, %v730
  %732 = vmatmul.f32.gmra.mxu0 %v78
  %v733 = vpop.f32.mrf.mxu0
  %v734 = vadd.f32 %v669, %v733
  %735 = vmatmul.f32.gmra.mxu0 %v83
  %v736 = vpop.f32.mrf.mxu0
  %v737 = vadd.f32 %v672, %v736
  %738 = vmatmul.f32.gmra.mxu0 %v88
  %v739 = vpop.f32.mrf.mxu0
  %v740 = vadd.f32 %v675, %v739
  %741 = vmatmul.f32.gmra.mxu0 %v93
  %v742 = vpop.f32.mrf.mxu0
  %v743 = vadd.f32 %v678, %v742
  %744 = vdwg.mxu0
  %745 = vmatpush.msra.mxu0 %v192
  %746 = vmatpush.msra.mxu0 %v190
  %747 = vmatpush.msra.mxu0 %v188
  %748 = vmatpush.msra.mxu0 %v186
  %749 = vmatpush.msra.mxu0 %v184
  %750 = vmatpush.msra.mxu0 %v182
  %751 = vmatpush.msra.mxu0 %v180
  %752 = vmatpush.msra.mxu0 %v178
  %753 = vmatpush.msra.mxu0 %v176
  %754 = vmatpush.msra.mxu0 %v174
  %755 = vmatpush.msra.mxu0 %v172
  %756 = vmatpush.msra.mxu0 %v170
  %757 = vmatpush.msra.mxu0 %v168
  %758 = vmatpush.msra.mxu0 %v166
  %759 = vmatpush.msra.mxu0 %v164
  %760 = vmatpush.msra.mxu0 %v162
  %761 = vmatmul.f32.gmra.mxu0 %v19
  %v762 = vpop.f32.mrf.mxu0
  %v763 = vadd.f32 %v698, %v762
  %764 = vmatmul.f32.gmra.mxu0 %v24
  %v765 = vpop.f32.mrf.mxu0
  %v766 = vadd.f32 %v701, %v765
  %767 = vmatmul.f32.gmra.mxu0 %v29
  %v768 = vpop.f32.mrf.mxu0
  %v769 = vadd.f32 %v704, %v768
  %770 = vmatmul.f32.gmra.mxu0 %v34
  %v771 = vpop.f32.mrf.mxu0
  %v772 = vadd.f32 %v707, %v771
  %773 = vmatmul.f32.gmra.mxu0 %v39
  %v774 = vpop.f32.mrf.mxu0
  %v775 = vadd.f32 %v710, %v774
  %776 = vmatmul.f32.gmra.mxu0 %v44
  %v777 = vpop.f32.mrf.mxu0
  %v778 = vadd.f32 %v713, %v777
  %779 = vmatmul.f32.gmra.mxu0 %v49
  %v780 = vpop.f32.mrf.mxu0
  %v781 = vadd.f32 %v716, %v780
  %782 = vmatmul.f32.gmra.mxu0 %v54
  %v783 = vpop.f32.mrf.mxu0
  %v784 = vadd.f32 %v719, %v783
  %785 = vmatmul.f32.gmra.mxu0 %v59
  %v786 = vpop.f32.mrf.mxu0
  %v787 = vadd.f32 %v722, %v786
  %788 = vmatmul.f32.gmra.mxu0 %v64
  %v789 = vpop.f32.mrf.mxu0
  %v790 = vadd.f32 %v725, %v789
  %791 = vmatmul.f32.gmra.mxu0 %v69
  %v792 = vpop.f32.mrf.mxu0
  %v793 = vadd.f32 %v728, %v792
  %794 = vmatmul.f32.gmra.mxu0 %v74
  %v795 = vpop.f32.mrf.mxu0
  %v796 = vadd.f32 %v731, %v795
  %797 = vmatmul.f32.gmra.mxu0 %v79
  %v798 = vpop.f32.mrf.mxu0
  %v799 = vadd.f32 %v734, %v798
  %800 = vmatmul.f32.gmra.mxu0 %v84
  %v801 = vpop.f32.mrf.mxu0
  %v802 = vadd.f32 %v737, %v801
  %803 = vmatmul.f32.gmra.mxu0 %v89
  %v804 = vpop.f32.mrf.mxu0
  %v805 = vadd.f32 %v740, %v804
  %806 = vmatmul.f32.gmra.mxu0 %v94
  %v807 = vpop.f32.mrf.mxu0
  %v808 = vadd.f32 %v743, %v807
  %809 = vdwg.mxu0
  %810 = vmatpush.msra.mxu0 %v224
  %811 = vmatpush.msra.mxu0 %v222
  %812 = vmatpush.msra.mxu0 %v220
  %813 = vmatpush.msra.mxu0 %v218
  %814 = vmatpush.msra.mxu0 %v216
  %815 = vmatpush.msra.mxu0 %v214
  %816 = vmatpush.msra.mxu0 %v212
  %817 = vmatpush.msra.mxu0 %v210
  %818 = vmatpush.msra.mxu0 %v208
  %819 = vmatpush.msra.mxu0 %v206
  %820 = vmatpush.msra.mxu0 %v204
  %821 = vmatpush.msra.mxu0 %v202
  %822 = vmatpush.msra.mxu0 %v200
  %823 = vmatpush.msra.mxu0 %v198
  %824 = vmatpush.msra.mxu0 %v196
  %825 = vmatpush.msra.mxu0 %v194
  %826 = vmatmul.f32.gmra.mxu0 %v20
  %v827 = vpop.f32.mrf.mxu0
  %v828 = vadd.f32 %v763, %v827
  %829 = vmatmul.f32.gmra.mxu0 %v25
  %v830 = vpop.f32.mrf.mxu0
  %v831 = vadd.f32 %v766, %v830
  %832 = vmatmul.f32.gmra.mxu0 %v30
  %v833 = vpop.f32.mrf.mxu0
  %v834 = vadd.f32 %v769, %v833
  %835 = vmatmul.f32.gmra.mxu0 %v35
  %v836 = vpop.f32.mrf.mxu0
  %v837 = vadd.f32 %v772, %v836
  %838 = vmatmul.f32.gmra.mxu0 %v40
  %v839 = vpop.f32.mrf.mxu0
  %v840 = vadd.f32 %v775, %v839
  %841 = vmatmul.f32.gmra.mxu0 %v45
  %v842 = vpop.f32.mrf.mxu0
  %v843 = vadd.f32 %v778, %v842
  %844 = vmatmul.f32.gmra.mxu0 %v50
  %v845 = vpop.f32.mrf.mxu0
  %v846 = vadd.f32 %v781, %v845
  %847 = vmatmul.f32.gmra.mxu0 %v55
  %v848 = vpop.f32.mrf.mxu0
  %v849 = vadd.f32 %v784, %v848
  %850 = vmatmul.f32.gmra.mxu0 %v60
  %v851 = vpop.f32.mrf.mxu0
  %v852 = vadd.f32 %v787, %v851
  %853 = vmatmul.f32.gmra.mxu0 %v65
  %v854 = vpop.f32.mrf.mxu0
  %v855 = vadd.f32 %v790, %v854
  %856 = vmatmul.f32.gmra.mxu0 %v70
  %v857 = vpop.f32.mrf.mxu0
  %v858 = vadd.f32 %v793, %v857
  %859 = vmatmul.f32.gmra.mxu0 %v75
  %v860 = vpop.f32.mrf.mxu0
  %v861 = vadd.f32 %v796, %v860
  %862 = vmatmul.f32.gmra.mxu0 %v80
  %v863 = vpop.f32.mrf.mxu0
  %v864 = vadd.f32 %v799, %v863
  %865 = vmatmul.f32.gmra.mxu0 %v85
  %v866 = vpop.f32.mrf.mxu0
  %v867 = vadd.f32 %v802, %v866
  %868 = vmatmul.f32.gmra.mxu0 %v90
  %v869 = vpop.f32.mrf.mxu0
  %v870 = vadd.f32 %v805, %v869
  %871 = vmatmul.f32.gmra.mxu0 %v95
  %v872 = vpop.f32.mrf.mxu0
  %v873 = vadd.f32 %v808, %v872
  %874 = vdwg.mxu0
  %875 = vmatpush.msra.mxu0 0.0
  %876 = vmatpush.msra.mxu0 0.0
  %877 = vmatpush.msra.mxu0 0.0
  %878 = vmatpush.msra.mxu0 0.0
  %879 = vmatpush.msra.mxu0 0.0
  %880 = vmatpush.msra.mxu0 0.0
  %881 = vmatpush.msra.mxu0 0.0
  %882 = vmatpush.msra.mxu0 0.0
  %883 = vmatpush.msra.mxu0 %v240
  %884 = vmatpush.msra.mxu0 %v238
  %885 = vmatpush.msra.mxu0 %v236
  %886 = vmatpush.msra.mxu0 %v234
  %887 = vmatpush.msra.mxu0 %v232
  %888 = vmatpush.msra.mxu0 %v230
  %889 = vmatpush.msra.mxu0 %v228
  %890 = vmatpush.msra.mxu0 %v226
  %891 = vmatmul.f32.gmra.mxu0 %v243
  %v892 = vpop.f32.mrf.mxu0
  %v893 = vadd.f32 %v828, %v892
  %894 = vmatmul.f32.gmra.mxu0 %v246
  %v895 = vpop.f32.mrf.mxu0
  %v896 = vadd.f32 %v831, %v895
  %897 = vmatmul.f32.gmra.mxu0 %v249
  %v898 = vpop.f32.mrf.mxu0
  %v899 = vadd.f32 %v834, %v898
  %900 = vmatmul.f32.gmra.mxu0 %v252
  %v901 = vpop.f32.mrf.mxu0
  %v902 = vadd.f32 %v837, %v901
  %903 = vmatmul.f32.gmra.mxu0 %v255
  %v904 = vpop.f32.mrf.mxu0
  %v905 = vadd.f32 %v840, %v904
  %906 = vmatmul.f32.gmra.mxu0 %v258
  %v907 = vpop.f32.mrf.mxu0
  %v908 = vadd.f32 %v843, %v907
  %909 = vmatmul.f32.gmra.mxu0 %v261
  %v910 = vpop.f32.mrf.mxu0
  %v911 = vadd.f32 %v846, %v910
  %912 = vmatmul.f32.gmra.mxu0 %v264
  %v913 = vpop.f32.mrf.mxu0
  %v914 = vadd.f32 %v849, %v913
  %915 = vmatmul.f32.gmra.mxu0 %v267
  %v916 = vpop.f32.mrf.mxu0
  %v917 = vadd.f32 %v852, %v916
  %918 = vmatmul.f32.gmra.mxu0 %v270
  %v919 = vpop.f32.mrf.mxu0
  %v920 = vadd.f32 %v855, %v919
  %921 = vmatmul.f32.gmra.mxu0 %v273
  %v922 = vpop.f32.mrf.mxu0
  %v923 = vadd.f32 %v858, %v922
  %924 = vmatmul.f32.gmra.mxu0 %v276
  %v925 = vpop.f32.mrf.mxu0
  %v926 = vadd.f32 %v861, %v925
  %927 = vmatmul.f32.gmra.mxu0 %v279
  %v928 = vpop.f32.mrf.mxu0
  %v929 = vadd.f32 %v864, %v928
  %930 = vmatmul.f32.gmra.mxu0 %v282
  %v931 = vpop.f32.mrf.mxu0
  %v932 = vadd.f32 %v867, %v931
  %933 = vmatmul.f32.gmra.mxu0 %v285
  %v934 = vpop.f32.mrf.mxu0
  %v935 = vadd.f32 %v870, %v934
  %936 = vmatmul.f32.gmra.mxu0 %v288
  %v937 = vpop.f32.mrf.mxu0
  %v938 = vadd.f32 %v873, %v937
  %939 = vdwg.mxu0
  %vm940 = vcmask 556032
  %v941 = vsel %vm940, %v893, 0.0
  %v942 = vadd.f32 %v568, %v941
  %943 = vadd.xlane.f32.xlu0 %v942
  %v944 = vpop.xlane.xlu0 %943
  %v945 = vsel %vm940, %v896, 0.0
  %v946 = vadd.f32 %v571, %v945
  %947 = vadd.xlane.f32.xlu0 %v946
  %v948 = vpop.xlane.xlu0 %947
  %v949 = vsel %vm940, %v899, 0.0
  %v950 = vadd.f32 %v574, %v949
  %951 = vadd.xlane.f32.xlu0 %v950
  %v952 = vpop.xlane.xlu0 %951
  %v953 = vsel %vm940, %v902, 0.0
  %v954 = vadd.f32 %v577, %v953
  %955 = vadd.xlane.f32.xlu0 %v954
  %v956 = vpop.xlane.xlu0 %955
  %v957 = vsel %vm940, %v905, 0.0
  %v958 = vadd.f32 %v580, %v957
  %959 = vadd.xlane.f32.xlu0 %v958
  %v960 = vpop.xlane.xlu0 %959
  %v961 = vsel %vm940, %v908, 0.0
  %v962 = vadd.f32 %v583, %v961
  %963 = vadd.xlane.f32.xlu0 %v962
  %v964 = vpop.xlane.xlu0 %963
  %v965 = vsel %vm940, %v911, 0.0
  %v966 = vadd.f32 %v586, %v965
  %967 = vadd.xlane.f32.xlu0 %v966
  %v968 = vpop.xlane.xlu0 %967
  %v969 = vsel %vm940, %v914, 0.0
  %v970 = vadd.f32 %v589, %v969
  %971 = vadd.xlane.f32.xlu0 %v970
  %v972 = vpop.xlane.xlu0 %971
  %v973 = vsel %vm940, %v917, 0.0
  %v974 = vadd.f32 %v592, %v973
  %975 = vadd.xlane.f32.xlu0 %v974
  %v976 = vpop.xlane.xlu0 %975
  %v977 = vsel %vm940, %v920, 0.0
  %v978 = vadd.f32 %v595, %v977
  %979 = vadd.xlane.f32.xlu0 %v978
  %v980 = vpop.xlane.xlu0 %979
  %v981 = vsel %vm940, %v923, 0.0
  %v982 = vadd.f32 %v598, %v981
  %983 = vadd.xlane.f32.xlu0 %v982
  %v984 = vpop.xlane.xlu0 %983
  %v985 = vsel %vm940, %v926, 0.0
  %v986 = vadd.f32 %v601, %v985
  %987 = vadd.xlane.f32.xlu0 %v986
  %v988 = vpop.xlane.xlu0 %987
  %v989 = vsel %vm940, %v929, 0.0
  %v990 = vadd.f32 %v604, %v989
  %991 = vadd.xlane.f32.xlu0 %v990
  %v992 = vpop.xlane.xlu0 %991
  %v993 = vsel %vm940, %v932, 0.0
  %v994 = vadd.f32 %v607, %v993
  %995 = vadd.xlane.f32.xlu0 %v994
  %v996 = vpop.xlane.xlu0 %995
  %v997 = vsel %vm940, %v935, 0.0
  %v998 = vadd.f32 %v610, %v997
  %999 = vadd.xlane.f32.xlu0 %v998
  %v1000 = vpop.xlane.xlu0 %999
  %v1001 = vsel %vm940, %v938, 0.0
  %v1002 = vadd.f32 %v613, %v1001
  %1003 = vadd.xlane.f32.xlu0 %v1002
  %v1004 = vpop.xlane.xlu0 %1003
  %v1005 = vmul.f32 %v944, 0.0051020407
  %v1006 = vmul.f32 %v948, 0.0051020407
  %v1007 = vmul.f32 %v952, 0.0051020407
  %v1008 = vmul.f32 %v956, 0.0051020407
  %v1009 = vmul.f32 %v960, 0.0051020407
  %v1010 = vmul.f32 %v964, 0.0051020407
  %v1011 = vmul.f32 %v968, 0.0051020407
  %v1012 = vmul.f32 %v972, 0.0051020407
  %v1013 = vmul.f32 %v976, 0.0051020407
  %v1014 = vmul.f32 %v980, 0.0051020407
  %v1015 = vmul.f32 %v984, 0.0051020407
  %v1016 = vmul.f32 %v988, 0.0051020407
  %v1017 = vmul.f32 %v992, 0.0051020407
  %v1018 = vmul.f32 %v996, 0.0051020407
  %v1019 = vmul.f32 %v1000, 0.0051020407
  %v1020 = vmul.f32 %v1004, 0.0051020407
  %v1021 = vsub.f32 %v568, %v1005
  %v1022 = vsub.f32 %v893, %v1005
  %v1023 = vsub.f32 %v571, %v1006
  %v1024 = vsub.f32 %v896, %v1006
  %v1025 = vsub.f32 %v574, %v1007
  %v1026 = vsub.f32 %v899, %v1007
  %v1027 = vsub.f32 %v577, %v1008
  %v1028 = vsub.f32 %v902, %v1008
  %v1029 = vsub.f32 %v580, %v1009
  %v1030 = vsub.f32 %v905, %v1009
  %v1031 = vsub.f32 %v583, %v1010
  %v1032 = vsub.f32 %v908, %v1010
  %v1033 = vsub.f32 %v586, %v1011
  %v1034 = vsub.f32 %v911, %v1011
  %v1035 = vsub.f32 %v589, %v1012
  %v1036 = vsub.f32 %v914, %v1012
  %v1037 = vsub.f32 %v592, %v1013
  %v1038 = vsub.f32 %v917, %v1013
  %v1039 = vsub.f32 %v595, %v1014
  %v1040 = vsub.f32 %v920, %v1014
  %v1041 = vsub.f32 %v598, %v1015
  %v1042 = vsub.f32 %v923, %v1015
  %v1043 = vsub.f32 %v601, %v1016
  %v1044 = vsub.f32 %v926, %v1016
  %v1045 = vsub.f32 %v604, %v1017
  %v1046 = vsub.f32 %v929, %v1017
  %v1047 = vsub.f32 %v607, %v1018
  %v1048 = vsub.f32 %v932, %v1018
  %v1049 = vsub.f32 %v610, %v1019
  %v1050 = vsub.f32 %v935, %v1019
  %v1051 = vsub.f32 %v613, %v1020
  %v1052 = vsub.f32 %v938, %v1020
  %v1053 = vmul.f32 %v1021, %v1021
  %v1054 = vmul.f32 %v1022, %v1022
  %v1055 = vmul.f32 %v1023, %v1023
  %v1056 = vmul.f32 %v1024, %v1024
  %v1057 = vmul.f32 %v1025, %v1025
  %v1058 = vmul.f32 %v1026, %v1026
  %v1059 = vmul.f32 %v1027, %v1027
  %v1060 = vmul.f32 %v1028, %v1028
  %v1061 = vmul.f32 %v1029, %v1029
  %v1062 = vmul.f32 %v1030, %v1030
  %v1063 = vmul.f32 %v1031, %v1031
  %v1064 = vmul.f32 %v1032, %v1032
  %v1065 = vmul.f32 %v1033, %v1033
  %v1066 = vmul.f32 %v1034, %v1034
  %v1067 = vmul.f32 %v1035, %v1035
  %v1068 = vmul.f32 %v1036, %v1036
  %v1069 = vmul.f32 %v1037, %v1037
  %v1070 = vmul.f32 %v1038, %v1038
  %v1071 = vmul.f32 %v1039, %v1039
  %v1072 = vmul.f32 %v1040, %v1040
  %v1073 = vmul.f32 %v1041, %v1041
  %v1074 = vmul.f32 %v1042, %v1042
  %v1075 = vmul.f32 %v1043, %v1043
  %v1076 = vmul.f32 %v1044, %v1044
  %v1077 = vmul.f32 %v1045, %v1045
  %v1078 = vmul.f32 %v1046, %v1046
  %v1079 = vmul.f32 %v1047, %v1047
  %v1080 = vmul.f32 %v1048, %v1048
  %v1081 = vmul.f32 %v1049, %v1049
  %v1082 = vmul.f32 %v1050, %v1050
  %v1083 = vmul.f32 %v1051, %v1051
  %v1084 = vmul.f32 %v1052, %v1052
  %v1085 = vsel %vm940, %v1054, 0.0
  %v1086 = vadd.f32 %v1053, %v1085
  %1087 = vadd.xlane.f32.xlu0 %v1086
  %v1088 = vpop.xlane.xlu0 %1087
  %v1089 = vsel %vm940, %v1056, 0.0
  %v1090 = vadd.f32 %v1055, %v1089
  %1091 = vadd.xlane.f32.xlu0 %v1090
  %v1092 = vpop.xlane.xlu0 %1091
  %v1093 = vsel %vm940, %v1058, 0.0
  %v1094 = vadd.f32 %v1057, %v1093
  %1095 = vadd.xlane.f32.xlu0 %v1094
  %v1096 = vpop.xlane.xlu0 %1095
  %v1097 = vsel %vm940, %v1060, 0.0
  %v1098 = vadd.f32 %v1059, %v1097
  %1099 = vadd.xlane.f32.xlu0 %v1098
  %v1100 = vpop.xlane.xlu0 %1099
  %v1101 = vsel %vm940, %v1062, 0.0
  %v1102 = vadd.f32 %v1061, %v1101
  %1103 = vadd.xlane.f32.xlu0 %v1102
  %v1104 = vpop.xlane.xlu0 %1103
  %v1105 = vsel %vm940, %v1064, 0.0
  %v1106 = vadd.f32 %v1063, %v1105
  %1107 = vadd.xlane.f32.xlu0 %v1106
  %v1108 = vpop.xlane.xlu0 %1107
  %v1109 = vsel %vm940, %v1066, 0.0
  %v1110 = vadd.f32 %v1065, %v1109
  %1111 = vadd.xlane.f32.xlu0 %v1110
  %v1112 = vpop.xlane.xlu0 %1111
  %v1113 = vsel %vm940, %v1068, 0.0
  %v1114 = vadd.f32 %v1067, %v1113
  %1115 = vadd.xlane.f32.xlu0 %v1114
  %v1116 = vpop.xlane.xlu0 %1115
  %v1117 = vsel %vm940, %v1070, 0.0
  %v1118 = vadd.f32 %v1069, %v1117
  %1119 = vadd.xlane.f32.xlu0 %v1118
  %v1120 = vpop.xlane.xlu0 %1119
  %v1121 = vsel %vm940, %v1072, 0.0
  %v1122 = vadd.f32 %v1071, %v1121
  %1123 = vadd.xlane.f32.xlu0 %v1122
  %v1124 = vpop.xlane.xlu0 %1123
  %v1125 = vsel %vm940, %v1074, 0.0
  %v1126 = vadd.f32 %v1073, %v1125
  %1127 = vadd.xlane.f32.xlu0 %v1126
  %v1128 = vpop.xlane.xlu0 %1127
  %v1129 = vsel %vm940, %v1076, 0.0
  %v1130 = vadd.f32 %v1075, %v1129
  %1131 = vadd.xlane.f32.xlu0 %v1130
  %v1132 = vpop.xlane.xlu0 %1131
  %v1133 = vsel %vm940, %v1078, 0.0
  %v1134 = vadd.f32 %v1077, %v1133
  %1135 = vadd.xlane.f32.xlu0 %v1134
  %v1136 = vpop.xlane.xlu0 %1135
  %v1137 = vsel %vm940, %v1080, 0.0
  %v1138 = vadd.f32 %v1079, %v1137
  %1139 = vadd.xlane.f32.xlu0 %v1138
  %v1140 = vpop.xlane.xlu0 %1139
  %v1141 = vsel %vm940, %v1082, 0.0
  %v1142 = vadd.f32 %v1081, %v1141
  %1143 = vadd.xlane.f32.xlu0 %v1142
  %v1144 = vpop.xlane.xlu0 %1143
  %v1145 = vsel %vm940, %v1084, 0.0
  %v1146 = vadd.f32 %v1083, %v1145
  %1147 = vadd.xlane.f32.xlu0 %v1146
  %v1148 = vpop.xlane.xlu0 %1147
  %v1149 = vmul.f32 %v1088, 0.0051020407
  %v1150 = vmul.f32 %v1092, 0.0051020407
  %v1151 = vmul.f32 %v1096, 0.0051020407
  %v1152 = vmul.f32 %v1100, 0.0051020407
  %v1153 = vmul.f32 %v1104, 0.0051020407
  %v1154 = vmul.f32 %v1108, 0.0051020407
  %v1155 = vmul.f32 %v1112, 0.0051020407
  %v1156 = vmul.f32 %v1116, 0.0051020407
  %v1157 = vmul.f32 %v1120, 0.0051020407
  %v1158 = vmul.f32 %v1124, 0.0051020407
  %v1159 = vmul.f32 %v1128, 0.0051020407
  %v1160 = vmul.f32 %v1132, 0.0051020407
  %v1161 = vmul.f32 %v1136, 0.0051020407
  %v1162 = vmul.f32 %v1140, 0.0051020407
  %v1163 = vmul.f32 %v1144, 0.0051020407
  %v1164 = vmul.f32 %v1148, 0.0051020407
  %v1165 = vld [vmem:[%s2] sm:$0xff]
  %v1166 = vld [vmem:[%s2 + $0x8] sm:$0xff]
  %v1167 = vld [vmem:[%s2 + $0x10] sm:$0xff]
  %v1168 = vld [vmem:[%s2 + $0x18] sm:$0xff]
  %v1169 = vld [vmem:[%s2 + $0x20] sm:$0xff]
  %v1170 = vld [vmem:[%s2 + $0x28] sm:$0xff]
  %v1171 = vld [vmem:[%s2 + $0x30] sm:$0xff]
  %v1172 = vld [vmem:[%s2 + $0x38] sm:$0xff]
  %v1173 = vld [vmem:[%s2 + $0x40] sm:$0xff]
  %v1174 = vld [vmem:[%s2 + $0x48] sm:$0xff]
  %v1175 = vld [vmem:[%s2 + $0x50] sm:$0xff]
  %v1176 = vld [vmem:[%s2 + $0x58] sm:$0xff]
  %v1177 = vld [vmem:[%s2 + $0x60] sm:$0xff]
  %v1178 = vld [vmem:[%s2 + $0x68] sm:$0xff]
  %v1179 = vld [vmem:[%s2 + $0x70] sm:$0xff]
  %v1180 = vld [vmem:[%s2 + $0x78] sm:$0xff]
  %v1181 = vadd.f32 %v1149, 1e-05
  %v1182 = vadd.f32 %v1150, 1e-05
  %v1183 = vadd.f32 %v1151, 1e-05
  %v1184 = vadd.f32 %v1152, 1e-05
  %v1185 = vadd.f32 %v1153, 1e-05
  %v1186 = vadd.f32 %v1154, 1e-05
  %v1187 = vadd.f32 %v1155, 1e-05
  %v1188 = vadd.f32 %v1156, 1e-05
  %v1189 = vadd.f32 %v1157, 1e-05
  %v1190 = vadd.f32 %v1158, 1e-05
  %v1191 = vadd.f32 %v1159, 1e-05
  %v1192 = vadd.f32 %v1160, 1e-05
  %v1193 = vadd.f32 %v1161, 1e-05
  %v1194 = vadd.f32 %v1162, 1e-05
  %v1195 = vadd.f32 %v1163, 1e-05
  %v1196 = vadd.f32 %v1164, 1e-05
  %v1197 = vrsqrt.pop %v1181
  %v1198 = vmul.f32 %v1197, %v1181
  %v1199 = vmul.f32 %v1198, %v1197
  %v1200 = vmul.f32 0.5, %v1199
  %v1201 = vsub.f32 1.5, %v1200
  %v1202 = vmul.f32 %v1197, %v1201
  %vm1203 = vweird.f32 %v1181
  %vm1204 = vweird.f32 %v1197
  %vm1205 = vmor %vm1203, %vm1204
  %v1206 = vsel %vm1205, %v1197, %v1202
  %v1207 = vrsqrt.pop %v1182
  %v1208 = vmul.f32 %v1207, %v1182
  %v1209 = vmul.f32 %v1208, %v1207
  %v1210 = vmul.f32 0.5, %v1209
  %v1211 = vsub.f32 1.5, %v1210
  %v1212 = vmul.f32 %v1207, %v1211
  %vm1213 = vweird.f32 %v1182
  %vm1214 = vweird.f32 %v1207
  %vm1215 = vmor %vm1213, %vm1214
  %v1216 = vsel %vm1215, %v1207, %v1212
  %v1217 = vrsqrt.pop %v1183
  %v1218 = vmul.f32 %v1217, %v1183
  %v1219 = vmul.f32 %v1218, %v1217
  %v1220 = vmul.f32 0.5, %v1219
  %v1221 = vsub.f32 1.5, %v1220
  %v1222 = vmul.f32 %v1217, %v1221
  %vm1223 = vweird.f32 %v1183
  %vm1224 = vweird.f32 %v1217
  %vm1225 = vmor %vm1223, %vm1224
  %v1226 = vsel %vm1225, %v1217, %v1222
  %v1227 = vrsqrt.pop %v1184
  %v1228 = vmul.f32 %v1227, %v1184
  %v1229 = vmul.f32 %v1228, %v1227
  %v1230 = vmul.f32 0.5, %v1229
  %v1231 = vsub.f32 1.5, %v1230
  %v1232 = vmul.f32 %v1227, %v1231
  %vm1233 = vweird.f32 %v1184
  %vm1234 = vweird.f32 %v1227
  %vm1235 = vmor %vm1233, %vm1234
  %v1236 = vsel %vm1235, %v1227, %v1232
  %v1237 = vrsqrt.pop %v1185
  %v1238 = vmul.f32 %v1237, %v1185
  %v1239 = vmul.f32 %v1238, %v1237
  %v1240 = vmul.f32 0.5, %v1239
  %v1241 = vsub.f32 1.5, %v1240
  %v1242 = vmul.f32 %v1237, %v1241
  %vm1243 = vweird.f32 %v1185
  %vm1244 = vweird.f32 %v1237
  %vm1245 = vmor %vm1243, %vm1244
  %v1246 = vsel %vm1245, %v1237, %v1242
  %v1247 = vrsqrt.pop %v1186
  %v1248 = vmul.f32 %v1247, %v1186
  %v1249 = vmul.f32 %v1248, %v1247
  %v1250 = vmul.f32 0.5, %v1249
  %v1251 = vsub.f32 1.5, %v1250
  %v1252 = vmul.f32 %v1247, %v1251
  %vm1253 = vweird.f32 %v1186
  %vm1254 = vweird.f32 %v1247
  %vm1255 = vmor %vm1253, %vm1254
  %v1256 = vsel %vm1255, %v1247, %v1252
  %v1257 = vrsqrt.pop %v1187
  %v1258 = vmul.f32 %v1257, %v1187
  %v1259 = vmul.f32 %v1258, %v1257
  %v1260 = vmul.f32 0.5, %v1259
  %v1261 = vsub.f32 1.5, %v1260
  %v1262 = vmul.f32 %v1257, %v1261
  %vm1263 = vweird.f32 %v1187
  %vm1264 = vweird.f32 %v1257
  %vm1265 = vmor %vm1263, %vm1264
  %v1266 = vsel %vm1265, %v1257, %v1262
  %v1267 = vrsqrt.pop %v1188
  %v1268 = vmul.f32 %v1267, %v1188
  %v1269 = vmul.f32 %v1268, %v1267
  %v1270 = vmul.f32 0.5, %v1269
  %v1271 = vsub.f32 1.5, %v1270
  %v1272 = vmul.f32 %v1267, %v1271
  %vm1273 = vweird.f32 %v1188
  %vm1274 = vweird.f32 %v1267
  %vm1275 = vmor %vm1273, %vm1274
  %v1276 = vsel %vm1275, %v1267, %v1272
  %v1277 = vrsqrt.pop %v1189
  %v1278 = vmul.f32 %v1277, %v1189
  %v1279 = vmul.f32 %v1278, %v1277
  %v1280 = vmul.f32 0.5, %v1279
  %v1281 = vsub.f32 1.5, %v1280
  %v1282 = vmul.f32 %v1277, %v1281
  %vm1283 = vweird.f32 %v1189
  %vm1284 = vweird.f32 %v1277
  %vm1285 = vmor %vm1283, %vm1284
  %v1286 = vsel %vm1285, %v1277, %v1282
  %v1287 = vrsqrt.pop %v1190
  %v1288 = vmul.f32 %v1287, %v1190
  %v1289 = vmul.f32 %v1288, %v1287
  %v1290 = vmul.f32 0.5, %v1289
  %v1291 = vsub.f32 1.5, %v1290
  %v1292 = vmul.f32 %v1287, %v1291
  %vm1293 = vweird.f32 %v1190
  %vm1294 = vweird.f32 %v1287
  %vm1295 = vmor %vm1293, %vm1294
  %v1296 = vsel %vm1295, %v1287, %v1292
  %v1297 = vrsqrt.pop %v1191
  %v1298 = vmul.f32 %v1297, %v1191
  %v1299 = vmul.f32 %v1298, %v1297
  %v1300 = vmul.f32 0.5, %v1299
  %v1301 = vsub.f32 1.5, %v1300
  %v1302 = vmul.f32 %v1297, %v1301
  %vm1303 = vweird.f32 %v1191
  %vm1304 = vweird.f32 %v1297
  %vm1305 = vmor %vm1303, %vm1304
  %v1306 = vsel %vm1305, %v1297, %v1302
  %v1307 = vrsqrt.pop %v1192
  %v1308 = vmul.f32 %v1307, %v1192
  %v1309 = vmul.f32 %v1308, %v1307
  %v1310 = vmul.f32 0.5, %v1309
  %v1311 = vsub.f32 1.5, %v1310
  %v1312 = vmul.f32 %v1307, %v1311
  %vm1313 = vweird.f32 %v1192
  %vm1314 = vweird.f32 %v1307
  %vm1315 = vmor %vm1313, %vm1314
  %v1316 = vsel %vm1315, %v1307, %v1312
  %v1317 = vrsqrt.pop %v1193
  %v1318 = vmul.f32 %v1317, %v1193
  %v1319 = vmul.f32 %v1318, %v1317
  %v1320 = vmul.f32 0.5, %v1319
  %v1321 = vsub.f32 1.5, %v1320
  %v1322 = vmul.f32 %v1317, %v1321
  %vm1323 = vweird.f32 %v1193
  %vm1324 = vweird.f32 %v1317
  %vm1325 = vmor %vm1323, %vm1324
  %v1326 = vsel %vm1325, %v1317, %v1322
  %v1327 = vrsqrt.pop %v1194
  %v1328 = vmul.f32 %v1327, %v1194
  %v1329 = vmul.f32 %v1328, %v1327
  %v1330 = vmul.f32 0.5, %v1329
  %v1331 = vsub.f32 1.5, %v1330
  %v1332 = vmul.f32 %v1327, %v1331
  %vm1333 = vweird.f32 %v1194
  %vm1334 = vweird.f32 %v1327
  %vm1335 = vmor %vm1333, %vm1334
  %v1336 = vsel %vm1335, %v1327, %v1332
  %v1337 = vrsqrt.pop %v1195
  %v1338 = vmul.f32 %v1337, %v1195
  %v1339 = vmul.f32 %v1338, %v1337
  %v1340 = vmul.f32 0.5, %v1339
  %v1341 = vsub.f32 1.5, %v1340
  %v1342 = vmul.f32 %v1337, %v1341
  %vm1343 = vweird.f32 %v1195
  %vm1344 = vweird.f32 %v1337
  %vm1345 = vmor %vm1343, %vm1344
  %v1346 = vsel %vm1345, %v1337, %v1342
  %v1347 = vrsqrt.pop %v1196
  %v1348 = vmul.f32 %v1347, %v1196
  %v1349 = vmul.f32 %v1348, %v1347
  %v1350 = vmul.f32 0.5, %v1349
  %v1351 = vsub.f32 1.5, %v1350
  %v1352 = vmul.f32 %v1347, %v1351
  %vm1353 = vweird.f32 %v1196
  %vm1354 = vweird.f32 %v1347
  %vm1355 = vmor %vm1353, %vm1354
  %v1356 = vsel %vm1355, %v1347, %v1352
  %v1357 = vmul.f32 %v1165, %v1206
  %v1358 = vmul.f32 %v1166, %v1216
  %v1359 = vmul.f32 %v1167, %v1226
  %v1360 = vmul.f32 %v1168, %v1236
  %v1361 = vmul.f32 %v1169, %v1246
  %v1362 = vmul.f32 %v1170, %v1256
  %v1363 = vmul.f32 %v1171, %v1266
  %v1364 = vmul.f32 %v1172, %v1276
  %v1365 = vmul.f32 %v1173, %v1286
  %v1366 = vmul.f32 %v1174, %v1296
  %v1367 = vmul.f32 %v1175, %v1306
  %v1368 = vmul.f32 %v1176, %v1316
  %v1369 = vmul.f32 %v1177, %v1326
  %v1370 = vmul.f32 %v1178, %v1336
  %v1371 = vmul.f32 %v1179, %v1346
  %v1372 = vmul.f32 %v1180, %v1356
  %v1373 = vmul.f32 %v1005, %v1357
  %v1374 = vmul.f32 %v1006, %v1358
  %v1375 = vmul.f32 %v1007, %v1359
  %v1376 = vmul.f32 %v1008, %v1360
  %v1377 = vmul.f32 %v1009, %v1361
  %v1378 = vmul.f32 %v1010, %v1362
  %v1379 = vmul.f32 %v1011, %v1363
  %v1380 = vmul.f32 %v1012, %v1364
  %v1381 = vmul.f32 %v1013, %v1365
  %v1382 = vmul.f32 %v1014, %v1366
  %v1383 = vmul.f32 %v1015, %v1367
  %v1384 = vmul.f32 %v1016, %v1368
  %v1385 = vmul.f32 %v1017, %v1369
  %v1386 = vmul.f32 %v1018, %v1370
  %v1387 = vmul.f32 %v1019, %v1371
  %v1388 = vmul.f32 %v1020, %v1372
  %1405 = vrot.lane.b32.xlu0 %v1373, 1
  %v1406 = vpop.permute.xlu0 %1405
  %1407 = vrot.lane.b32.xlu0 %v1374, 1
  %v1408 = vpop.permute.xlu0 %1407
  %1409 = vrot.lane.b32.xlu0 %v1375, 1
  %v1410 = vpop.permute.xlu0 %1409
  %1411 = vrot.lane.b32.xlu0 %v1376, 1
  %v1412 = vpop.permute.xlu0 %1411
  %1413 = vrot.lane.b32.xlu0 %v1377, 1
  %v1414 = vpop.permute.xlu0 %1413
  %1415 = vrot.lane.b32.xlu0 %v1378, 1
  %v1416 = vpop.permute.xlu0 %1415
  %1417 = vrot.lane.b32.xlu0 %v1379, 1
  %v1418 = vpop.permute.xlu0 %1417
  %1419 = vrot.lane.b32.xlu0 %v1380, 1
  %v1420 = vpop.permute.xlu0 %1419
  %1421 = vrot.lane.b32.xlu0 %v1381, 1
  %v1422 = vpop.permute.xlu0 %1421
  %1423 = vrot.lane.b32.xlu0 %v1382, 1
  %v1424 = vpop.permute.xlu0 %1423
  %1425 = vrot.lane.b32.xlu0 %v1383, 1
  %v1426 = vpop.permute.xlu0 %1425
  %1427 = vrot.lane.b32.xlu0 %v1384, 1
  %v1428 = vpop.permute.xlu0 %1427
  %1429 = vrot.lane.b32.xlu0 %v1385, 1
  %v1430 = vpop.permute.xlu0 %1429
  %1431 = vrot.lane.b32.xlu0 %v1386, 1
  %v1432 = vpop.permute.xlu0 %1431
  %1433 = vrot.lane.b32.xlu0 %v1387, 1
  %v1434 = vpop.permute.xlu0 %1433
  %1435 = vrot.lane.b32.xlu0 %v1388, 1
  %v1436 = vpop.permute.xlu0 %1435
  %v1453 = vsub.f32 %v1165, %v1406
  %v1454 = vsub.f32 %v1166, %v1408
  %v1455 = vsub.f32 %v1167, %v1410
  %v1456 = vsub.f32 %v1168, %v1412
  %v1457 = vsub.f32 %v1169, %v1414
  %v1458 = vsub.f32 %v1170, %v1416
  %v1459 = vsub.f32 %v1171, %v1418
  %v1460 = vsub.f32 %v1172, %v1420
  %v1461 = vsub.f32 %v1173, %v1422
  %v1462 = vsub.f32 %v1174, %v1424
  %v1463 = vsub.f32 %v1175, %v1426
  %v1464 = vsub.f32 %v1176, %v1428
  %v1465 = vsub.f32 %v1177, %v1430
  %v1466 = vsub.f32 %v1178, %v1432
  %v1467 = vsub.f32 %v1179, %v1434
  %v1468 = vsub.f32 %v1180, %v1436
  %1470 = vset.pattern.permute.xlu0 0
  %1471 = vperm.xlu0 %1470, %v1357
  %v1472 = vpop.permute.xlu0 %1471
  %1475 = vset.pattern.permute.xlu0 0
  %1476 = vperm.xlu0 %1475, %v1358
  %v1477 = vpop.permute.xlu0 %1476
  %1480 = vset.pattern.permute.xlu0 0
  %1481 = vperm.xlu0 %1480, %v1359
  %v1482 = vpop.permute.xlu0 %1481
  %1485 = vset.pattern.permute.xlu0 0
  %1486 = vperm.xlu0 %1485, %v1360
  %v1487 = vpop.permute.xlu0 %1486
  %1490 = vset.pattern.permute.xlu0 0
  %1491 = vperm.xlu0 %1490, %v1361
  %v1492 = vpop.permute.xlu0 %1491
  %1495 = vset.pattern.permute.xlu0 0
  %1496 = vperm.xlu0 %1495, %v1362
  %v1497 = vpop.permute.xlu0 %1496
  %1500 = vset.pattern.permute.xlu0 0
  %1501 = vperm.xlu0 %1500, %v1363
  %v1502 = vpop.permute.xlu0 %1501
  %1505 = vset.pattern.permute.xlu0 0
  %1506 = vperm.xlu0 %1505, %v1364
  %v1507 = vpop.permute.xlu0 %1506
  %1510 = vset.pattern.permute.xlu0 0
  %1511 = vperm.xlu0 %1510, %v1365
  %v1512 = vpop.permute.xlu0 %1511
  %1515 = vset.pattern.permute.xlu0 0
  %1516 = vperm.xlu0 %1515, %v1366
  %v1517 = vpop.permute.xlu0 %1516
  %1520 = vset.pattern.permute.xlu0 0
  %1521 = vperm.xlu0 %1520, %v1367
  %v1522 = vpop.permute.xlu0 %1521
  %1525 = vset.pattern.permute.xlu0 0
  %1526 = vperm.xlu0 %1525, %v1368
  %v1527 = vpop.permute.xlu0 %1526
  %1530 = vset.pattern.permute.xlu0 0
  %1531 = vperm.xlu0 %1530, %v1369
  %v1532 = vpop.permute.xlu0 %1531
  %1535 = vset.pattern.permute.xlu0 0
  %1536 = vperm.xlu0 %1535, %v1370
  %v1537 = vpop.permute.xlu0 %1536
  %1540 = vset.pattern.permute.xlu0 0
  %1541 = vperm.xlu0 %1540, %v1371
  %v1542 = vpop.permute.xlu0 %1541
  %1545 = vset.pattern.permute.xlu0 0
  %1546 = vperm.xlu0 %1545, %v1372
  %v1547 = vpop.permute.xlu0 %1546
  %v1549 = vmul.f32 %v568, %v1472
  %v1550 = vmul.f32 %v893, %v1472
  %v1551 = vmul.f32 %v571, %v1477
  %v1552 = vmul.f32 %v896, %v1477
  %v1553 = vmul.f32 %v574, %v1482
  %v1554 = vmul.f32 %v899, %v1482
  %v1555 = vmul.f32 %v577, %v1487
  %v1556 = vmul.f32 %v902, %v1487
  %v1557 = vmul.f32 %v580, %v1492
  %v1558 = vmul.f32 %v905, %v1492
  %v1559 = vmul.f32 %v583, %v1497
  %v1560 = vmul.f32 %v908, %v1497
  %v1561 = vmul.f32 %v586, %v1502
  %v1562 = vmul.f32 %v911, %v1502
  %v1563 = vmul.f32 %v589, %v1507
  %v1564 = vmul.f32 %v914, %v1507
  %v1565 = vmul.f32 %v592, %v1512
  %v1566 = vmul.f32 %v917, %v1512
  %v1567 = vmul.f32 %v595, %v1517
  %v1568 = vmul.f32 %v920, %v1517
  %v1569 = vmul.f32 %v598, %v1522
  %v1570 = vmul.f32 %v923, %v1522
  %v1571 = vmul.f32 %v601, %v1527
  %v1572 = vmul.f32 %v926, %v1527
  %v1573 = vmul.f32 %v604, %v1532
  %v1574 = vmul.f32 %v929, %v1532
  %v1575 = vmul.f32 %v607, %v1537
  %v1576 = vmul.f32 %v932, %v1537
  %v1577 = vmul.f32 %v610, %v1542
  %v1578 = vmul.f32 %v935, %v1542
  %v1579 = vmul.f32 %v613, %v1547
  %v1580 = vmul.f32 %v938, %v1547
  %1582 = vset.pattern.permute.xlu0 1
  %1583 = vperm.xlu0 %1582, %v1453
  %v1584 = vpop.permute.xlu0 %1583
  %1587 = vset.pattern.permute.xlu0 1
  %1588 = vperm.xlu0 %1587, %v1454
  %v1589 = vpop.permute.xlu0 %1588
  %1592 = vset.pattern.permute.xlu0 1
  %1593 = vperm.xlu0 %1592, %v1455
  %v1594 = vpop.permute.xlu0 %1593
  %1597 = vset.pattern.permute.xlu0 1
  %1598 = vperm.xlu0 %1597, %v1456
  %v1599 = vpop.permute.xlu0 %1598
  %1602 = vset.pattern.permute.xlu0 1
  %1603 = vperm.xlu0 %1602, %v1457
  %v1604 = vpop.permute.xlu0 %1603
  %1607 = vset.pattern.permute.xlu0 1
  %1608 = vperm.xlu0 %1607, %v1458
  %v1609 = vpop.permute.xlu0 %1608
  %1612 = vset.pattern.permute.xlu0 1
  %1613 = vperm.xlu0 %1612, %v1459
  %v1614 = vpop.permute.xlu0 %1613
  %1617 = vset.pattern.permute.xlu0 1
  %1618 = vperm.xlu0 %1617, %v1460
  %v1619 = vpop.permute.xlu0 %1618
  %1622 = vset.pattern.permute.xlu0 1
  %1623 = vperm.xlu0 %1622, %v1461
  %v1624 = vpop.permute.xlu0 %1623
  %1627 = vset.pattern.permute.xlu0 1
  %1628 = vperm.xlu0 %1627, %v1462
  %v1629 = vpop.permute.xlu0 %1628
  %1632 = vset.pattern.permute.xlu0 1
  %1633 = vperm.xlu0 %1632, %v1463
  %v1634 = vpop.permute.xlu0 %1633
  %1637 = vset.pattern.permute.xlu0 1
  %1638 = vperm.xlu0 %1637, %v1464
  %v1639 = vpop.permute.xlu0 %1638
  %1642 = vset.pattern.permute.xlu0 1
  %1643 = vperm.xlu0 %1642, %v1465
  %v1644 = vpop.permute.xlu0 %1643
  %1647 = vset.pattern.permute.xlu0 1
  %1648 = vperm.xlu0 %1647, %v1466
  %v1649 = vpop.permute.xlu0 %1648
  %1652 = vset.pattern.permute.xlu0 1
  %1653 = vperm.xlu0 %1652, %v1467
  %v1654 = vpop.permute.xlu0 %1653
  %1657 = vset.pattern.permute.xlu0 1
  %1658 = vperm.xlu0 %1657, %v1468
  %v1659 = vpop.permute.xlu0 %1658
  %v1661 = vadd.f32 %v1549, %v1584
  %v1662 = vadd.f32 %v1550, %v1584
  %v1663 = vadd.f32 %v1551, %v1589
  %v1664 = vadd.f32 %v1552, %v1589
  %v1665 = vadd.f32 %v1553, %v1594
  %v1666 = vadd.f32 %v1554, %v1594
  %v1667 = vadd.f32 %v1555, %v1599
  %v1668 = vadd.f32 %v1556, %v1599
  %v1669 = vadd.f32 %v1557, %v1604
  %v1670 = vadd.f32 %v1558, %v1604
  %v1671 = vadd.f32 %v1559, %v1609
  %v1672 = vadd.f32 %v1560, %v1609
  %v1673 = vadd.f32 %v1561, %v1614
  %v1674 = vadd.f32 %v1562, %v1614
  %v1675 = vadd.f32 %v1563, %v1619
  %v1676 = vadd.f32 %v1564, %v1619
  %v1677 = vadd.f32 %v1565, %v1624
  %v1678 = vadd.f32 %v1566, %v1624
  %v1679 = vadd.f32 %v1567, %v1629
  %v1680 = vadd.f32 %v1568, %v1629
  %v1681 = vadd.f32 %v1569, %v1634
  %v1682 = vadd.f32 %v1570, %v1634
  %v1683 = vadd.f32 %v1571, %v1639
  %v1684 = vadd.f32 %v1572, %v1639
  %v1685 = vadd.f32 %v1573, %v1644
  %v1686 = vadd.f32 %v1574, %v1644
  %v1687 = vadd.f32 %v1575, %v1649
  %v1688 = vadd.f32 %v1576, %v1649
  %v1689 = vadd.f32 %v1577, %v1654
  %v1690 = vadd.f32 %v1578, %v1654
  %v1691 = vadd.f32 %v1579, %v1659
  %v1692 = vadd.f32 %v1580, %v1659
  %v1693 = vmax.f32 %v1661, 0.0
  %v1694 = vmax.f32 %v1662, 0.0
  %v1695 = vmax.f32 %v1663, 0.0
  %v1696 = vmax.f32 %v1664, 0.0
  %v1697 = vmax.f32 %v1665, 0.0
  %v1698 = vmax.f32 %v1666, 0.0
  %v1699 = vmax.f32 %v1667, 0.0
  %v1700 = vmax.f32 %v1668, 0.0
  %v1701 = vmax.f32 %v1669, 0.0
  %v1702 = vmax.f32 %v1670, 0.0
  %v1703 = vmax.f32 %v1671, 0.0
  %v1704 = vmax.f32 %v1672, 0.0
  %v1705 = vmax.f32 %v1673, 0.0
  %v1706 = vmax.f32 %v1674, 0.0
  %v1707 = vmax.f32 %v1675, 0.0
  %v1708 = vmax.f32 %v1676, 0.0
  %v1709 = vmax.f32 %v1677, 0.0
  %v1710 = vmax.f32 %v1678, 0.0
  %v1711 = vmax.f32 %v1679, 0.0
  %v1712 = vmax.f32 %v1680, 0.0
  %v1713 = vmax.f32 %v1681, 0.0
  %v1714 = vmax.f32 %v1682, 0.0
  %v1715 = vmax.f32 %v1683, 0.0
  %v1716 = vmax.f32 %v1684, 0.0
  %v1717 = vmax.f32 %v1685, 0.0
  %v1718 = vmax.f32 %v1686, 0.0
  %v1719 = vmax.f32 %v1687, 0.0
  %v1720 = vmax.f32 %v1688, 0.0
  %v1721 = vmax.f32 %v1689, 0.0
  %v1722 = vmax.f32 %v1690, 0.0
  %v1723 = vmax.f32 %v1691, 0.0
  %v1724 = vmax.f32 %v1692, 0.0
  %1725 = vxpose.xlu0.b32.start [1/16] %v1693, 128
  %1726 = vxpose.xlu0.b32.cont [2/16] %v1695, 128
  %1727 = vxpose.xlu0.b32.cont [3/16] %v1697, 128
  %1728 = vxpose.xlu0.b32.cont [4/16] %v1699, 128
  %1729 = vxpose.xlu0.b32.cont [5/16] %v1701, 128
  %1730 = vxpose.xlu0.b32.cont [6/16] %v1703, 128
  %1731 = vxpose.xlu0.b32.cont [7/16] %v1705, 128
  %1732 = vxpose.xlu0.b32.cont [8/16] %v1707, 128
  %1733 = vxpose.xlu0.b32.cont [9/16] %v1709, 128
  %1734 = vxpose.xlu0.b32.cont [10/16] %v1711, 128
  %1735 = vxpose.xlu0.b32.cont [11/16] %v1713, 128
  %1736 = vxpose.xlu0.b32.cont [12/16] %v1715, 128
  %1737 = vxpose.xlu0.b32.cont [13/16] %v1717, 128
  %1738 = vxpose.xlu0.b32.cont [14/16] %v1719, 128
  %1739 = vxpose.xlu0.b32.cont [15/16] %v1721, 128
  %1740 = vxpose.xlu0.b32.end [16/16] %v1723, 128
  %v1741 = vpop.trf.xlu0
  %v1742 = vpop.trf.xlu0
  %v1743 = vpop.trf.xlu0
  %v1744 = vpop.trf.xlu0
  %v1745 = vpop.trf.xlu0
  %v1746 = vpop.trf.xlu0
  %v1747 = vpop.trf.xlu0
  %v1748 = vpop.trf.xlu0
  %v1749 = vpop.trf.xlu0
  %v1750 = vpop.trf.xlu0
  %v1751 = vpop.trf.xlu0
  %v1752 = vpop.trf.xlu0
  %v1753 = vpop.trf.xlu0
  %v1754 = vpop.trf.xlu0
  %v1755 = vpop.trf.xlu0
  %v1756 = vpop.trf.xlu0
  %1757 = vxpose.xlu0.b32.start [1/16] %v1694, 128
  %1758 = vxpose.xlu0.b32.cont [2/16] %v1696, 128
  %1759 = vxpose.xlu0.b32.cont [3/16] %v1698, 128
  %1760 = vxpose.xlu0.b32.cont [4/16] %v1700, 128
  %1761 = vxpose.xlu0.b32.cont [5/16] %v1702, 128
  %1762 = vxpose.xlu0.b32.cont [6/16] %v1704, 128
  %1763 = vxpose.xlu0.b32.cont [7/16] %v1706, 128
  %1764 = vxpose.xlu0.b32.cont [8/16] %v1708, 128
  %1765 = vxpose.xlu0.b32.cont [9/16] %v1710, 128
  %1766 = vxpose.xlu0.b32.cont [10/16] %v1712, 128
  %1767 = vxpose.xlu0.b32.cont [11/16] %v1714, 128
  %1768 = vxpose.xlu0.b32.cont [12/16] %v1716, 128
  %1769 = vxpose.xlu0.b32.cont [13/16] %v1718, 128
  %1770 = vxpose.xlu0.b32.cont [14/16] %v1720, 128
  %1771 = vxpose.xlu0.b32.cont [15/16] %v1722, 128
  %1772 = vxpose.xlu0.b32.end [16/16] %v1724, 128
  %v1773 = vpop.trf.xlu0
  %v1774 = vpop.trf.xlu0
  %v1775 = vpop.trf.xlu0
  %v1776 = vpop.trf.xlu0
  %v1777 = vpop.trf.xlu0
  %v1778 = vpop.trf.xlu0
  %v1779 = vpop.trf.xlu0
  %v1780 = vpop.trf.xlu0
  %v1781 = vpop.trf.xlu0
  %v1782 = vpop.trf.xlu0
  %v1783 = vpop.trf.xlu0
  %v1784 = vpop.trf.xlu0
  %v1785 = vpop.trf.xlu0
  %v1786 = vpop.trf.xlu0
  %v1787 = vpop.trf.xlu0
  %v1788 = vpop.trf.xlu0
  %1789 = vst [vmem:[#allocation2] sm:$0xff] 0.0
  %1790 = vst [vmem:[#allocation2 + $0x8] sm:$0xff] 0.0
  %1791 = vst [vmem:[#allocation2 + $0x10] sm:$0xff] 0.0
  %1792 = vst [vmem:[#allocation2 + $0x18] sm:$0xff] 0.0
  %1793 = vst [vmem:[#allocation2 + $0x20] sm:$0xff] 0.0
  %1794 = vst [vmem:[#allocation2 + $0x28] sm:$0xff] 0.0
  %1795 = vst [vmem:[#allocation2 + $0x30] sm:$0xff] 0.0
  %1796 = vst [vmem:[#allocation2 + $0x38] sm:$0xff] 0.0
  %1797 = vst [vmem:[#allocation2 + $0x40] sm:$0xff] 0.0
  %1798 = vst [vmem:[#allocation2 + $0x48] sm:$0xff] 0.0
  %1799 = vst [vmem:[#allocation2 + $0x50] sm:$0xff] 0.0
  %1800 = vst [vmem:[#allocation2 + $0x58] sm:$0xff] 0.0
  %1801 = vst [vmem:[#allocation2 + $0x60] sm:$0xff] 0.0
  %1802 = vst [vmem:[#allocation2 + $0x68] sm:$0xff] 0.0
  %1803 = vst [vmem:[#allocation2 + $0x70] sm:$0xff] 0.0
  %1804 = vst [vmem:[#allocation2 + $0x78] sm:$0xff] 0.0
  %1805 = vst [vmem:[#allocation2 + $0x80] sm:$0xff] 0.0
  %1806 = vst [vmem:[#allocation2 + $0x88] sm:$0xff] 0.0
  %1807 = vst [vmem:[#allocation2 + $0x90] sm:$0xff] 0.0
  %1808 = vst [vmem:[#allocation2 + $0x98] sm:$0xff] 0.0
  %1809 = vst [vmem:[#allocation2 + $0xa0] sm:$0xff] 0.0
  %1810 = vst [vmem:[#allocation2 + $0xa8] sm:$0xff] 0.0
  %1811 = vst [vmem:[#allocation2 + $0xb0] sm:$0xff] 0.0
  %1812 = vst [vmem:[#allocation2 + $0xb8] sm:$0xff] 0.0
  %1813 = vst [vmem:[#allocation2 + $0xc0] sm:$0xff] 0.0
  %1814 = vst [vmem:[#allocation2 + $0xc8] sm:$0xff] 0.0
  %1815 = vst [vmem:[#allocation2 + $0xd0] sm:$0xff] 0.0
  %1816 = vst [vmem:[#allocation2 + $0xd8] sm:$0xff] 0.0
  %1817 = vst [vmem:[#allocation2 + $0xe0] sm:$0xff] 0.0
  %1818 = vst [vmem:[#allocation2 + $0xe8] sm:$0xff] 0.0
  %1819 = vst [vmem:[#allocation2 + $0xf0] sm:$0xff] 0.0
  %1820 = vst [vmem:[#allocation2 + $0xf8] sm:$0xff] 0.0
  %1821 = vst [vmem:[#allocation2 + $0x100] sm:$0xff] 0.0
  %1822 = vst [vmem:[#allocation2 + $0x11] sm:$0xff] %v1741
  %1823 = vst [vmem:[#allocation2 + $0x19] sm:$0x3f] %v1742
  %1824 = vst [vmem:[#allocation2 + $0x1b] sm:$0xc0] %v1742
  %1825 = vst [vmem:[#allocation2 + $0x23] sm:$0xff] %v1743
  %1826 = vst [vmem:[#allocation2 + $0x2b] sm:$0xf] %v1744
  %1827 = vst [vmem:[#allocation2 + $0x2d] sm:$0xf0] %v1744
  %1828 = vst [vmem:[#allocation2 + $0x35] sm:$0xff] %v1745
  %1829 = vst [vmem:[#allocation2 + $0x3d] sm:$0x3] %v1746
  %1830 = vst [vmem:[#allocation2 + $0x3f] sm:$0xfc] %v1746
  %1831 = vst [vmem:[#allocation2 + $0x47] sm:$0xff] %v1747
  %1832 = vst [vmem:[#allocation2 + $0x51] sm:$0xff] %v1748
  %1833 = vst [vmem:[#allocation2 + $0x59] sm:$0x3f] %v1749
  %1834 = vst [vmem:[#allocation2 + $0x5b] sm:$0xc0] %v1749
  %1835 = vst [vmem:[#allocation2 + $0x63] sm:$0xff] %v1750
  %1836 = vst [vmem:[#allocation2 + $0x6b] sm:$0xf] %v1751
  %1837 = vst [vmem:[#allocation2 + $0x6d] sm:$0xf0] %v1751
  %1838 = vst [vmem:[#allocation2 + $0x75] sm:$0xff] %v1752
  %1839 = vst [vmem:[#allocation2 + $0x7d] sm:$0x3] %v1753
  %1840 = vst [vmem:[#allocation2 + $0x7f] sm:$0xfc] %v1753
  %1841 = vst [vmem:[#allocation2 + $0x87] sm:$0xff] %v1754
  %1842 = vst [vmem:[#allocation2 + $0x91] sm:$0xff] %v1755
  %1843 = vst [vmem:[#allocation2 + $0x99] sm:$0x3f] %v1756
  %1844 = vst [vmem:[#allocation2 + $0x9b] sm:$0xc0] %v1756
  %1845 = vst [vmem:[#allocation2 + $0xa3] sm:$0xff] %v1773
  %1846 = vst [vmem:[#allocation2 + $0xab] sm:$0xf] %v1774
  %1847 = vst [vmem:[#allocation2 + $0xad] sm:$0xf0] %v1774
  %1848 = vst [vmem:[#allocation2 + $0xb5] sm:$0xff] %v1775
  %1849 = vst [vmem:[#allocation2 + $0xbd] sm:$0x3] %v1776
  %1850 = vst [vmem:[#allocation2 + $0xbf] sm:$0xfc] %v1776
  %1851 = vst [vmem:[#allocation2 + $0xc7] sm:$0xff] %v1777
  %1852 = vst [vmem:[#allocation2 + $0xd1] sm:$0xff] %v1778
  %1853 = vst [vmem:[#allocation2 + $0xd9] sm:$0x3f] %v1779
  %1854 = vst [vmem:[#allocation2 + $0xdb] sm:$0xc0] %v1779
  %1855 = vst [vmem:[#allocation2 + $0xe3] sm:$0xff] %v1780
  %1856 = vst [vmem:[#allocation2 + $0xeb] sm:$0xf] %v1781
  %v1857 = vld [vmem:[#allocation2] sm:$0xff]
  %v1858 = vld [vmem:[#allocation2 + $0x8] sm:$0xff]
  %v1859 = vld [vmem:[#allocation2 + $0x10] sm:$0xff]
  %v1860 = vld [vmem:[#allocation2 + $0x18] sm:$0xff]
  %v1861 = vld [vmem:[#allocation2 + $0x20] sm:$0xff]
  %v1862 = vld [vmem:[#allocation2 + $0x28] sm:$0xff]
  %v1863 = vld [vmem:[#allocation2 + $0x30] sm:$0xff]
  %v1864 = vld [vmem:[#allocation2 + $0x38] sm:$0xff]
  %v1865 = vld [vmem:[#allocation2 + $0x40] sm:$0xff]
  %v1866 = vld [vmem:[#allocation2 + $0x48] sm:$0xff]
  %v1867 = vld [vmem:[#allocation2 + $0x50] sm:$0xff]
  %v1868 = vld [vmem:[#allocation2 + $0x58] sm:$0xff]
  %v1869 = vld [vmem:[#allocation2 + $0x60] sm:$0xff]
  %v1870 = vld [vmem:[#allocation2 + $0x68] sm:$0xff]
  %v1871 = vld [vmem:[#allocation2 + $0x70] sm:$0xff]
  %v1872 = vld [vmem:[#allocation2 + $0x78] sm:$0xff]
  %v1873 = vld [vmem:[#allocation2 + $0x80] sm:$0xff]
  %v1874 = vld [vmem:[#allocation2 + $0x88] sm:$0xff]
  %v1875 = vld [vmem:[#allocation2 + $0x90] sm:$0xff]
  %v1876 = vld [vmem:[#allocation2 + $0x98] sm:$0xff]
  %v1877 = vld [vmem:[#allocation2 + $0xa0] sm:$0xff]
  %v1878 = vld [vmem:[#allocation2 + $0xa8] sm:$0xff]
  %v1879 = vld [vmem:[#allocation2 + $0xb0] sm:$0xff]
  %v1880 = vld [vmem:[#allocation2 + $0xb8] sm:$0xff]
  %v1881 = vld [vmem:[#allocation2 + $0xc0] sm:$0xff]
  %v1882 = vld [vmem:[#allocation2 + $0xc8] sm:$0xff]
  %v1883 = vld [vmem:[#allocation2 + $0xd0] sm:$0xff]
  %v1884 = vld [vmem:[#allocation2 + $0xd8] sm:$0xff]
  %v1885 = vld [vmem:[#allocation2 + $0xe0] sm:$0xff]
  %v1886 = vld [vmem:[#allocation2 + $0xe8] sm:$0xff]
  %v1887 = vld [vmem:[#allocation2 + $0xf0] sm:$0xff]
  %v1888 = vld [vmem:[#allocation2 + $0xf8] sm:$0xff]
  %v1889 = vld [vmem:[%s3] sm:$0xff]
  %v1890 = vld [vmem:[%s3 + $0x8] sm:$0xff]
  %v1891 = vld [vmem:[%s3 + $0x10] sm:$0xff]
  %v1892 = vld [vmem:[%s3 + $0x18] sm:$0xff]
  %v1893 = vld [vmem:[%s3 + $0x20] sm:$0xff]
  %v1894 = vld [vmem:[%s3 + $0x28] sm:$0xff]
  %v1895 = vld [vmem:[%s3 + $0x30] sm:$0xff]
  %v1896 = vld [vmem:[%s3 + $0x38] sm:$0xff]
  %v1897 = vld [vmem:[%s3 + $0x40] sm:$0xff]
  %v1898 = vld [vmem:[%s3 + $0x48] sm:$0xff]
  %v1899 = vld [vmem:[%s3 + $0x50] sm:$0xff]
  %v1900 = vld [vmem:[%s3 + $0x58] sm:$0xff]
  %v1901 = vld [vmem:[%s3 + $0x60] sm:$0xff]
  %v1902 = vld [vmem:[%s3 + $0x68] sm:$0xff]
  %v1903 = vld [vmem:[%s3 + $0x70] sm:$0xff]
  %v1904 = vld [vmem:[%s3 + $0x78] sm:$0xff]
  %1905 = vmatpush.msra.mxu0 %v1904
  %1906 = vmatpush.msra.mxu0 %v1903
  %1907 = vmatpush.msra.mxu0 %v1902
  %1908 = vmatpush.msra.mxu0 %v1901
  %1909 = vmatpush.msra.mxu0 %v1900
  %1910 = vmatpush.msra.mxu0 %v1899
  %1911 = vmatpush.msra.mxu0 %v1898
  %1912 = vmatpush.msra.mxu0 %v1897
  %1913 = vmatpush.msra.mxu0 %v1896
  %1914 = vmatpush.msra.mxu0 %v1895
  %1915 = vmatpush.msra.mxu0 %v1894
  %1916 = vmatpush.msra.mxu0 %v1893
  %1917 = vmatpush.msra.mxu0 %v1892
  %1918 = vmatpush.msra.mxu0 %v1891
  %1919 = vmatpush.msra.mxu0 %v1890
  %1920 = vmatpush.msra.mxu0 %v1889
  %1921 = vmatmul.f32.gmra.mxu0 %v1857
  %v1922 = vpop.f32.mrf.mxu0
  %v1923 = vadd.f32 0.0, %v1922
  %1924 = vmatmul.f32.gmra.mxu0 %v1858
  %v1925 = vpop.f32.mrf.mxu0
  %v1926 = vadd.f32 0.0, %v1925
  %1927 = vmatmul.f32.gmra.mxu0 %v1859
  %v1928 = vpop.f32.mrf.mxu0
  %v1929 = vadd.f32 0.0, %v1928
  %1930 = vmatmul.f32.gmra.mxu0 %v1860
  %v1931 = vpop.f32.mrf.mxu0
  %v1932 = vadd.f32 0.0, %v1931
  %1933 = vmatmul.f32.gmra.mxu0 %v1861
  %v1934 = vpop.f32.mrf.mxu0
  %v1935 = vadd.f32 0.0, %v1934
  %1936 = vmatmul.f32.gmra.mxu0 %v1862
  %v1937 = vpop.f32.mrf.mxu0
  %v1938 = vadd.f32 0.0, %v1937
  %1939 = vmatmul.f32.gmra.mxu0 %v1863
  %v1940 = vpop.f32.mrf.mxu0
  %v1941 = vadd.f32 0.0, %v1940
  %1942 = vmatmul.f32.gmra.mxu0 %v1864
  %v1943 = vpop.f32.mrf.mxu0
  %v1944 = vadd.f32 0.0, %v1943
  %1945 = vmatmul.f32.gmra.mxu0 %v1865
  %v1946 = vpop.f32.mrf.mxu0
  %v1947 = vadd.f32 0.0, %v1946
  %1948 = vmatmul.f32.gmra.mxu0 %v1866
  %v1949 = vpop.f32.mrf.mxu0
  %v1950 = vadd.f32 0.0, %v1949
  %1951 = vmatmul.f32.gmra.mxu0 %v1867
  %v1952 = vpop.f32.mrf.mxu0
  %v1953 = vadd.f32 0.0, %v1952
  %1954 = vmatmul.f32.gmra.mxu0 %v1868
  %v1955 = vpop.f32.mrf.mxu0
  %v1956 = vadd.f32 0.0, %v1955
  %1957 = vmatmul.f32.gmra.mxu0 %v1869
  %v1958 = vpop.f32.mrf.mxu0
  %v1959 = vadd.f32 0.0, %v1958
  %1960 = vmatmul.f32.gmra.mxu0 %v1870
  %v1961 = vpop.f32.mrf.mxu0
  %v1962 = vadd.f32 0.0, %v1961
  %1963 = vmatmul.f32.gmra.mxu0 %v1871
  %v1964 = vpop.f32.mrf.mxu0
  %v1965 = vadd.f32 0.0, %v1964
  %1966 = vmatmul.f32.gmra.mxu0 %v1872
  %v1967 = vpop.f32.mrf.mxu0
  %v1968 = vadd.f32 0.0, %v1967
  %1969 = vmatmul.f32.gmra.mxu0 %v1873
  %v1970 = vpop.f32.mrf.mxu0
  %v1971 = vadd.f32 0.0, %v1970
  %1972 = vmatmul.f32.gmra.mxu0 %v1874
  %v1973 = vpop.f32.mrf.mxu0
  %v1974 = vadd.f32 0.0, %v1973
  %1975 = vmatmul.f32.gmra.mxu0 %v1875
  %v1976 = vpop.f32.mrf.mxu0
  %v1977 = vadd.f32 0.0, %v1976
  %1978 = vmatmul.f32.gmra.mxu0 %v1876
  %v1979 = vpop.f32.mrf.mxu0
  %v1980 = vadd.f32 0.0, %v1979
  %1981 = vmatmul.f32.gmra.mxu0 %v1877
  %v1982 = vpop.f32.mrf.mxu0
  %v1983 = vadd.f32 0.0, %v1982
  %1984 = vmatmul.f32.gmra.mxu0 %v1878
  %v1985 = vpop.f32.mrf.mxu0
  %v1986 = vadd.f32 0.0, %v1985
  %1987 = vmatmul.f32.gmra.mxu0 %v1879
  %v1988 = vpop.f32.mrf.mxu0
  %v1989 = vadd.f32 0.0, %v1988
  %1990 = vmatmul.f32.gmra.mxu0 %v1880
  %v1991 = vpop.f32.mrf.mxu0
  %v1992 = vadd.f32 0.0, %v1991
  %1993 = vmatmul.f32.gmra.mxu0 %v1881
  %v1994 = vpop.f32.mrf.mxu0
  %v1995 = vadd.f32 0.0, %v1994
  %1996 = vmatmul.f32.gmra.mxu0 %v1882
  %v1997 = vpop.f32.mrf.mxu0
  %v1998 = vadd.f32 0.0, %v1997
  %1999 = vmatmul.f32.gmra.mxu0 %v1883
  %v2000 = vpop.f32.mrf.mxu0
  %v2001 = vadd.f32 0.0, %v2000
  %2002 = vmatmul.f32.gmra.mxu0 %v1884
  %v2003 = vpop.f32.mrf.mxu0
  %v2004 = vadd.f32 0.0, %v2003
  %2005 = vmatmul.f32.gmra.mxu0 %v1885
  %v2006 = vpop.f32.mrf.mxu0
  %v2007 = vadd.f32 0.0, %v2006
  %2008 = vmatmul.f32.gmra.mxu0 %v1886
  %v2009 = vpop.f32.mrf.mxu0
  %v2010 = vadd.f32 0.0, %v2009
  %2011 = vmatmul.f32.gmra.mxu0 %v1887
  %v2012 = vpop.f32.mrf.mxu0
  %v2013 = vadd.f32 0.0, %v2012
  %2014 = vmatmul.f32.gmra.mxu0 %v1888
  %v2015 = vpop.f32.mrf.mxu0
  %v2016 = vadd.f32 0.0, %v2015
  %2017 = vdwg.mxu0
  %vm2018 = vcmask 785408
  %2019 = vst.msk [vmem:[#allocation3] sm:$0xff] %vm2018, %v1923
  %2020 = vst.msk [vmem:[#allocation3 + $0x8] sm:$0xff] %vm2018, %v1926
  %2021 = vst.msk [vmem:[#allocation3 + $0x10] sm:$0xff] %vm2018, %v1929
  %2022 = vst.msk [vmem:[#allocation3 + $0x18] sm:$0xff] %vm2018, %v1932
  %2023 = vst.msk [vmem:[#allocation3 + $0x20] sm:$0xff] %vm2018, %v1935
  %2024 = vst.msk [vmem:[#allocation3 + $0x28] sm:$0xff] %vm2018, %v1938
  %2025 = vst.msk [vmem:[#allocation3 + $0x30] sm:$0xff] %vm2018, %v1941
  %2026 = vst.msk [vmem:[#allocation3 + $0x38] sm:$0xff] %vm2018, %v1944
  %2027 = vst.msk [vmem:[#allocation3 + $0x40] sm:$0xff] %vm2018, %v1947
  %2028 = vst.msk [vmem:[#allocation3 + $0x48] sm:$0xff] %vm2018, %v1950
  %2029 = vst.msk [vmem:[#allocation3 + $0x50] sm:$0xff] %vm2018, %v1953
  %2030 = vst.msk [vmem:[#allocation3 + $0x58] sm:$0xff] %vm2018, %v1956
  %2031 = vst.msk [vmem:[#allocation3 + $0x60] sm:$0xff] %vm2018, %v1959
  %2032 = vst.msk [vmem:[#allocation3 + $0x68] sm:$0xff] %vm2018, %v1962
  %2033 = vst.msk [vmem:[#allocation3 + $0x70] sm:$0xff] %vm2018, %v1965
  %2034 = vst.msk [vmem:[#allocation3 + $0x78] sm:$0xff] %vm2018, %v1968
  %2035 = vst.msk [vmem:[#allocation3 + $0x80] sm:$0xff] %vm2018, %v1971
  %2036 = vst.msk [vmem:[#allocation3 + $0x88] sm:$0xff] %vm2018, %v1974
  %2037 = vst.msk [vmem:[#allocation3 + $0x90] sm:$0xff] %vm2018, %v1977
  %2038 = vst.msk [vmem:[#allocation3 + $0x98] sm:$0xff] %vm2018, %v1980
  %2039 = vst.msk [vmem:[#allocation3 + $0xa0] sm:$0xff] %vm2018, %v1983
  %2040 = vst.msk [vmem:[#allocation3 + $0xa8] sm:$0xff] %vm2018, %v1986
  %2041 = vst.msk [vmem:[#allocation3 + $0xb0] sm:$0xff] %vm2018, %v1989
  %2042 = vst.msk [vmem:[#allocation3 + $0xb8] sm:$0xff] %vm2018, %v1992
  %2043 = vst.msk [vmem:[#allocation3 + $0xc0] sm:$0xff] %vm2018, %v1995
  %2044 = vst.msk [vmem:[#allocation3 + $0xc8] sm:$0xff] %vm2018, %v1998
  %2045 = vst.msk [vmem:[#allocation3 + $0xd0] sm:$0xff] %vm2018, %v2001
  %2046 = vst.msk [vmem:[#allocation3 + $0xd8] sm:$0xff] %vm2018, %v2004
  %2047 = vst.msk [vmem:[#allocation3 + $0xe0] sm:$0xff] %vm2018, %v2007
  %2048 = vst.msk [vmem:[#allocation3 + $0xe8] sm:$0xff] %vm2018, %v2010
  %2049 = vst.msk [vmem:[#allocation3 + $0xf0] sm:$0xff] %vm2018, %v2013
  %2050 = vst.msk [vmem:[#allocation3 + $0xf8] sm:$0xff] %vm2018, %v2016
  %v2051 = vld [vmem:[#allocation3] sm:$0xff]
  %v2052 = vld [vmem:[#allocation3 + $0x8] sm:$0xff]
  %v2053 = vld [vmem:[#allocation3 + $0x10] sm:$0xff]
  %v2054 = vld [vmem:[#allocation3 + $0x18] sm:$0xff]
  %v2055 = vld [vmem:[#allocation3 + $0x20] sm:$0xff]
  %v2056 = vld [vmem:[#allocation3 + $0x28] sm:$0xff]
  %v2057 = vld [vmem:[#allocation3 + $0x30] sm:$0xff]
  %v2058 = vld [vmem:[#allocation3 + $0x38] sm:$0xff]
  %v2059 = vld [vmem:[#allocation3 + $0x40] sm:$0xff]
  %v2060 = vld [vmem:[#allocation3 + $0x48] sm:$0xff]
  %v2061 = vld [vmem:[#allocation3 + $0x50] sm:$0xff]
  %v2062 = vld [vmem:[#allocation3 + $0x58] sm:$0xff]
  %v2063 = vld [vmem:[#allocation3 + $0x60] sm:$0xff]
  %v2064 = vld [vmem:[#allocation3 + $0x68] sm:$0xff]
  %v2065 = vld [vmem:[#allocation3 + $0x70] sm:$0xff]
  %v2066 = vld [vmem:[#allocation3 + $0x78] sm:$0xff]
  %v2067 = vld [vmem:[#allocation3 + $0x80] sm:$0xff]
  %v2068 = vld [vmem:[#allocation3 + $0x88] sm:$0xff]
  %v2069 = vld [vmem:[#allocation3 + $0x90] sm:$0xff]
  %v2070 = vld [vmem:[#allocation3 + $0x98] sm:$0xff]
  %v2071 = vld [vmem:[#allocation3 + $0xa0] sm:$0xff]
  %v2072 = vld [vmem:[#allocation3 + $0xa8] sm:$0xff]
  %v2073 = vld [vmem:[#allocation3 + $0xb0] sm:$0xff]
  %v2074 = vld [vmem:[#allocation3 + $0xb8] sm:$0xff]
  %v2075 = vld [vmem:[#allocation3 + $0xc0] sm:$0xff]
  %v2076 = vld [vmem:[#allocation3 + $0xc8] sm:$0xff]
  %v2077 = vld [vmem:[#allocation3 + $0xd0] sm:$0xff]
  %v2078 = vld [vmem:[#allocation3 + $0xd8] sm:$0xff]
  %v2079 = vld [vmem:[#allocation3 + $0xe0] sm:$0xff]
  %v2080 = vld [vmem:[#allocation3 + $0xe8] sm:$0xff]
  %v2081 = vld [vmem:[#allocation3 + $0xf0] sm:$0xff]
  %v2082 = vld [vmem:[#allocation3 + $0xf8] sm:$0xff]
  %v2083 = vld [vmem:[#allocation2 + $0x1] sm:$0xff]
  %v2084 = vld [vmem:[#allocation2 + $0x9] sm:$0xff]
  %v2085 = vld [vmem:[#allocation2 + $0x11] sm:$0xff]
  %v2086 = vld [vmem:[#allocation2 + $0x19] sm:$0xff]
  %v2087 = vld [vmem:[#allocation2 + $0x21] sm:$0xff]
  %v2088 = vld [vmem:[#allocation2 + $0x29] sm:$0xff]
  %v2089 = vld [vmem:[#allocation2 + $0x31] sm:$0xff]
  %v2090 = vld [vmem:[#allocation2 + $0x39] sm:$0xff]
  %v2091 = vld [vmem:[#allocation2 + $0x41] sm:$0xff]
  %v2092 = vld [vmem:[#allocation2 + $0x49] sm:$0xff]
  %v2093 = vld [vmem:[#allocation2 + $0x51] sm:$0xff]
  %v2094 = vld [vmem:[#allocation2 + $0x59] sm:$0xff]
  %v2095 = vld [vmem:[#allocation2 + $0x61] sm:$0xff]
  %v2096 = vld [vmem:[#allocation2 + $0x69] sm:$0xff]
  %v2097 = vld [vmem:[#allocation2 + $0x71] sm:$0xff]
  %v2098 = vld [vmem:[#allocation2 + $0x79] sm:$0xff]
  %v2099 = vld [vmem:[#allocation2 + $0x81] sm:$0xff]
  %v2100 = vld [vmem:[#allocation2 + $0x89] sm:$0xff]
  %v2101 = vld [vmem:[#allocation2 + $0x91] sm:$0xff]
  %v2102 = vld [vmem:[#allocation2 + $0x99] sm:$0xff]
  %v2103 = vld [vmem:[#allocation2 + $0xa1] sm:$0xff]
  %v2104 = vld [vmem:[#allocation2 + $0xa9] sm:$0xff]
  %v2105 = vld [vmem:[#allocation2 + $0xb1] sm:$0xff]
  %v2106 = vld [vmem:[#allocation2 + $0xb9] sm:$0xff]
  %v2107 = vld [vmem:[#allocation2 + $0xc1] sm:$0xff]
  %v2108 = vld [vmem:[#allocation2 + $0xc9] sm:$0xff]
  %v2109 = vld [vmem:[#allocation2 + $0xd1] sm:$0xff]
  %v2110 = vld [vmem:[#allocation2 + $0xd9] sm:$0xff]
  %v2111 = vld [vmem:[#allocation2 + $0xe1] sm:$0xff]
  %v2112 = vld [vmem:[#allocation2 + $0xe9] sm:$0xff]
  %v2113 = vld [vmem:[#allocation2 + $0xf1] sm:$0xff]
  %v2114 = vld [vmem:[#allocation2 + $0xf9] sm:$0xff]
  %v2115 = vld [vmem:[%s3 + $0x80] sm:$0xff]
  %v2116 = vld [vmem:[%s3 + $0x88] sm:$0xff]
  %v2117 = vld [vmem:[%s3 + $0x90] sm:$0xff]
  %v2118 = vld [vmem:[%s3 + $0x98] sm:$0xff]
  %v2119 = vld [vmem:[%s3 + $0xa0] sm:$0xff]
  %v2120 = vld [vmem:[%s3 + $0xa8] sm:$0xff]
  %v2121 = vld [vmem:[%s3 + $0xb0] sm:$0xff]
  %v2122 = vld [vmem:[%s3 + $0xb8] sm:$0xff]
  %v2123 = vld [vmem:[%s3 + $0xc0] sm:$0xff]
  %v2124 = vld [vmem:[%s3 + $0xc8] sm:$0xff]
  %v2125 = vld [vmem:[%s3 + $0xd0] sm:$0xff]
  %v2126 = vld [vmem:[%s3 + $0xd8] sm:$0xff]
  %v2127 = vld [vmem:[%s3 + $0xe0] sm:$0xff]
  %v2128 = vld [vmem:[%s3 + $0xe8] sm:$0xff]
  %v2129 = vld [vmem:[%s3 + $0xf0] sm:$0xff]
  %v2130 = vld [vmem:[%s3 + $0xf8] sm:$0xff]
  %2131 = vmatpush.msra.mxu0 %v2130
  %2132 = vmatpush.msra.mxu0 %v2129
  %2133 = vmatpush.msra.mxu0 %v2128
  %2134 = vmatpush.msra.mxu0 %v2127
  %2135 = vmatpush.msra.mxu0 %v2126
  %2136 = vmatpush.msra.mxu0 %v2125
  %2137 = vmatpush.msra.mxu0 %v2124
  %2138 = vmatpush.msra.mxu0 %v2123
  %2139 = vmatpush.msra.mxu0 %v2122
  %2140 = vmatpush.msra.mxu0 %v2121
  %2141 = vmatpush.msra.mxu0 %v2120
  %2142 = vmatpush.msra.mxu0 %v2119
  %2143 = vmatpush.msra.mxu0 %v2118
  %2144 = vmatpush.msra.mxu0 %v2117
  %2145 = vmatpush.msra.mxu0 %v2116
  %2146 = vmatpush.msra.mxu0 %v2115
  %2147 = vmatmul.f32.gmra.mxu0 %v2083
  %v2148 = vpop.f32.mrf.mxu0
  %v2149 = vadd.f32 0.0, %v2148
  %2150 = vmatmul.f32.gmra.mxu0 %v2084
  %v2151 = vpop.f32.mrf.mxu0
  %v2152 = vadd.f32 0.0, %v2151
  %2153 = vmatmul.f32.gmra.mxu0 %v2085
  %v2154 = vpop.f32.mrf.mxu0
  %v2155 = vadd.f32 0.0, %v2154
  %2156 = vmatmul.f32.gmra.mxu0 %v2086
  %v2157 = vpop.f32.mrf.mxu0
  %v2158 = vadd.f32 0.0, %v2157
  %2159 = vmatmul.f32.gmra.mxu0 %v2087
  %v2160 = vpop.f32.mrf.mxu0
  %v2161 = vadd.f32 0.0, %v2160
  %2162 = vmatmul.f32.gmra.mxu0 %v2088
  %v2163 = vpop.f32.mrf.mxu0
  %v2164 = vadd.f32 0.0, %v2163
  %2165 = vmatmul.f32.gmra.mxu0 %v2089
  %v2166 = vpop.f32.mrf.mxu0
  %v2167 = vadd.f32 0.0, %v2166
  %2168 = vmatmul.f32.gmra.mxu0 %v2090
  %v2169 = vpop.f32.mrf.mxu0
  %v2170 = vadd.f32 0.0, %v2169
  %2171 = vmatmul.f32.gmra.mxu0 %v2091
  %v2172 = vpop.f32.mrf.mxu0
  %v2173 = vadd.f32 0.0, %v2172
  %2174 = vmatmul.f32.gmra.mxu0 %v2092
  %v2175 = vpop.f32.mrf.mxu0
  %v2176 = vadd.f32 0.0, %v2175
  %2177 = vmatmul.f32.gmra.mxu0 %v2093
  %v2178 = vpop.f32.mrf.mxu0
  %v2179 = vadd.f32 0.0, %v2178
  %2180 = vmatmul.f32.gmra.mxu0 %v2094
  %v2181 = vpop.f32.mrf.mxu0
  %v2182 = vadd.f32 0.0, %v2181
  %2183 = vmatmul.f32.gmra.mxu0 %v2095
  %v2184 = vpop.f32.mrf.mxu0
  %v2185 = vadd.f32 0.0, %v2184
  %2186 = vmatmul.f32.gmra.mxu0 %v2096
  %v2187 = vpop.f32.mrf.mxu0
  %v2188 = vadd.f32 0.0, %v2187
  %2189 = vmatmul.f32.gmra.mxu0 %v2097
  %v2190 = vpop.f32.mrf.mxu0
  %v2191 = vadd.f32 0.0, %v2190
  %2192 = vmatmul.f32.gmra.mxu0 %v2098
  %v2193 = vpop.f32.mrf.mxu0
  %v2194 = vadd.f32 0.0, %v2193
  %2195 = vmatmul.f32.gmra.mxu0 %v2099
  %v2196 = vpop.f32.mrf.mxu0
  %v2197 = vadd.f32 0.0, %v2196
  %2198 = vmatmul.f32.gmra.mxu0 %v2100
  %v2199 = vpop.f32.mrf.mxu0
  %v2200 = vadd.f32 0.0, %v2199
  %2201 = vmatmul.f32.gmra.mxu0 %v2101
  %v2202 = vpop.f32.mrf.mxu0
  %v2203 = vadd.f32 0.0, %v2202
  %2204 = vmatmul.f32.gmra.mxu0 %v2102
  %v2205 = vpop.f32.mrf.mxu0
  %v2206 = vadd.f32 0.0, %v2205
  %2207 = vmatmul.f32.gmra.mxu0 %v2103
  %v2208 = vpop.f32.mrf.mxu0
  %v2209 = vadd.f32 0.0, %v2208
  %2210 = vmatmul.f32.gmra.mxu0 %v2104
  %v2211 = vpop.f32.mrf.mxu0
  %v2212 = vadd.f32 0.0, %v2211
  %2213 = vmatmul.f32.gmra.mxu0 %v2105
  %v2214 = vpop.f32.mrf.mxu0
  %v2215 = vadd.f32 0.0, %v2214
  %2216 = vmatmul.f32.gmra.mxu0 %v2106
  %v2217 = vpop.f32.mrf.mxu0
  %v2218 = vadd.f32 0.0, %v2217
  %2219 = vmatmul.f32.gmra.mxu0 %v2107
  %v2220 = vpop.f32.mrf.mxu0
  %v2221 = vadd.f32 0.0, %v2220
  %2222 = vmatmul.f32.gmra.mxu0 %v2108
  %v2223 = vpop.f32.mrf.mxu0
  %v2224 = vadd.f32 0.0, %v2223
  %2225 = vmatmul.f32.gmra.mxu0 %v2109
  %v2226 = vpop.f32.mrf.mxu0
  %v2227 = vadd.f32 0.0, %v2226
  %2228 = vmatmul.f32.gmra.mxu0 %v2110
  %v2229 = vpop.f32.mrf.mxu0
  %v2230 = vadd.f32 0.0, %v2229
  %2231 = vmatmul.f32.gmra.mxu0 %v2111
  %v2232 = vpop.f32.mrf.mxu0
  %v2233 = vadd.f32 0.0, %v2232
  %2234 = vmatmul.f32.gmra.mxu0 %v2112
  %v2235 = vpop.f32.mrf.mxu0
  %v2236 = vadd.f32 0.0, %v2235
  %2237 = vmatmul.f32.gmra.mxu0 %v2113
  %v2238 = vpop.f32.mrf.mxu0
  %v2239 = vadd.f32 0.0, %v2238
  %2240 = vmatmul.f32.gmra.mxu0 %v2114
  %v2241 = vpop.f32.mrf.mxu0
  %v2242 = vadd.f32 0.0, %v2241
  %2243 = vdwg.mxu0
  %v2244 = vadd.f32 %v2051, %v2149
  %v2245 = vadd.f32 %v2052, %v2152
  %v2246 = vadd.f32 %v2053, %v2155
  %v2247 = vadd.f32 %v2054, %v2158
  %v2248 = vadd.f32 %v2055, %v2161
  %v2249 = vadd.f32 %v2056, %v2164
  %v2250 = vadd.f32 %v2057, %v2167
  %v2251 = vadd.f32 %v2058, %v2170
  %v2252 = vadd.f32 %v2059, %v2173
  %v2253 = vadd.f32 %v2060, %v2176
  %v2254 = vadd.f32 %v2061, %v2179
  %v2255 = vadd.f32 %v2062, %v2182
  %v2256 = vadd.f32 %v2063, %v2185
  %v2257 = vadd.f32 %v2064, %v2188
  %v2258 = vadd.f32 %v2065, %v2191
  %v2259 = vadd.f32 %v2066, %v2194
  %v2260 = vadd.f32 %v2067, %v2197
  %v2261 = vadd.f32 %v2068, %v2200
  %v2262 = vadd.f32 %v2069, %v2203
  %v2263 = vadd.f32 %v2070, %v2206
  %v2264 = vadd.f32 %v2071, %v2209
  %v2265 = vadd.f32 %v2072, %v2212
  %v2266 = vadd.f32 %v2073, %v2215
  %v2267 = vadd.f32 %v2074, %v2218
  %v2268 = vadd.f32 %v2075, %v2221
  %v2269 = vadd.f32 %v2076, %v2224
  %v2270 = vadd.f32 %v2077, %v2227
  %v2271 = vadd.f32 %v2078, %v2230
  %v2272 = vadd.f32 %v2079, %v2233
  %v2273 = vadd.f32 %v2080, %v2236
  %v2274 = vadd.f32 %v2081, %v2239
  %v2275 = vadd.f32 %v2082, %v2242
  %2276 = vst.msk [vmem:[#allocation3] sm:$0xff] %vm2018, %v2244
  %2277 = vst.msk [vmem:[#allocation3 + $0x8] sm:$0xff] %vm2018, %v2245
  %2278 = vst.msk [vmem:[#allocation3 + $0x10] sm:$0xff] %vm2018, %v2246
  %2279 = vst.msk [vmem:[#allocation3 + $0x18] sm:$0xff] %vm2018, %v2247
  %2280 = vst.msk [vmem:[#allocation3 + $0x20] sm:$0xff] %vm2018, %v2248
  %2281 = vst.msk [vmem:[#allocation3 + $0x28] sm:$0xff] %vm2018, %v2249
  %2282 = vst.msk [vmem:[#allocation3 + $0x30] sm:$0xff] %vm2018, %v2250
  %2283 = vst.msk [vmem:[#allocation3 + $0x38] sm:$0xff] %vm2018, %v2251
  %2284 = vst.msk [vmem:[#allocation3 + $0x40] sm:$0xff] %vm2018, %v2252
  %2285 = vst.msk [vmem:[#allocation3 + $0x48] sm:$0xff] %vm2018, %v2253
  %2286 = vst.msk [vmem:[#allocation3 + $0x50] sm:$0xff] %vm2018, %v2254
  %2287 = vst.msk [vmem:[#allocation3 + $0x58] sm:$0xff] %vm2018, %v2255
  %2288 = vst.msk [vmem:[#allocation3 + $0x60] sm:$0xff] %vm2018, %v2256
  %2289 = vst.msk [vmem:[#allocation3 + $0x68] sm:$0xff] %vm2018, %v2257
  %2290 = vst.msk [vmem:[#allocation3 + $0x70] sm:$0xff] %vm2018, %v2258
  %2291 = vst.msk [vmem:[#allocation3 + $0x78] sm:$0xff] %vm2018, %v2259
  %2292 = vst.msk [vmem:[#allocation3 + $0x80] sm:$0xff] %vm2018, %v2260
  %2293 = vst.msk [vmem:[#allocation3 + $0x88] sm:$0xff] %vm2018, %v2261
  %2294 = vst.msk [vmem:[#allocation3 + $0x90] sm:$0xff] %vm2018, %v2262
  %2295 = vst.msk [vmem:[#allocation3 + $0x98] sm:$0xff] %vm2018, %v2263
  %2296 = vst.msk [vmem:[#allocation3 + $0xa0] sm:$0xff] %vm2018, %v2264
  %2297 = vst.msk [vmem:[#allocation3 + $0xa8] sm:$0xff] %vm2018, %v2265
  %2298 = vst.msk [vmem:[#allocation3 + $0xb0] sm:$0xff] %vm2018, %v2266
  %2299 = vst.msk [vmem:[#allocation3 + $0xb8] sm:$0xff] %vm2018, %v2267
  %2300 = vst.msk [vmem:[#allocation3 + $0xc0] sm:$0xff] %vm2018, %v2268
  %2301 = vst.msk [vmem:[#allocation3 + $0xc8] sm:$0xff] %vm2018, %v2269
  %2302 = vst.msk [vmem:[#allocation3 + $0xd0] sm:$0xff] %vm2018, %v2270
  %2303 = vst.msk [vmem:[#allocation3 + $0xd8] sm:$0xff] %vm2018, %v2271
  %2304 = vst.msk [vmem:[#allocation3 + $0xe0] sm:$0xff] %vm2018, %v2272
  %2305 = vst.msk [vmem:[#allocation3 + $0xe8] sm:$0xff] %vm2018, %v2273
  %2306 = vst.msk [vmem:[#allocation3 + $0xf0] sm:$0xff] %vm2018, %v2274
  %2307 = vst.msk [vmem:[#allocation3 + $0xf8] sm:$0xff] %vm2018, %v2275
  %v2308 = vld [vmem:[#allocation3] sm:$0xff]
  %v2309 = vld [vmem:[#allocation3 + $0x8] sm:$0xff]
  %v2310 = vld [vmem:[#allocation3 + $0x10] sm:$0xff]
  %v2311 = vld [vmem:[#allocation3 + $0x18] sm:$0xff]
  %v2312 = vld [vmem:[#allocation3 + $0x20] sm:$0xff]
  %v2313 = vld [vmem:[#allocation3 + $0x28] sm:$0xff]
  %v2314 = vld [vmem:[#allocation3 + $0x30] sm:$0xff]
  %v2315 = vld [vmem:[#allocation3 + $0x38] sm:$0xff]
  %v2316 = vld [vmem:[#allocation3 + $0x40] sm:$0xff]
  %v2317 = vld [vmem:[#allocation3 + $0x48] sm:$0xff]
  %v2318 = vld [vmem:[#allocation3 + $0x50] sm:$0xff]
  %v2319 = vld [vmem:[#allocation3 + $0x58] sm:$0xff]
  %v2320 = vld [vmem:[#allocation3 + $0x60] sm:$0xff]
  %v2321 = vld [vmem:[#allocation3 + $0x68] sm:$0xff]
  %v2322 = vld [vmem:[#allocation3 + $0x70] sm:$0xff]
  %v2323 = vld [vmem:[#allocation3 + $0x78] sm:$0xff]
  %v2324 = vld [vmem:[#allocation3 + $0x80] sm:$0xff]
  %v2325 = vld [vmem:[#allocation3 + $0x88] sm:$0xff]
  %v2326 = vld [vmem:[#allocation3 + $0x90] sm:$0xff]
  %v2327 = vld [vmem:[#allocation3 + $0x98] sm:$0xff]
  %v2328 = vld [vmem:[#allocation3 + $0xa0] sm:$0xff]
  %v2329 = vld [vmem:[#allocation3 + $0xa8] sm:$0xff]
  %v2330 = vld [vmem:[#allocation3 + $0xb0] sm:$0xff]
  %v2331 = vld [vmem:[#allocation3 + $0xb8] sm:$0xff]
  %v2332 = vld [vmem:[#allocation3 + $0xc0] sm:$0xff]
  %v2333 = vld [vmem:[#allocation3 + $0xc8] sm:$0xff]
  %v2334 = vld [vmem:[#allocation3 + $0xd0] sm:$0xff]
  %v2335 = vld [vmem:[#allocation3 + $0xd8] sm:$0xff]
  %v2336 = vld [vmem:[#allocation3 + $0xe0] sm:$0xff]
  %v2337 = vld [vmem:[#allocation3 + $0xe8] sm:$0xff]
  %v2338 = vld [vmem:[#allocation3 + $0xf0] sm:$0xff]
  %v2339 = vld [vmem:[#allocation3 + $0xf8] sm:$0xff]
  %v2340 = vld [vmem:[#allocation2 + $0x2] sm:$0xff]
  %v2341 = vld [vmem:[#allocation2 + $0xa] sm:$0xff]
  %v2342 = vld [vmem:[#allocation2 + $0x12] sm:$0xff]
  %v2343 = vld [vmem:[#allocation2 + $0x1a] sm:$0xff]
  %v2344 = vld [vmem:[#allocation2 + $0x22] sm:$0xff]
  %v2345 = vld [vmem:[#allocation2 + $0x2a] sm:$0xff]
  %v2346 = vld [vmem:[#allocation2 + $0x32] sm:$0xff]
  %v2347 = vld [vmem:[#allocation2 + $0x3a] sm:$0xff]
  %v2348 = vld [vmem:[#allocation2 + $0x42] sm:$0xff]
  %v2349 = vld [vmem:[#allocation2 + $0x4a] sm:$0xff]
  %v2350 = vld [vmem:[#allocation2 + $0x52] sm:$0xff]
  %v2351 = vld [vmem:[#allocation2 + $0x5a] sm:$0xff]
  %v2352 = vld [vmem:[#allocation2 + $0x62] sm:$0xff]
  %v2353 = vld [vmem:[#allocation2 + $0x6a] sm:$0xff]
  %v2354 = vld [vmem:[#allocation2 + $0x72] sm:$0xff]
  %v2355 = vld [vmem:[#allocation2 + $0x7a] sm:$0xff]
  %v2356 = vld [vmem:[#allocation2 + $0x82] sm:$0xff]
  %v2357 = vld [vmem:[#allocation2 + $0x8a] sm:$0xff]
  %v2358 = vld [vmem:[#allocation2 + $0x92] sm:$0xff]
  %v2359 = vld [vmem:[#allocation2 + $0x9a] sm:$0xff]
  %v2360 = vld [vmem:[#allocation2 + $0xa2] sm:$0xff]
  %v2361 = vld [vmem:[#allocation2 + $0xaa] sm:$0xff]
  %v2362 = vld [vmem:[#allocation2 + $0xb2] sm:$0xff]
  %v2363 = vld [vmem:[#allocation2 + $0xba] sm:$0xff]
  %v2364 = vld [vmem:[#allocation2 + $0xc2] sm:$0xff]
  %v2365 = vld [vmem:[#allocation2 + $0xca] sm:$0xff]
  %v2366 = vld [vmem:[#allocation2 + $0xd2] sm:$0xff]
  %v2367 = vld [vmem:[#allocation2 + $0xda] sm:$0xff]
  %v2368 = vld [vmem:[#allocation2 + $0xe2] sm:$0xff]
  %v2369 = vld [vmem:[#allocation2 + $0xea] sm:$0xff]
  %v2370 = vld [vmem:[#allocation2 + $0xf2] sm:$0xff]
  %v2371 = vld [vmem:[#allocation2 + $0xfa] sm:$0xff]
  %v2372 = vld [vmem:[%s3 + $0x100] sm:$0xff]
  %v2373 = vld [vmem:[%s3 + $0x108] sm:$0xff]
  %v2374 = vld [vmem:[%s3 + $0x110] sm:$0xff]
  %v2375 = vld [vmem:[%s3 + $0x118] sm:$0xff]
  %v2376 = vld [vmem:[%s3 + $0x120] sm:$0xff]
  %v2377 = vld [vmem:[%s3 + $0x128] sm:$0xff]
  %v2378 = vld [vmem:[%s3 + $0x130] sm:$0xff]
  %v2379 = vld [vmem:[%s3 + $0x138] sm:$0xff]
  %v2380 = vld [vmem:[%s3 + $0x140] sm:$0xff]
  %v2381 = vld [vmem:[%s3 + $0x148] sm:$0xff]
  %v2382 = vld [vmem:[%s3 + $0x150] sm:$0xff]
  %v2383 = vld [vmem:[%s3 + $0x158] sm:$0xff]
  %v2384 = vld [vmem:[%s3 + $0x160] sm:$0xff]
  %v2385 = vld [vmem:[%s3 + $0x168] sm:$0xff]
  %v2386 = vld [vmem:[%s3 + $0x170] sm:$0xff]
  %v2387 = vld [vmem:[%s3 + $0x178] sm:$0xff]
  %2388 = vmatpush.msra.mxu0 %v2387
  %2389 = vmatpush.msra.mxu0 %v2386
  %2390 = vmatpush.msra.mxu0 %v2385
  %2391 = vmatpush.msra.mxu0 %v2384
  %2392 = vmatpush.msra.mxu0 %v2383
  %2393 = vmatpush.msra.mxu0 %v2382
  %2394 = vmatpush.msra.mxu0 %v2381
  %2395 = vmatpush.msra.mxu0 %v2380
  %2396 = vmatpush.msra.mxu0 %v2379
  %2397 = vmatpush.msra.mxu0 %v2378
  %2398 = vmatpush.msra.mxu0 %v2377
  %2399 = vmatpush.msra.mxu0 %v2376
  %2400 = vmatpush.msra.mxu0 %v2375
  %2401 = vmatpush.msra.mxu0 %v2374
  %2402 = vmatpush.msra.mxu0 %v2373
  %2403 = vmatpush.msra.mxu0 %v2372
  %2404 = vmatmul.f32.gmra.mxu0 %v2340
  %v2405 = vpop.f32.mrf.mxu0
  %v2406 = vadd.f32 0.0, %v2405
  %2407 = vmatmul.f32.gmra.mxu0 %v2341
  %v2408 = vpop.f32.mrf.mxu0
  %v2409 = vadd.f32 0.0, %v2408
  %2410 = vmatmul.f32.gmra.mxu0 %v2342
  %v2411 = vpop.f32.mrf.mxu0
  %v2412 = vadd.f32 0.0, %v2411
  %2413 = vmatmul.f32.gmra.mxu0 %v2343
  %v2414 = vpop.f32.mrf.mxu0
  %v2415 = vadd.f32 0.0, %v2414
  %2416 = vmatmul.f32.gmra.mxu0 %v2344
  %v2417 = vpop.f32.mrf.mxu0
  %v2418 = vadd.f32 0.0, %v2417
  %2419 = vmatmul.f32.gmra.mxu0 %v2345
  %v2420 = vpop.f32.mrf.mxu0
  %v2421 = vadd.f32 0.0, %v2420
  %2422 = vmatmul.f32.gmra.mxu0 %v2346
  %v2423 = vpop.f32.mrf.mxu0
  %v2424 = vadd.f32 0.0, %v2423
  %2425 = vmatmul.f32.gmra.mxu0 %v2347
  %v2426 = vpop.f32.mrf.mxu0
  %v2427 = vadd.f32 0.0, %v2426
  %2428 = vmatmul.f32.gmra.mxu0 %v2348
  %v2429 = vpop.f32.mrf.mxu0
  %v2430 = vadd.f32 0.0, %v2429
  %2431 = vmatmul.f32.gmra.mxu0 %v2349
  %v2432 = vpop.f32.mrf.mxu0
  %v2433 = vadd.f32 0.0, %v2432
  %2434 = vmatmul.f32.gmra.mxu0 %v2350
  %v2435 = vpop.f32.mrf.mxu0
  %v2436 = vadd.f32 0.0, %v2435
  %2437 = vmatmul.f32.gmra.mxu0 %v2351
  %v2438 = vpop.f32.mrf.mxu0
  %v2439 = vadd.f32 0.0, %v2438
  %2440 = vmatmul.f32.gmra.mxu0 %v2352
  %v2441 = vpop.f32.mrf.mxu0
  %v2442 = vadd.f32 0.0, %v2441
  %2443 = vmatmul.f32.gmra.mxu0 %v2353
  %v2444 = vpop.f32.mrf.mxu0
  %v2445 = vadd.f32 0.0, %v2444
  %2446 = vmatmul.f32.gmra.mxu0 %v2354
  %v2447 = vpop.f32.mrf.mxu0
  %v2448 = vadd.f32 0.0, %v2447
  %2449 = vmatmul.f32.gmra.mxu0 %v2355
  %v2450 = vpop.f32.mrf.mxu0
  %v2451 = vadd.f32 0.0, %v2450
  %2452 = vmatmul.f32.gmra.mxu0 %v2356
  %v2453 = vpop.f32.mrf.mxu0
  %v2454 = vadd.f32 0.0, %v2453
  %2455 = vmatmul.f32.gmra.mxu0 %v2357
  %v2456 = vpop.f32.mrf.mxu0
  %v2457 = vadd.f32 0.0, %v2456
  %2458 = vmatmul.f32.gmra.mxu0 %v2358
  %v2459 = vpop.f32.mrf.mxu0
  %v2460 = vadd.f32 0.0, %v2459
  %2461 = vmatmul.f32.gmra.mxu0 %v2359
  %v2462 = vpop.f32.mrf.mxu0
  %v2463 = vadd.f32 0.0, %v2462
  %2464 = vmatmul.f32.gmra.mxu0 %v2360
  %v2465 = vpop.f32.mrf.mxu0
  %v2466 = vadd.f32 0.0, %v2465
  %2467 = vmatmul.f32.gmra.mxu0 %v2361
  %v2468 = vpop.f32.mrf.mxu0
  %v2469 = vadd.f32 0.0, %v2468
  %2470 = vmatmul.f32.gmra.mxu0 %v2362
  %v2471 = vpop.f32.mrf.mxu0
  %v2472 = vadd.f32 0.0, %v2471
  %2473 = vmatmul.f32.gmra.mxu0 %v2363
  %v2474 = vpop.f32.mrf.mxu0
  %v2475 = vadd.f32 0.0, %v2474
  %2476 = vmatmul.f32.gmra.mxu0 %v2364
  %v2477 = vpop.f32.mrf.mxu0
  %v2478 = vadd.f32 0.0, %v2477
  %2479 = vmatmul.f32.gmra.mxu0 %v2365
  %v2480 = vpop.f32.mrf.mxu0
  %v2481 = vadd.f32 0.0, %v2480
  %2482 = vmatmul.f32.gmra.mxu0 %v2366
  %v2483 = vpop.f32.mrf.mxu0
  %v2484 = vadd.f32 0.0, %v2483
  %2485 = vmatmul.f32.gmra.mxu0 %v2367
  %v2486 = vpop.f32.mrf.mxu0
  %v2487 = vadd.f32 0.0, %v2486
  %2488 = vmatmul.f32.gmra.mxu0 %v2368
  %v2489 = vpop.f32.mrf.mxu0
  %v2490 = vadd.f32 0.0, %v2489
  %2491 = vmatmul.f32.gmra.mxu0 %v2369
  %v2492 = vpop.f32.mrf.mxu0
  %v2493 = vadd.f32 0.0, %v2492
  %2494 = vmatmul.f32.gmra.mxu0 %v2370
  %v2495 = vpop.f32.mrf.mxu0
  %v2496 = vadd.f32 0.0, %v2495
  %2497 = vmatmul.f32.gmra.mxu0 %v2371
  %v2498 = vpop.f32.mrf.mxu0
  %v2499 = vadd.f32 0.0, %v2498
  %2500 = vdwg.mxu0
  %v2501 = vadd.f32 %v2308, %v2406
  %v2502 = vadd.f32 %v2309, %v2409
  %v2503 = vadd.f32 %v2310, %v2412
  %v2504 = vadd.f32 %v2311, %v2415
  %v2505 = vadd.f32 %v2312, %v2418
  %v2506 = vadd.f32 %v2313, %v2421
  %v2507 = vadd.f32 %v2314, %v2424
  %v2508 = vadd.f32 %v2315, %v2427
  %v2509 = vadd.f32 %v2316, %v2430
  %v2510 = vadd.f32 %v2317, %v2433
  %v2511 = vadd.f32 %v2318, %v2436
  %v2512 = vadd.f32 %v2319, %v2439
  %v2513 = vadd.f32 %v2320, %v2442
  %v2514 = vadd.f32 %v2321, %v2445
  %v2515 = vadd.f32 %v2322, %v2448
  %v2516 = vadd.f32 %v2323, %v2451
  %v2517 = vadd.f32 %v2324, %v2454
  %v2518 = vadd.f32 %v2325, %v2457
  %v2519 = vadd.f32 %v2326, %v2460
  %v2520 = vadd.f32 %v2327, %v2463
  %v2521 = vadd.f32 %v2328, %v2466
  %v2522 = vadd.f32 %v2329, %v2469
  %v2523 = vadd.f32 %v2330, %v2472
  %v2524 = vadd.f32 %v2331, %v2475
  %v2525 = vadd.f32 %v2332, %v2478
  %v2526 = vadd.f32 %v2333, %v2481
  %v2527 = vadd.f32 %v2334, %v2484
  %v2528 = vadd.f32 %v2335, %v2487
  %v2529 = vadd.f32 %v2336, %v2490
  %v2530 = vadd.f32 %v2337, %v2493
  %v2531 = vadd.f32 %v2338, %v2496
  %v2532 = vadd.f32 %v2339, %v2499
  %2533 = vst.msk [vmem:[#allocation3] sm:$0xff] %vm2018, %v2501
  %2534 = vst.msk [vmem:[#allocation3 + $0x8] sm:$0xff] %vm2018, %v2502
  %2535 = vst.msk [vmem:[#allocation3 + $0x10] sm:$0xff] %vm2018, %v2503
  %2536 = vst.msk [vmem:[#allocation3 + $0x18] sm:$0xff] %vm2018, %v2504
  %2537 = vst.msk [vmem:[#allocation3 + $0x20] sm:$0xff] %vm2018, %v2505
  %2538 = vst.msk [vmem:[#allocation3 + $0x28] sm:$0xff] %vm2018, %v2506
  %2539 = vst.msk [vmem:[#allocation3 + $0x30] sm:$0xff] %vm2018, %v2507
  %2540 = vst.msk [vmem:[#allocation3 + $0x38] sm:$0xff] %vm2018, %v2508
  %2541 = vst.msk [vmem:[#allocation3 + $0x40] sm:$0xff] %vm2018, %v2509
  %2542 = vst.msk [vmem:[#allocation3 + $0x48] sm:$0xff] %vm2018, %v2510
  %2543 = vst.msk [vmem:[#allocation3 + $0x50] sm:$0xff] %vm2018, %v2511
  %2544 = vst.msk [vmem:[#allocation3 + $0x58] sm:$0xff] %vm2018, %v2512
  %2545 = vst.msk [vmem:[#allocation3 + $0x60] sm:$0xff] %vm2018, %v2513
  %2546 = vst.msk [vmem:[#allocation3 + $0x68] sm:$0xff] %vm2018, %v2514
  %2547 = vst.msk [vmem:[#allocation3 + $0x70] sm:$0xff] %vm2018, %v2515
  %2548 = vst.msk [vmem:[#allocation3 + $0x78] sm:$0xff] %vm2018, %v2516
  %2549 = vst.msk [vmem:[#allocation3 + $0x80] sm:$0xff] %vm2018, %v2517
  %2550 = vst.msk [vmem:[#allocation3 + $0x88] sm:$0xff] %vm2018, %v2518
  %2551 = vst.msk [vmem:[#allocation3 + $0x90] sm:$0xff] %vm2018, %v2519
  %2552 = vst.msk [vmem:[#allocation3 + $0x98] sm:$0xff] %vm2018, %v2520
  %2553 = vst.msk [vmem:[#allocation3 + $0xa0] sm:$0xff] %vm2018, %v2521
  %2554 = vst.msk [vmem:[#allocation3 + $0xa8] sm:$0xff] %vm2018, %v2522
  %2555 = vst.msk [vmem:[#allocation3 + $0xb0] sm:$0xff] %vm2018, %v2523
  %2556 = vst.msk [vmem:[#allocation3 + $0xb8] sm:$0xff] %vm2018, %v2524
  %2557 = vst.msk [vmem:[#allocation3 + $0xc0] sm:$0xff] %vm2018, %v2525
  %2558 = vst.msk [vmem:[#allocation3 + $0xc8] sm:$0xff] %vm2018, %v2526
  %2559 = vst.msk [vmem:[#allocation3 + $0xd0] sm:$0xff] %vm2018, %v2527
  %2560 = vst.msk [vmem:[#allocation3 + $0xd8] sm:$0xff] %vm2018, %v2528
  %2561 = vst.msk [vmem:[#allocation3 + $0xe0] sm:$0xff] %vm2018, %v2529
  %2562 = vst.msk [vmem:[#allocation3 + $0xe8] sm:$0xff] %vm2018, %v2530
  %2563 = vst.msk [vmem:[#allocation3 + $0xf0] sm:$0xff] %vm2018, %v2531
  %2564 = vst.msk [vmem:[#allocation3 + $0xf8] sm:$0xff] %vm2018, %v2532
  %v2565 = vld [vmem:[#allocation3] sm:$0xff]
  %v2566 = vld [vmem:[#allocation3 + $0x8] sm:$0xff]
  %v2567 = vld [vmem:[#allocation3 + $0x10] sm:$0xff]
  %v2568 = vld [vmem:[#allocation3 + $0x18] sm:$0xff]
  %v2569 = vld [vmem:[#allocation3 + $0x20] sm:$0xff]
  %v2570 = vld [vmem:[#allocation3 + $0x28] sm:$0xff]
  %v2571 = vld [vmem:[#allocation3 + $0x30] sm:$0xff]
  %v2572 = vld [vmem:[#allocation3 + $0x38] sm:$0xff]
  %v2573 = vld [vmem:[#allocation3 + $0x40] sm:$0xff]
  %v2574 = vld [vmem:[#allocation3 + $0x48] sm:$0xff]
  %v2575 = vld [vmem:[#allocation3 + $0x50] sm:$0xff]
  %v2576 = vld [vmem:[#allocation3 + $0x58] sm:$0xff]
  %v2577 = vld [vmem:[#allocation3 + $0x60] sm:$0xff]
  %v2578 = vld [vmem:[#allocation3 + $0x68] sm:$0xff]
  %v2579 = vld [vmem:[#allocation3 + $0x70] sm:$0xff]
  %v2580 = vld [vmem:[#allocation3 + $0x78] sm:$0xff]
  %v2581 = vld [vmem:[#allocation3 + $0x80] sm:$0xff]
  %v2582 = vld [vmem:[#allocation3 + $0x88] sm:$0xff]
  %v2583 = vld [vmem:[#allocation3 + $0x90] sm:$0xff]
  %v2584 = vld [vmem:[#allocation3 + $0x98] sm:$0xff]
  %v2585 = vld [vmem:[#allocation3 + $0xa0] sm:$0xff]
  %v2586 = vld [vmem:[#allocation3 + $0xa8] sm:$0xff]
  %v2587 = vld [vmem:[#allocation3 + $0xb0] sm:$0xff]
  %v2588 = vld [vmem:[#allocation3 + $0xb8] sm:$0xff]
  %v2589 = vld [vmem:[#allocation3 + $0xc0] sm:$0xff]
  %v2590 = vld [vmem:[#allocation3 + $0xc8] sm:$0xff]
  %v2591 = vld [vmem:[#allocation3 + $0xd0] sm:$0xff]
  %v2592 = vld [vmem:[#allocation3 + $0xd8] sm:$0xff]
  %v2593 = vld [vmem:[#allocation3 + $0xe0] sm:$0xff]
  %v2594 = vld [vmem:[#allocation3 + $0xe8] sm:$0xff]
  %2623 = vrot.lane.b32.xlu0 %v2567, 96
  %v2624 = vpop.permute.xlu0 %2623
  %2625 = vrot.lane.b32.xlu0 %v2568, 96
  %v2626 = vpop.permute.xlu0 %2625
  %2627 = vrot.lane.b32.xlu0 %v2569, 96
  %v2628 = vpop.permute.xlu0 %2627
  %2629 = vrot.lane.b32.xlu0 %v2570, 96
  %v2630 = vpop.permute.xlu0 %2629
  %2631 = vrot.lane.b32.xlu0 %v2571, 96
  %v2632 = vpop.permute.xlu0 %2631
  %2633 = vrot.lane.b32.xlu0 %v2572, 96
  %v2634 = vpop.permute.xlu0 %2633
  %2635 = vrot.lane.b32.xlu0 %v2573, 96
  %v2636 = vpop.permute.xlu0 %2635
  %2637 = vrot.lane.b32.xlu0 %v2574, 96
  %v2638 = vpop.permute.xlu0 %2637
  %2639 = vrot.lane.b32.xlu0 %v2575, 96
  %v2640 = vpop.permute.xlu0 %2639
  %2641 = vrot.lane.b32.xlu0 %v2576, 96
  %v2642 = vpop.permute.xlu0 %2641
  %2643 = vrot.lane.b32.xlu0 %v2577, 96
  %v2644 = vpop.permute.xlu0 %2643
  %2645 = vrot.lane.b32.xlu0 %v2578, 96
  %v2646 = vpop.permute.xlu0 %2645
  %2647 = vrot.lane.b32.xlu0 %v2579, 96
  %v2648 = vpop.permute.xlu0 %2647
  %2649 = vrot.lane.b32.xlu0 %v2580, 96
  %v2650 = vpop.permute.xlu0 %2649
  %2651 = vrot.lane.b32.xlu0 %v2581, 96
  %v2652 = vpop.permute.xlu0 %2651
  %2653 = vrot.lane.b32.xlu0 %v2582, 96
  %v2654 = vpop.permute.xlu0 %2653
  %2655 = vrot.lane.b32.xlu0 %v2583, 96
  %v2656 = vpop.permute.xlu0 %2655
  %2657 = vrot.lane.b32.xlu0 %v2584, 96
  %v2658 = vpop.permute.xlu0 %2657
  %2659 = vrot.lane.b32.xlu0 %v2585, 96
  %v2660 = vpop.permute.xlu0 %2659
  %2661 = vrot.lane.b32.xlu0 %v2586, 96
  %v2662 = vpop.permute.xlu0 %2661
  %2663 = vrot.lane.b32.xlu0 %v2587, 96
  %v2664 = vpop.permute.xlu0 %2663
  %2665 = vrot.lane.b32.xlu0 %v2588, 96
  %v2666 = vpop.permute.xlu0 %2665
  %2667 = vrot.lane.b32.xlu0 %v2589, 96
  %v2668 = vpop.permute.xlu0 %2667
  %2669 = vrot.lane.b32.xlu0 %v2590, 96
  %v2670 = vpop.permute.xlu0 %2669
  %2671 = vrot.lane.b32.xlu0 %v2591, 96
  %v2672 = vpop.permute.xlu0 %2671
  %2673 = vrot.lane.b32.xlu0 %v2592, 96
  %v2674 = vpop.permute.xlu0 %2673
  %2675 = vrot.lane.b32.xlu0 %v2593, 96
  %v2676 = vpop.permute.xlu0 %2675
  %2677 = vrot.lane.b32.xlu0 %v2594, 96
  %v2678 = vpop.permute.xlu0 %2677
  %v2707 = vadd.f32 %v2565, %v2624
  %v2708 = vadd.f32 %v2566, %v2626
  %v2709 = vadd.f32 %v2567, %v2628
  %v2710 = vadd.f32 %v2568, %v2630
  %v2711 = vadd.f32 %v2569, %v2632
  %v2712 = vadd.f32 %v2570, %v2634
  %v2713 = vadd.f32 %v2571, %v2636
  %v2714 = vadd.f32 %v2572, %v2638
  %v2715 = vadd.f32 %v2573, %v2640
  %v2716 = vadd.f32 %v2574, %v2642
  %v2717 = vadd.f32 %v2575, %v2644
  %v2718 = vadd.f32 %v2576, %v2646
  %v2719 = vadd.f32 %v2577, %v2648
  %v2720 = vadd.f32 %v2578, %v2650
  %v2721 = vadd.f32 %v2579, %v2652
  %v2722 = vadd.f32 %v2580, %v2654
  %v2723 = vadd.f32 %v2581, %v2656
  %v2724 = vadd.f32 %v2582, %v2658
  %v2725 = vadd.f32 %v2583, %v2660
  %v2726 = vadd.f32 %v2584, %v2662
  %v2727 = vadd.f32 %v2585, %v2664
  %v2728 = vadd.f32 %v2586, %v2666
  %v2729 = vadd.f32 %v2587, %v2668
  %v2730 = vadd.f32 %v2588, %v2670
  %v2731 = vadd.f32 %v2589, %v2672
  %v2732 = vadd.f32 %v2590, %v2674
  %v2733 = vadd.f32 %v2591, %v2676
  %v2734 = vadd.f32 %v2592, %v2678
  %v2735 = vld [vmem:[#allocation3 + $0xf0] sm:$0xff]
  %v2736 = vld [vmem:[#allocation3 + $0xf8] sm:$0xff]
  %2739 = vrot.lane.b32.xlu0 %v2569, 64
  %v2740 = vpop.permute.xlu0 %2739
  %2741 = vrot.lane.b32.xlu0 %v2570, 64
  %v2742 = vpop.permute.xlu0 %2741
  %2743 = vrot.lane.b32.xlu0 %v2571, 64
  %v2744 = vpop.permute.xlu0 %2743
  %2745 = vrot.lane.b32.xlu0 %v2572, 64
  %v2746 = vpop.permute.xlu0 %2745
  %2747 = vrot.lane.b32.xlu0 %v2573, 64
  %v2748 = vpop.permute.xlu0 %2747
  %2749 = vrot.lane.b32.xlu0 %v2574, 64
  %v2750 = vpop.permute.xlu0 %2749
  %2751 = vrot.lane.b32.xlu0 %v2575, 64
  %v2752 = vpop.permute.xlu0 %2751
  %2753 = vrot.lane.b32.xlu0 %v2576, 64
  %v2754 = vpop.permute.xlu0 %2753
  %2755 = vrot.lane.b32.xlu0 %v2577, 64
  %v2756 = vpop.permute.xlu0 %2755
  %2757 = vrot.lane.b32.xlu0 %v2578, 64
  %v2758 = vpop.permute.xlu0 %2757
  %2759 = vrot.lane.b32.xlu0 %v2579, 64
  %v2760 = vpop.permute.xlu0 %2759
  %2761 = vrot.lane.b32.xlu0 %v2580, 64
  %v2762 = vpop.permute.xlu0 %2761
  %2763 = vrot.lane.b32.xlu0 %v2581, 64
  %v2764 = vpop.permute.xlu0 %2763
  %2765 = vrot.lane.b32.xlu0 %v2582, 64
  %v2766 = vpop.permute.xlu0 %2765
  %2767 = vrot.lane.b32.xlu0 %v2583, 64
  %v2768 = vpop.permute.xlu0 %2767
  %2769 = vrot.lane.b32.xlu0 %v2584, 64
  %v2770 = vpop.permute.xlu0 %2769
  %2771 = vrot.lane.b32.xlu0 %v2585, 64
  %v2772 = vpop.permute.xlu0 %2771
  %2773 = vrot.lane.b32.xlu0 %v2586, 64
  %v2774 = vpop.permute.xlu0 %2773
  %2775 = vrot.lane.b32.xlu0 %v2587, 64
  %v2776 = vpop.permute.xlu0 %2775
  %2777 = vrot.lane.b32.xlu0 %v2588, 64
  %v2778 = vpop.permute.xlu0 %2777
  %2779 = vrot.lane.b32.xlu0 %v2589, 64
  %v2780 = vpop.permute.xlu0 %2779
  %2781 = vrot.lane.b32.xlu0 %v2590, 64
  %v2782 = vpop.permute.xlu0 %2781
  %2783 = vrot.lane.b32.xlu0 %v2591, 64
  %v2784 = vpop.permute.xlu0 %2783
  %2785 = vrot.lane.b32.xlu0 %v2592, 64
  %v2786 = vpop.permute.xlu0 %2785
  %2787 = vrot.lane.b32.xlu0 %v2593, 64
  %v2788 = vpop.permute.xlu0 %2787
  %2789 = vrot.lane.b32.xlu0 %v2594, 64
  %v2790 = vpop.permute.xlu0 %2789
  %2791 = vrot.lane.b32.xlu0 %v2735, 64
  %v2792 = vpop.permute.xlu0 %2791
  %2793 = vrot.lane.b32.xlu0 %v2736, 64
  %v2794 = vpop.permute.xlu0 %2793
  %v2823 = vadd.f32 %v2707, %v2740
  %v2824 = vadd.f32 %v2708, %v2742
  %v2825 = vadd.f32 %v2709, %v2744
  %v2826 = vadd.f32 %v2710, %v2746
  %v2827 = vadd.f32 %v2711, %v2748
  %v2828 = vadd.f32 %v2712, %v2750
  %v2829 = vadd.f32 %v2713, %v2752
  %v2830 = vadd.f32 %v2714, %v2754
  %v2831 = vadd.f32 %v2715, %v2756
  %v2832 = vadd.f32 %v2716, %v2758
  %v2833 = vadd.f32 %v2717, %v2760
  %v2834 = vadd.f32 %v2718, %v2762
  %v2835 = vadd.f32 %v2719, %v2764
  %v2836 = vadd.f32 %v2720, %v2766
  %v2837 = vadd.f32 %v2721, %v2768
  %v2838 = vadd.f32 %v2722, %v2770
  %v2839 = vadd.f32 %v2723, %v2772
  %v2840 = vadd.f32 %v2724, %v2774
  %v2841 = vadd.f32 %v2725, %v2776
  %v2842 = vadd.f32 %v2726, %v2778
  %v2843 = vadd.f32 %v2727, %v2780
  %v2844 = vadd.f32 %v2728, %v2782
  %v2845 = vadd.f32 %v2729, %v2784
  %v2846 = vadd.f32 %v2730, %v2786
  %v2847 = vadd.f32 %v2731, %v2788
  %v2848 = vadd.f32 %v2732, %v2790
  %v2849 = vadd.f32 %v2733, %v2792
  %v2850 = vadd.f32 %v2734, %v2794
  %vm2853 = vcmask 1045504
  %v2854 = vrot.slane %v2825, 2
  %v2855 = vrot.slane %v2826, 2
  %v2856 = vsel %vm2853, %v2854, %v2855
  %vm2862 = vcmask 1043456
  %v2863 = vrot.slane %v2827, 4
  %v2864 = vrot.slane %v2828, 4
  %v2865 = vsel %vm2862, %v2863, %v2864
  %vm2871 = vcmask 1041408
  %v2872 = vrot.slane %v2829, 6
  %v2873 = vrot.slane %v2830, 6
  %v2874 = vsel %vm2871, %v2872, %v2873
  %v2879 = vrot.slane %v2833, 2
  %v2880 = vrot.slane %v2834, 2
  %v2881 = vsel %vm2853, %v2879, %v2880
  %v2887 = vrot.slane %v2835, 4
  %v2888 = vrot.slane %v2836, 4
  %v2889 = vsel %vm2862, %v2887, %v2888
  %v2895 = vrot.slane %v2837, 6
  %v2896 = vrot.slane %v2838, 6
  %v2897 = vsel %vm2871, %v2895, %v2896
  %v2902 = vrot.slane %v2841, 2
  %v2903 = vrot.slane %v2842, 2
  %v2904 = vsel %vm2853, %v2902, %v2903
  %v2910 = vrot.slane %v2843, 4
  %v2911 = vrot.slane %v2844, 4
  %v2912 = vsel %vm2862, %v2910, %v2911
  %v2918 = vrot.slane %v2845, 6
  %v2919 = vrot.slane %v2846, 6
  %v2920 = vsel %vm2871, %v2918, %v2919
  %v2925 = vrot.slane %v2849, 2
  %v2926 = vrot.slane %v2850, 2
  %v2927 = vsel %vm2853, %v2925, %v2926
  %v2931 = vsel %vm2853, %v2824, %v2854
  %v2932 = vsel %vm2862, %v2855, %v2863
  %v2933 = vsel %vm2871, %v2864, %v2872
  %v2934 = vsel %vm2853, %v2832, %v2879
  %v2935 = vsel %vm2862, %v2880, %v2887
  %v2936 = vsel %vm2871, %v2888, %v2895
  %v2937 = vsel %vm2853, %v2840, %v2902
  %v2938 = vsel %vm2862, %v2903, %v2910
  %v2939 = vsel %vm2871, %v2911, %v2918
  %v2940 = vsel %vm2853, %v2848, %v2925
  %2941 = vxpose.xlu0.b32.start [1/16] %v2823, 128
  %2942 = vxpose.xlu0.b32.cont [2/16] %v2931, 128
  %2943 = vxpose.xlu0.b32.cont [3/16] %v2856, 128
  %2944 = vxpose.xlu0.b32.cont [4/16] %v2932, 128
  %2945 = vxpose.xlu0.b32.cont [5/16] %v2865, 128
  %2946 = vxpose.xlu0.b32.cont [6/16] %v2933, 128
  %2947 = vxpose.xlu0.b32.cont [7/16] %v2874, 128
  %2948 = vxpose.xlu0.b32.cont [8/16] %v2831, 128
  %2949 = vxpose.xlu0.b32.cont [9/16] %v2934, 128
  %2950 = vxpose.xlu0.b32.cont [10/16] %v2881, 128
  %2951 = vxpose.xlu0.b32.cont [11/16] %v2935, 128
  %2952 = vxpose.xlu0.b32.cont [12/16] %v2889, 128
  %2953 = vxpose.xlu0.b32.cont [13/16] %v2936, 128
  %2954 = vxpose.xlu0.b32.cont [14/16] %v2897, 128
  %2955 = vxpose.xlu0.b32.cont [15/16] %v2839, 128
  %2956 = vxpose.xlu0.b32.end [16/16] %v2937, 128
  %v2957 = vpop.trf.xlu0
  %v2958 = vpop.trf.xlu0
  %v2959 = vpop.trf.xlu0
  %v2960 = vpop.trf.xlu0
  %v2961 = vpop.trf.xlu0
  %v2962 = vpop.trf.xlu0
  %v2963 = vpop.trf.xlu0
  %v2964 = vpop.trf.xlu0
  %v2965 = vpop.trf.xlu0
  %v2966 = vpop.trf.xlu0
  %v2967 = vpop.trf.xlu0
  %v2968 = vpop.trf.xlu0
  %v2969 = vpop.trf.xlu0
  %v2970 = vpop.trf.xlu0
  %v2971 = vpop.trf.xlu0
  %v2972 = vpop.trf.xlu0
  %2973 = vxpose.xlu0.b32.start [1/16] %v2904, 128
  %2974 = vxpose.xlu0.b32.cont [2/16] %v2938, 128
  %2975 = vxpose.xlu0.b32.cont [3/16] %v2912, 128
  %2976 = vxpose.xlu0.b32.cont [4/16] %v2939, 128
  %2977 = vxpose.xlu0.b32.cont [5/16] %v2920, 128
  %2978 = vxpose.xlu0.b32.cont [6/16] %v2847, 128
  %2979 = vxpose.xlu0.b32.cont [7/16] %v2940, 128
  %2980 = vxpose.xlu0.b32.cont [8/16] %v2927, 128
  %2981 = vxpose.xlu0.b32.cont [9/16] %v2926, 128
  %2982 = vxpose.xlu0.b32.cont [10/16] 0.0, 128
  %2983 = vxpose.xlu0.b32.cont [11/16] 0.0, 128
  %2984 = vxpose.xlu0.b32.cont [12/16] 0.0, 128
  %2985 = vxpose.xlu0.b32.cont [13/16] 0.0, 128
  %2986 = vxpose.xlu0.b32.cont [14/16] 0.0, 128
  %2987 = vxpose.xlu0.b32.cont [15/16] 0.0, 128
  %2988 = vxpose.xlu0.b32.end [16/16] 0.0, 128
  %v2989 = vpop.trf.xlu0
  %v2990 = vpop.trf.xlu0
  %v2991 = vpop.trf.xlu0
  %v2992 = vpop.trf.xlu0
  %v2993 = vpop.trf.xlu0
  %v2994 = vpop.trf.xlu0
  %v2995 = vpop.trf.xlu0
  %v2996 = vpop.trf.xlu0
  %v2997 = vpop.trf.xlu0
  %v2998 = vpop.trf.xlu0
  %v2999 = vpop.trf.xlu0
  %v3000 = vpop.trf.xlu0
  %v3001 = vpop.trf.xlu0
  %v3002 = vpop.trf.xlu0
  %v3003 = vpop.trf.xlu0
  %v3004 = vpop.trf.xlu0
  %3005 = vst [vmem:[%s4] sm:$0xff] %v2957
  %3006 = vst.msk [vmem:[%s4 + $0x8] sm:$0xff] %vm940, %v2989
  %3007 = vst [vmem:[%s4 + $0x10] sm:$0xff] %v2958
  %3008 = vst.msk [vmem:[%s4 + $0x18] sm:$0xff] %vm940, %v2990
  %3009 = vst [vmem:[%s4 + $0x20] sm:$0xff] %v2959
  %3010 = vst.msk [vmem:[%s4 + $0x28] sm:$0xff] %vm940, %v2991
  %3011 = vst [vmem:[%s4 + $0x30] sm:$0xff] %v2960
  %3012 = vst.msk [vmem:[%s4 + $0x38] sm:$0xff] %vm940, %v2992
  // Predicated region
  $region18: #{fused_forward.1} parent=0 // pred_check
    _
  $region19: #{fused_forward.1} parent=0 // pred_check_branch
    %3014 = sbr.rel (0) target = $region21
  $region20: #{fused_forward.1} parent=0 // pred_region
    _
  $region21: #{fused_forward.1} parent=0 // pred_fallthru
    _
  // Predicated region
  $region22: #{fused_forward.1} parent=0 // pred_check
    _
  $region23: #{fused_forward.1} parent=0 // pred_check_branch
    %3016 = sbr.rel (0) target = $region25
  $region24: #{fused_forward.1} parent=0 // pred_region
    _
  $region25: #{fused_forward.1} parent=0 // pred_fallthru
    _

</llo_original>
